<compile_context>
chip_gen: v5e
topology: v5e:2x2
jax: 0.10.0
libtpu: 0.0.40
codegen_flags: <defaults>
</compile_context>

<pallas_src>
import functools

import jax
import jax.numpy as jnp
from jax import lax
from jax.experimental import pallas as pl
from jax.experimental.pallas import tpu as pltpu

KERNEL_SIZE = 7
PAD = 3
LN_EPS = 1e-5                     # PyTorch nn.LayerNorm default
_SQRT_HALF = 0.7071067811865476   # exact-erf GELU constant


def _convnext_kernel(x_ref, xl_ref, xr_ref, dww_ref, dwb_ref, gamma_ref,
                     beta_ref, w1_ref, b1_ref, w2_ref, b2_ref, scale_ref,
                     o_ref, xpad_ref, *, t_tile):
    t = pl.program_id(1)
    nt = pl.num_programs(1)

    # ---- assemble [left halo | current tile | right halo] in VMEM scratch ----
    # scratch row j  <->  input row t*t_tile + (j - 8)
    xpad_ref[0:8, :] = xl_ref[0]
    xpad_ref[8:8 + t_tile, :] = x_ref[0]
    xpad_ref[8 + t_tile:16 + t_tile, :] = xr_ref[0]

    @pl.when(t == 0)                      # zero-pad left boundary
    def _():
        xpad_ref[0:8, :] = jnp.zeros((8, xpad_ref.shape[1]), xpad_ref.dtype)

    @pl.when(t == nt - 1)                 # zero-pad right boundary
    def _():
        xpad_ref[8 + t_tile:16 + t_tile, :] = jnp.zeros(
            (8, xpad_ref.shape[1]), xpad_ref.dtype)

    # ---- depthwise conv1d (kernel 7, padding 3, groups=C) ----
    # output row i needs scratch rows i+5 .. i+11  (no concat, no value-slice copies)
    dww = dww_ref[...]                                   # (7, C) f32
    y = xpad_ref[5:5 + t_tile, :] * dww[0:1, :]          # init with tap 0
    for k in range(1, KERNEL_SIZE):                      # static unroll, 7 taps
        y = y + xpad_ref[5 + k:5 + k + t_tile, :] * dww[k:k + 1, :]
    y = y + dwb_ref[...]

    # ---- LayerNorm over channels (lane axis) ----
    mean = jnp.mean(y, axis=-1, keepdims=True)
    yc = y - mean
    var = jnp.mean(yc * yc, axis=-1, keepdims=True)
    yn = yc * lax.rsqrt(var + LN_EPS)
    yn = yn * gamma_ref[...] + beta_ref[...]

    # ---- pointwise MLP: Linear(C->H) -> GELU(exact erf) -> Linear(H->C) ----
    # bf16 MXU operands, f32 accumulation.
    h = jnp.dot(yn.astype(w1_ref.dtype), w1_ref[...],
                preferred_element_type=jnp.float32) + b1_ref[...]
    h = 0.5 * h * (1.0 + lax.erf(h * _SQRT_HALF))
    out = jnp.dot(h.astype(w2_ref.dtype), w2_ref[...],
                  preferred_element_type=jnp.float32) + b2_ref[...]

    # ---- per-channel layer scale + residual (re-read x_ref: short live range) ----
    out = out * scale_ref[...] + x_ref[0]
    o_ref[0] = out.astype(o_ref.dtype)


def _pick_t_tile(T, target=256):
    if T <= target:
        return T
    for cand in range(target, 7, -8):     # largest multiple-of-8 divisor <= target
        if T % cand == 0:
            return cand
    return T


def convnext_layer_channels_last(x_btc, dw_w, dw_b, gamma, beta, w1, b1, w2,
                                 b2, scale, *, t_tile=None,
                                 mxu_dtype=jnp.bfloat16):
    """Channels-last entry point: x_btc (B, T, C) -> (B, T, C)."""
    B, T, C = x_btc.shape
    H = w1.shape[1]
    assert T % 8 == 0, "time axis must be a multiple of 8 (sublane tile)"
    if t_tile is None:
        t_tile = _pick_t_tile(T)
    assert T % t_tile == 0 and t_tile % 8 == 0
    nt = T // t_tile
    tpb = t_tile // 8            # halo block-index stride (units of 8 rows)
    n8 = T // 8                  # number of 8-row blocks along T

    def row(v):
        return v.reshape(1, -1)

    # f32 element-wise params; bf16 weights for the MXU (halved DMA/VMEM).
    w1m = w1.astype(mxu_dtype)
    w2m = w2.astype(mxu_dtype)

    kernel = functools.partial(_convnext_kernel, t_tile=t_tile)

    cost = pl.CostEstimate(
        flops=int(4 * B * T * C * H + 16 * B * T * C),
        transcendentals=int(B * T * (H + 1)),
        bytes_accessed=int(2 * 4 * B * T * C + 2 * 2 * C * H + 4 * 8 * C),
    )

    wconst = lambda b, t: (0, 0)

    out = pl.pallas_call(
        kernel,
        out_shape=jax.ShapeDtypeStruct((B, T, C), x_btc.dtype),
        grid_spec=pltpu.PrefetchScalarGridSpec(
            num_scalar_prefetch=0,
            grid=(B, nt),
            in_specs=[
                pl.BlockSpec((1, t_tile, C), lambda b, t: (b, t, 0)),     # x tile
                pl.BlockSpec((1, 8, C),                                   # left halo
                             lambda b, t: (b, jnp.maximum(t * tpb - 1, 0), 0)),
                pl.BlockSpec((1, 8, C),                                   # right halo
                             lambda b, t: (b, jnp.minimum((t + 1) * tpb, n8 - 1), 0)),
                pl.BlockSpec((KERNEL_SIZE, C), wconst),                   # dw weight (7,C)
                pl.BlockSpec((1, C), wconst),                             # dw bias
                pl.BlockSpec((1, C), wconst),                             # ln gamma
                pl.BlockSpec((1, C), wconst),                             # ln beta
                pl.BlockSpec((C, H), wconst),                             # w1 (C,H) bf16
                pl.BlockSpec((1, H), wconst),                             # b1
                pl.BlockSpec((H, C), wconst),                             # w2 (H,C) bf16
                pl.BlockSpec((1, C), wconst),                             # b2
                pl.BlockSpec((1, C), wconst),                             # layer scale
            ],
            out_specs=pl.BlockSpec((1, t_tile, C), lambda b, t: (b, t, 0)),
            scratch_shapes=[pltpu.VMEM((t_tile + 16, C), jnp.float32)],
        ),
        compiler_params=pltpu.CompilerParams(
            dimension_semantics=("parallel", "parallel")),
        cost_estimate=cost,
    )(x_btc, x_btc, x_btc, dw_w, row(dw_b), row(gamma), row(beta),
      w1m, row(b1), w2m, row(b2), row(scale))
    return out


def convnext_layer(x_bct, dw_w, dw_b, gamma, beta, w1, b1, w2, b2, scale,
                   **kwargs):
    """PyTorch-layout entry point: x_bct (B, C, T) float32 -> (B, C, T)."""
    x = jnp.transpose(x_bct, (0, 2, 1))          # transpose only at the boundary
    out = convnext_layer_channels_last(x, dw_w, dw_b, gamma, beta, w1, b1,
                                       w2, b2, scale, **kwargs)
    return jnp.transpose(out, (0, 2, 1))


def ref_forward(x_bct, dw_w, dw_b, gamma, beta, w1, b1, w2, b2, scale,
                mxu_dtype=None):
    """Pure-JAX reference matching the PyTorch forward semantics."""
    B, C, T = x_bct.shape
    x = jnp.transpose(x_bct, (0, 2, 1))                  # (B, T, C)
    res = x
    xp = jnp.pad(x, ((0, 0), (PAD, PAD), (0, 0)))
    y = sum(xp[:, k:k + T, :] * dw_w[k] for k in range(KERNEL_SIZE)) + dw_b
    mean = y.mean(-1, keepdims=True)
    var = ((y - mean) ** 2).mean(-1, keepdims=True)
    yn = (y - mean) / jnp.sqrt(var + LN_EPS) * gamma + beta
    if mxu_dtype is not None:
        h = jnp.dot(yn.astype(mxu_dtype), w1.astype(mxu_dtype),
                    preferred_element_type=jnp.float32) + b1
    else:
        h = yn @ w1 + b1
    h = 0.5 * h * (1.0 + lax.erf(h * jnp.float32(_SQRT_HALF)))
    if mxu_dtype is not None:
        out = jnp.dot(h.astype(mxu_dtype), w2.astype(mxu_dtype),
                      preferred_element_type=jnp.float32) + b2
    else:
        out = h @ w2 + b2
    out = out * scale + res
    return jnp.transpose(out, (0, 2, 1))


if __name__ == "__main__":
    B, C, H, T = 2, 128, 256, 512
    scale_init = 1.0 / 6.0

    key = jax.random.PRNGKey(0)
    ks = jax.random.split(key, 8)
    # PyTorch dw_conv.weight is (C, 1, 7); stored here directly as (7, C).
    dw_w = jax.random.normal(ks[0], (KERNEL_SIZE, C), jnp.float32) * 0.1
    dw_b = jax.random.normal(ks[1], (C,), jnp.float32) * 0.1
    gamma = 1.0 + 0.1 * jax.random.normal(ks[7], (C,), jnp.float32)
    beta = 0.05 * jax.random.normal(ks[7], (C,), jnp.float32)
    # PyTorch Linear weights are (out, in); stored here pre-transposed.
    w1 = jax.random.normal(ks[2], (C, H), jnp.float32) * 0.05
    b1 = jax.random.normal(ks[3], (H,), jnp.float32) * 0.05
    w2 = jax.random.normal(ks[4], (H, C), jnp.float32) * 0.05
    b2 = jax.random.normal(ks[5], (C,), jnp.float32) * 0.05
    scale = jnp.full((C,), scale_init, jnp.float32)

    x = jax.random.normal(ks[6], (B, C, T), jnp.float32)

    out = convnext_layer(x, dw_w, dw_b, gamma, beta, w1, b1, w2, b2, scale)
    out = jax.block_until_ready(out)
    assert out.shape == (B, C, T)

    # Tight check: same op sequence with matching bf16 MXU operands.
    ref_b = ref_forward(x, dw_w, dw_b, gamma, beta, w1, b1, w2, b2, scale,
                        mxu_dtype=jnp.bfloat16)
    assert jnp.allclose(out, ref_b, atol=2e-3, rtol=2e-3), \
        "mismatch vs bf16-matmul reference"

    # Loose check: full-f32 PyTorch-semantics reference (bf16 MXU rounding).
    ref_f = ref_forward(x, dw_w, dw_b, gamma, beta, w1, b1, w2, b2, scale)
    assert jnp.allclose(out, ref_f, atol=2e-2, rtol=2e-2), \
        "mismatch vs f32 reference"

    print("KERNEL_OK")
</pallas_src>

<mosaic_0001>
module attributes {stable_mosaic.version = 11 : i64} {
  func.func @_convnext_kernel(%arg0: i32, %arg1: i32, %arg2: memref<1x256x128xf32, #tpu.memory_space<vmem>>, %arg3: memref<1x8x128xf32, #tpu.memory_space<vmem>>, %arg4: memref<1x8x128xf32, #tpu.memory_space<vmem>>, %arg5: memref<7x128xf32, #tpu.memory_space<vmem>>, %arg6: memref<1x128xf32, #tpu.memory_space<vmem>>, %arg7: memref<1x128xf32, #tpu.memory_space<vmem>>, %arg8: memref<1x128xf32, #tpu.memory_space<vmem>>, %arg9: memref<128x256xbf16, #tpu.memory_space<vmem>>, %arg10: memref<1x256xf32, #tpu.memory_space<vmem>>, %arg11: memref<256x128xbf16, #tpu.memory_space<vmem>>, %arg12: memref<1x128xf32, #tpu.memory_space<vmem>>, %arg13: memref<1x128xf32, #tpu.memory_space<vmem>>, %arg14: memref<1x256x128xf32, #tpu.memory_space<vmem>>, %arg15: memref<272x128xf32, #tpu.memory_space<vmem>>) attributes {dimension_semantics = [#tpu.dimension_semantics<parallel>, #tpu.dimension_semantics<parallel>], iteration_bounds = array<i64: 2, 2>, scalar_prefetch = 0 : i64, scratch_operands = 1 : i64, tpu.core_type = #tpu.core_type<tc>, window_params = [{transform_indices = @transform_0, window_bounds = array<i64: 1, 256, 128>}, {transform_indices = @transform_1, window_bounds = array<i64: 1, 8, 128>}, {transform_indices = @transform_2, window_bounds = array<i64: 1, 8, 128>}, {pipeline_mode = #tpu.pipeline_mode<synchronous>, transform_indices = @transform_3, window_bounds = array<i64: 7, 128>}, {pipeline_mode = #tpu.pipeline_mode<synchronous>, transform_indices = @transform_4, window_bounds = array<i64: 1, 128>}, {pipeline_mode = #tpu.pipeline_mode<synchronous>, transform_indices = @transform_5, window_bounds = array<i64: 1, 128>}, {pipeline_mode = #tpu.pipeline_mode<synchronous>, transform_indices = @transform_6, window_bounds = array<i64: 1, 128>}, {pipeline_mode = #tpu.pipeline_mode<synchronous>, transform_indices = @transform_7, window_bounds = array<i64: 128, 256>}, {pipeline_mode = #tpu.pipeline_mode<synchronous>, transform_indices = @transform_8, window_bounds = array<i64: 1, 256>}, {pipeline_mode = #tpu.pipeline_mode<synchronous>, transform_indices = @transform_9, window_bounds = array<i64: 256, 128>}, {pipeline_mode = #tpu.pipeline_mode<synchronous>, transform_indices = @transform_10, window_bounds = array<i64: 1, 128>}, {pipeline_mode = #tpu.pipeline_mode<synchronous>, transform_indices = @transform_11, window_bounds = array<i64: 1, 128>}, {transform_indices = @transform_12, window_bounds = array<i64: 1, 256, 128>}]} {
    %c0 = arith.constant 0 : index
    %c0_0 = arith.constant 0 : index
    %c0_1 = arith.constant 0 : index
    %0 = vector.load %arg3[%c0, %c0_0, %c0_1] : memref<1x8x128xf32, #tpu.memory_space<vmem>>, vector<1x8x128xf32>
    %1 = vector.shape_cast %0 : vector<1x8x128xf32> to vector<8x128xf32>
    %c0_2 = arith.constant 0 : index
    %c0_3 = arith.constant 0 : index
    %2 = vector.load %arg15[%c0_2, %c0_3] : memref<272x128xf32, #tpu.memory_space<vmem>>, vector<8x128xf32>
    tpu.vector_store %arg15[%c0_2, %c0_3], %1 {strides = array<i32>} : memref<272x128xf32, #tpu.memory_space<vmem>>, vector<8x128xf32>,
    %c0_4 = arith.constant 0 : index
    %c0_5 = arith.constant 0 : index
    %c0_6 = arith.constant 0 : index
    %3 = vector.load %arg2[%c0_4, %c0_5, %c0_6] : memref<1x256x128xf32, #tpu.memory_space<vmem>>, vector<1x256x128xf32>
    %4 = vector.shape_cast %3 : vector<1x256x128xf32> to vector<256x128xf32>
    %c8 = arith.constant 8 : index
    %c0_7 = arith.constant 0 : index
    %5 = vector.load %arg15[%c8, %c0_7] : memref<272x128xf32, #tpu.memory_space<vmem>>, vector<256x128xf32>
    tpu.vector_store %arg15[%c8, %c0_7], %4 {strides = array<i32>} : memref<272x128xf32, #tpu.memory_space<vmem>>, vector<256x128xf32>,
    %c0_8 = arith.constant 0 : index
    %c0_9 = arith.constant 0 : index
    %c0_10 = arith.constant 0 : index
    %6 = vector.load %arg4[%c0_8, %c0_9, %c0_10] : memref<1x8x128xf32, #tpu.memory_space<vmem>>, vector<1x8x128xf32>
    %7 = vector.shape_cast %6 : vector<1x8x128xf32> to vector<8x128xf32>
    %c264 = arith.constant 264 : index
    %c0_11 = arith.constant 0 : index
    %8 = vector.load %arg15[%c264, %c0_11] : memref<272x128xf32, #tpu.memory_space<vmem>>, vector<8x128xf32>
    tpu.vector_store %arg15[%c264, %c0_11], %7 {strides = array<i32>} : memref<272x128xf32, #tpu.memory_space<vmem>>, vector<8x128xf32>,
    %c0_i32 = arith.constant 0 : i32
    %9 = arith.cmpi eq, %arg1, %c0_i32 : i32
    %10 = arith.extui %9 : i1 to i32
    %c0_i32_12 = arith.constant 0 : i32
    %11 = arith.cmpi ne, %10, %c0_i32_12 : i32
    scf.if %11 {
      %cst_55 = arith.constant 0.000000e+00 : f32
      %104 = vector.broadcast %cst_55 : f32 to vector<8x128xf32>
      %c0_56 = arith.constant 0 : index
      %c0_57 = arith.constant 0 : index
      %105 = vector.load %arg15[%c0_56, %c0_57] : memref<272x128xf32, #tpu.memory_space<vmem>>, vector<8x128xf32>
      tpu.vector_store %arg15[%c0_56, %c0_57], %104 {strides = array<i32>} : memref<272x128xf32, #tpu.memory_space<vmem>>, vector<8x128xf32>,
    } else {
    }
    %c1_i32 = arith.constant 1 : i32
    %12 = arith.cmpi eq, %arg1, %c1_i32 : i32
    %13 = arith.extui %12 : i1 to i32
    %c0_i32_13 = arith.constant 0 : i32
    %14 = arith.cmpi ne, %13, %c0_i32_13 : i32
    scf.if %14 {
      %cst_55 = arith.constant 0.000000e+00 : f32
      %104 = vector.broadcast %cst_55 : f32 to vector<8x128xf32>
      %c264_56 = arith.constant 264 : index
      %c0_57 = arith.constant 0 : index
      %105 = vector.load %arg15[%c264_56, %c0_57] : memref<272x128xf32, #tpu.memory_space<vmem>>, vector<8x128xf32>
      tpu.vector_store %arg15[%c264_56, %c0_57], %104 {strides = array<i32>} : memref<272x128xf32, #tpu.memory_space<vmem>>, vector<8x128xf32>,
    } else {
    }
    %c0_14 = arith.constant 0 : index
    %c0_15 = arith.constant 0 : index
    %15 = vector.load %arg5[%c0_14, %c0_15] : memref<7x128xf32, #tpu.memory_space<vmem>>, vector<7x128xf32>
    %c5 = arith.constant 5 : index
    %c0_16 = arith.constant 0 : index
    %16 = vector.load %arg15[%c5, %c0_16] : memref<272x128xf32, #tpu.memory_space<vmem>>, vector<256x128xf32>
    %17 = vector.extract_strided_slice %15 {offsets = [0, 0], sizes = [1, 128], strides = [1, 1]} : vector<7x128xf32> to vector<1x128xf32>
    %18 = vector.broadcast %17 : vector<1x128xf32> to vector<256x128xf32>
    %19 = arith.mulf %16, %18 : vector<256x128xf32>
    %c6 = arith.constant 6 : index
    %c0_17 = arith.constant 0 : index
    %20 = vector.load %arg15[%c6, %c0_17] : memref<272x128xf32, #tpu.memory_space<vmem>>, vector<256x128xf32>
    %21 = vector.extract_strided_slice %15 {offsets = [1, 0], sizes = [1, 128], strides = [1, 1]} : vector<7x128xf32> to vector<1x128xf32>
    %22 = vector.broadcast %21 : vector<1x128xf32> to vector<256x128xf32>
    %23 = arith.mulf %20, %22 : vector<256x128xf32>
    %24 = arith.addf %19, %23 : vector<256x128xf32>
    %c7 = arith.constant 7 : index
    %c0_18 = arith.constant 0 : index
    %25 = vector.load %arg15[%c7, %c0_18] : memref<272x128xf32, #tpu.memory_space<vmem>>, vector<256x128xf32>
    %26 = vector.extract_strided_slice %15 {offsets = [2, 0], sizes = [1, 128], strides = [1, 1]} : vector<7x128xf32> to vector<1x128xf32>
    %27 = vector.broadcast %26 : vector<1x128xf32> to vector<256x128xf32>
    %28 = arith.mulf %25, %27 : vector<256x128xf32>
    %29 = arith.addf %24, %28 : vector<256x128xf32>
    %c8_19 = arith.constant 8 : index
    %c0_20 = arith.constant 0 : index
    %30 = vector.load %arg15[%c8_19, %c0_20] : memref<272x128xf32, #tpu.memory_space<vmem>>, vector<256x128xf32>
    %31 = vector.extract_strided_slice %15 {offsets = [3, 0], sizes = [1, 128], strides = [1, 1]} : vector<7x128xf32> to vector<1x128xf32>
    %32 = vector.broadcast %31 : vector<1x128xf32> to vector<256x128xf32>
    %33 = arith.mulf %30, %32 : vector<256x128xf32>
    %34 = arith.addf %29, %33 : vector<256x128xf32>
    %c9 = arith.constant 9 : index
    %c0_21 = arith.constant 0 : index
    %35 = vector.load %arg15[%c9, %c0_21] : memref<272x128xf32, #tpu.memory_space<vmem>>, vector<256x128xf32>
    %36 = vector.extract_strided_slice %15 {offsets = [4, 0], sizes = [1, 128], strides = [1, 1]} : vector<7x128xf32> to vector<1x128xf32>
    %37 = vector.broadcast %36 : vector<1x128xf32> to vector<256x128xf32>
    %38 = arith.mulf %35, %37 : vector<256x128xf32>
    %39 = arith.addf %34, %38 : vector<256x128xf32>
    %c10 = arith.constant 10 : index
    %c0_22 = arith.constant 0 : index
    %40 = vector.load %arg15[%c10, %c0_22] : memref<272x128xf32, #tpu.memory_space<vmem>>, vector<256x128xf32>
    %41 = vector.extract_strided_slice %15 {offsets = [5, 0], sizes = [1, 128], strides = [1, 1]} : vector<7x128xf32> to vector<1x128xf32>
    %42 = vector.broadcast %41 : vector<1x128xf32> to vector<256x128xf32>
    %43 = arith.mulf %40, %42 : vector<256x128xf32>
    %44 = arith.addf %39, %43 : vector<256x128xf32>
    %c11 = arith.constant 11 : index
    %c0_23 = arith.constant 0 : index
    %45 = vector.load %arg15[%c11, %c0_23] : memref<272x128xf32, #tpu.memory_space<vmem>>, vector<256x128xf32>
    %46 = vector.extract_strided_slice %15 {offsets = [6, 0], sizes = [1, 128], strides = [1, 1]} : vector<7x128xf32> to vector<1x128xf32>
    %47 = vector.broadcast %46 : vector<1x128xf32> to vector<256x128xf32>
    %48 = arith.mulf %45, %47 : vector<256x128xf32>
    %49 = arith.addf %44, %48 : vector<256x128xf32>
    %c0_24 = arith.constant 0 : index
    %c0_25 = arith.constant 0 : index
    %50 = vector.load %arg6[%c0_24, %c0_25] : memref<1x128xf32, #tpu.memory_space<vmem>>, vector<1x128xf32>
    %51 = vector.broadcast %50 : vector<1x128xf32> to vector<256x128xf32>
    %52 = arith.addf %49, %51 : vector<256x128xf32>
    %cst = arith.constant dense<0.000000e+00> : vector<256xf32>
    %53 = vector.multi_reduction <add>, %52, %cst [1] : vector<256x128xf32> to vector<256xf32>
    %54 = vector.shape_cast %53 : vector<256xf32> to vector<256x1xf32>
    %cst_26 = arith.constant 1.280000e+02 : f32
    %55 = vector.broadcast %cst_26 : f32 to vector<256x1xf32>
    %56 = arith.divf %54, %55 : vector<256x1xf32>
    %57 = vector.broadcast %56 : vector<256x1xf32> to vector<256x128xf32>
    %58 = arith.subf %52, %57 : vector<256x128xf32>
    %59 = arith.mulf %58, %58 : vector<256x128xf32>
    %cst_27 = arith.constant dense<0.000000e+00> : vector<256xf32>
    %60 = vector.multi_reduction <add>, %59, %cst_27 [1] : vector<256x128xf32> to vector<256xf32>
    %61 = vector.shape_cast %60 : vector<256xf32> to vector<256x1xf32>
    %cst_28 = arith.constant 1.280000e+02 : f32
    %62 = vector.broadcast %cst_28 : f32 to vector<256x1xf32>
    %63 = arith.divf %61, %62 : vector<256x1xf32>
    %cst_29 = arith.constant 9.99999974E-6 : f32
    %64 = vector.broadcast %cst_29 : f32 to vector<256x1xf32>
    %65 = arith.addf %63, %64 : vector<256x1xf32>
    %66 = math.rsqrt %65 : vector<256x1xf32>
    %67 = vector.broadcast %66 : vector<256x1xf32> to vector<256x128xf32>
    %68 = arith.mulf %58, %67 : vector<256x128xf32>
    %c0_30 = arith.constant 0 : index
    %c0_31 = arith.constant 0 : index
    %69 = vector.load %arg7[%c0_30, %c0_31] : memref<1x128xf32, #tpu.memory_space<vmem>>, vector<1x128xf32>
    %70 = vector.broadcast %69 : vector<1x128xf32> to vector<256x128xf32>
    %71 = arith.mulf %68, %70 : vector<256x128xf32>
    %c0_32 = arith.constant 0 : index
    %c0_33 = arith.constant 0 : index
    %72 = vector.load %arg8[%c0_32, %c0_33] : memref<1x128xf32, #tpu.memory_space<vmem>>, vector<1x128xf32>
    %73 = vector.broadcast %72 : vector<1x128xf32> to vector<256x128xf32>
    %74 = arith.addf %71, %73 : vector<256x128xf32>
    %75 = arith.truncf %74 : vector<256x128xf32> to vector<256x128xbf16>
    %c0_34 = arith.constant 0 : index
    %c0_35 = arith.constant 0 : index
    %76 = vector.load %arg9[%c0_34, %c0_35] : memref<128x256xbf16, #tpu.memory_space<vmem>>, vector<128x256xbf16>
    %cst_36 = arith.constant dense<0.000000e+00> : vector<256x256xf32>
    %77 = tpu.matmul %75, %76, %cst_36 {dimension_numbers = #tpu.dot_dimension_numbers<[1], [0], [0], [1], [0, 0, 1, 1], [], []>} : vector<256x128xbf16>, vector<128x256xbf16>, vector<256x256xf32> -> vector<256x256xf32>
    %c0_37 = arith.constant 0 : index
    %c0_38 = arith.constant 0 : index
    %78 = vector.load %arg10[%c0_37, %c0_38] : memref<1x256xf32, #tpu.memory_space<vmem>>, vector<1x256xf32>
    %79 = vector.broadcast %78 : vector<1x256xf32> to vector<256x256xf32>
    %80 = arith.addf %77, %79 : vector<256x256xf32>
    %cst_39 = arith.constant 5.000000e-01 : f32
    %81 = vector.broadcast %cst_39 : f32 to vector<256x256xf32>
    %82 = arith.mulf %81, %80 : vector<256x256xf32>
    %cst_40 = arith.constant 0.707106769 : f32
    %83 = vector.broadcast %cst_40 : f32 to vector<256x256xf32>
    %84 = arith.mulf %80, %83 : vector<256x256xf32>
    %85 = math.erf %84 : vector<256x256xf32>
    %cst_41 = arith.constant 1.000000e+00 : f32
    %86 = vector.broadcast %cst_41 : f32 to vector<256x256xf32>
    %87 = arith.addf %86, %85 : vector<256x256xf32>
    %88 = arith.mulf %82, %87 : vector<256x256xf32>
    %89 = arith.truncf %88 : vector<256x256xf32> to vector<256x256xbf16>
    %c0_42 = arith.constant 0 : index
    %c0_43 = arith.constant 0 : index
    %90 = vector.load %arg11[%c0_42, %c0_43] : memref<256x128xbf16, #tpu.memory_space<vmem>>, vector<256x128xbf16>
    %cst_44 = arith.constant dense<0.000000e+00> : vector<256x128xf32>
    %91 = tpu.matmul %89, %90, %cst_44 {dimension_numbers = #tpu.dot_dimension_numbers<[1], [0], [0], [1], [0, 0, 1, 1], [], []>} : vector<256x256xbf16>, vector<256x128xbf16>, vector<256x128xf32> -> vector<256x128xf32>
    %c0_45 = arith.constant 0 : index
    %c0_46 = arith.constant 0 : index
    %92 = vector.load %arg12[%c0_45, %c0_46] : memref<1x128xf32, #tpu.memory_space<vmem>>, vector<1x128xf32>
    %93 = vector.broadcast %92 : vector<1x128xf32> to vector<256x128xf32>
    %94 = arith.addf %91, %93 : vector<256x128xf32>
    %c0_47 = arith.constant 0 : index
    %c0_48 = arith.constant 0 : index
    %95 = vector.load %arg13[%c0_47, %c0_48] : memref<1x128xf32, #tpu.memory_space<vmem>>, vector<1x128xf32>
    %96 = vector.broadcast %95 : vector<1x128xf32> to vector<256x128xf32>
    %97 = arith.mulf %94, %96 : vector<256x128xf32>
    %c0_49 = arith.constant 0 : index
    %c0_50 = arith.constant 0 : index
    %c0_51 = arith.constant 0 : index
    %98 = vector.load %arg2[%c0_49, %c0_50, %c0_51] : memref<1x256x128xf32, #tpu.memory_space<vmem>>, vector<1x256x128xf32>
    %99 = vector.shape_cast %98 : vector<1x256x128xf32> to vector<256x128xf32>
    %100 = arith.addf %97, %99 : vector<256x128xf32>
    %c0_52 = arith.constant 0 : index
    %c0_53 = arith.constant 0 : index
    %c0_54 = arith.constant 0 : index
    %101 = vector.load %arg14[%c0_52, %c0_53, %c0_54] : memref<1x256x128xf32, #tpu.memory_space<vmem>>, vector<1x256x128xf32>
    %102 = vector.shape_cast %101 : vector<1x256x128xf32> to vector<256x128xf32>
    %103 = vector.shape_cast %100 : vector<256x128xf32> to vector<1x256x128xf32>
    tpu.vector_store %arg14[%c0_52, %c0_53, %c0_54], %103 {strides = array<i32>} : memref<1x256x128xf32, #tpu.memory_space<vmem>>, vector<1x256x128xf32>,
    return
  }
  func.func @transform_0(%arg0: i32, %arg1: i32) -> (i32, i32, i32) {
    %c0_i32 = arith.constant 0 : i32
    %c0_i32_0 = arith.constant 0 : i32
    return %arg0, %arg1, %c0_i32 : i32, i32, i32
  }
  func.func @transform_1(%arg0: i32, %arg1: i32) -> (i32, i32, i32) {
    %c32_i32 = arith.constant 32 : i32
    %0 = arith.muli %arg1, %c32_i32 : i32
    %c1_i32 = arith.constant 1 : i32
    %1 = arith.subi %0, %c1_i32 : i32
    %c0_i32 = arith.constant 0 : i32
    %2 = arith.maxsi %1, %c0_i32 : i32
    %c0_i32_0 = arith.constant 0 : i32
    %c0_i32_1 = arith.constant 0 : i32
    return %arg0, %2, %c0_i32_0 : i32, i32, i32
  }
  func.func @transform_2(%arg0: i32, %arg1: i32) -> (i32, i32, i32) {
    %c1_i32 = arith.constant 1 : i32
    %0 = arith.addi %arg1, %c1_i32 : i32
    %c32_i32 = arith.constant 32 : i32
    %1 = arith.muli %0, %c32_i32 : i32
    %c63_i32 = arith.constant 63 : i32
    %2 = arith.minsi %1, %c63_i32 : i32
    %c0_i32 = arith.constant 0 : i32
    %c0_i32_0 = arith.constant 0 : i32
    return %arg0, %2, %c0_i32 : i32, i32, i32
  }
  func.func @transform_3(%arg0: i32, %arg1: i32) -> (i32, i32) {
    %c0_i32 = arith.constant 0 : i32
    %c0_i32_0 = arith.constant 0 : i32
    %c0_i32_1 = arith.constant 0 : i32
    return %c0_i32, %c0_i32_0 : i32, i32
  }
  func.func @transform_4(%arg0: i32, %arg1: i32) -> (i32, i32) {
    %c0_i32 = arith.constant 0 : i32
    %c0_i32_0 = arith.constant 0 : i32
    %c0_i32_1 = arith.constant 0 : i32
    return %c0_i32, %c0_i32_0 : i32, i32
  }
  func.func @transform_5(%arg0: i32, %arg1: i32) -> (i32, i32) {
    %c0_i32 = arith.constant 0 : i32
    %c0_i32_0 = arith.constant 0 : i32
    %c0_i32_1 = arith.constant 0 : i32
    return %c0_i32, %c0_i32_0 : i32, i32
  }
  func.func @transform_6(%arg0: i32, %arg1: i32) -> (i32, i32) {
    %c0_i32 = arith.constant 0 : i32
    %c0_i32_0 = arith.constant 0 : i32
    %c0_i32_1 = arith.constant 0 : i32
    return %c0_i32, %c0_i32_0 : i32, i32
  }
  func.func @transform_7(%arg0: i32, %arg1: i32) -> (i32, i32) {
    %c0_i32 = arith.constant 0 : i32
    %c0_i32_0 = arith.constant 0 : i32
    %c0_i32_1 = arith.constant 0 : i32
    return %c0_i32, %c0_i32_0 : i32, i32
  }
  func.func @transform_8(%arg0: i32, %arg1: i32) -> (i32, i32) {
    %c0_i32 = arith.constant 0 : i32
    %c0_i32_0 = arith.constant 0 : i32
    %c0_i32_1 = arith.constant 0 : i32
    return %c0_i32, %c0_i32_0 : i32, i32
  }
  func.func @transform_9(%arg0: i32, %arg1: i32) -> (i32, i32) {
    %c0_i32 = arith.constant 0 : i32
    %c0_i32_0 = arith.constant 0 : i32
    %c0_i32_1 = arith.constant 0 : i32
    return %c0_i32, %c0_i32_0 : i32, i32
  }
  func.func @transform_10(%arg0: i32, %arg1: i32) -> (i32, i32) {
    %c0_i32 = arith.constant 0 : i32
    %c0_i32_0 = arith.constant 0 : i32
    %c0_i32_1 = arith.constant 0 : i32
    return %c0_i32, %c0_i32_0 : i32, i32
  }
  func.func @transform_11(%arg0: i32, %arg1: i32) -> (i32, i32) {
    %c0_i32 = arith.constant 0 : i32
    %c0_i32_0 = arith.constant 0 : i32
    %c0_i32_1 = arith.constant 0 : i32
    return %c0_i32, %c0_i32_0 : i32, i32
  }
  func.func @transform_12(%arg0: i32, %arg1: i32) -> (i32, i32, i32) {
    %c0_i32 = arith.constant 0 : i32
    %c0_i32_0 = arith.constant 0 : i32
    return %arg0, %arg1, %c0_i32 : i32, i32, i32
  }
}

</mosaic_0001>

<llo_original>
// kernel: tpu_custom_call.1
$region0: #{tpu_custom_call.1}
  #allocation0 [shape = 'u32[]', space=smem, size = 0x4, offset = 0x4, fixed_abs, tag = 'smem constant byte address 0x4 - core index']
  #allocation1 [shape = 'u32[72,128]{1,0:T(1,128)}', space=vmem, size = 0x9000, scoped, tag = 'internal scratch']
  #allocation2 [shape = 'f32[272,128]{1,0:T(8,128)}', space=vmem, size = 0x22000, scoped, tag = 'scratch operand']
  %s0 = inlined_call_operand.hbm [shape: f32[2,512,128], index: 0, kind: input, shape index: {}]
  %s1 = inlined_call_operand.hbm [shape: f32[2,512,128], index: 1, kind: input, shape index: {}]
  %s2 = inlined_call_operand.hbm [shape: f32[2,512,128], index: 2, kind: input, shape index: {}]
  %s3 = inlined_call_operand.hbm [shape: f32[7,128], index: 3, kind: input, shape index: {}]
  %s4 = inlined_call_operand.vmem [shape: f32[1,128], index: 4, kind: input, shape index: {}]
  %s5 = inlined_call_operand.vmem [shape: f32[1,128], index: 5, kind: input, shape index: {}]
  %s6 = inlined_call_operand.vmem [shape: f32[1,128], index: 6, kind: input, shape index: {}]
  %s7 = inlined_call_operand.hbm [shape: bf16[128,256], index: 7, kind: input, shape index: {}]
  %s8 = inlined_call_operand.vmem [shape: f32[1,256], index: 8, kind: input, shape index: {}]
  %s9 = inlined_call_operand.hbm [shape: bf16[256,128], index: 9, kind: input, shape index: {}]
  %s10 = inlined_call_operand.vmem [shape: f32[1,128], index: 10, kind: input, shape index: {}]
  %s11 = inlined_call_operand.vmem [shape: f32[1,128], index: 11, kind: input, shape index: {}]
  %s12 = inlined_call_operand.hbm [shape: f32[2,512,128], index: 12, kind: output, shape index: {}]
  %s13 = sld [smem:[#allocation0]]
  $region113: #{tpu_custom_call.1} parent=0
    _
  %s15 = ssub.s32 1, %s13
  %s16 = scalar_select 0, %s15, %s13
  $region1: #{tpu_custom_call.1} parent=0
    #allocation3 [shape = 'u8[262144]{0}', space=vmem, size = 0x40000, scoped, tag = 'input window, operand 0']
    #allocation4 [shape = 's32[2]{0}', space=sflag, size = 0x8, scoped, tag = 'scoped memory for tpu_custom_call.1']
    #allocation5 [shape = 's32[2]{0}', space=sflag, size = 0x8, scoped, tag = 'scoped memory for tpu_custom_call.1']
    #allocation6 [shape = 'u8[8192]{0}', space=vmem, size = 0x2000, scoped, tag = 'input window, operand 1']
    #allocation7 [shape = 's32[2]{0}', space=sflag, size = 0x8, scoped, tag = 'scoped memory for tpu_custom_call.1']
    #allocation8 [shape = 'u8[8192]{0}', space=vmem, size = 0x2000, scoped, tag = 'input window, operand 2']
    #allocation9 [shape = 'u8[4096]{0}', space=vmem, size = 0x1000, scoped, tag = 'input window, operand 3, single buffered']
    #allocation10 [shape = 's32[1]{0}', space=sflag, size = 0x4, scoped, tag = 'scoped memory for tpu_custom_call.1']
    #allocation11 [shape = 'u8[65536]{0}', space=vmem, size = 0x10000, scoped, tag = 'input window, operand 7, single buffered']
    #allocation12 [shape = 'u8[65536]{0}', space=vmem, size = 0x10000, scoped, tag = 'input window, operand 9, single buffered']
    #allocation13 [shape = 's32[1]{0}', space=sflag, size = 0x4, scoped, tag = 'scoped memory for tpu_custom_call.1']
    #allocation14 [shape = 'u8[262144]{0}', space=vmem, size = 0x40000, scoped, tag = 'output window, operand 0']
    %17 = vsyncpa [#allocation4], 0
    %s18 = scalar_lea.sflag [#allocation4], 1
    %19 = vsyncpa %s18, 0
    %20 = vsyncpa [#allocation7], 0
    %s21 = scalar_lea.sflag [#allocation7], 1
    %22 = vsyncpa %s21, 0
    %23 = vsyncpa [#allocation10], 0
    %24 = vsyncpa [#allocation13], 0
    %25 = vsyncpa [#allocation5], 0
    %s26 = scalar_lea.sflag [#allocation5], 1
    %27 = vsyncpa %s26, 0
    loop: start=0, step=1, limit=6
    $region2: #{tpu_custom_call.1} parent=1 // loop_pre_header
      _
    $region3: #{tpu_custom_call.1} parent=1 // loop_header
      %s29 = sphi 0, %s33
      %p30 = scmp.ge.s32.totalorder %s29, 6
      %s36 = sphi 0, %s48
      %s37 = sphi 0, %s44
      %s38 = sphi 0, %s36
      %s39 = sphi 0, %s37
      %s40 = sphi 0, %s38
      %s41 = sphi 0, %s39
      %s53 = sphi 0, %s55
      %s56 = sphi 0, %s53
      %s57 = sphi 0, %s56
      %s73 = sphi 0, %s57
      %s89 = sphi 0, %s91
      %s92 = sphi 0, %s89
      %s93 = sphi 0, %s92
      %s109 = sphi 0, %s93
      %s125 = sphi 0, %s127
      %s128 = sphi 0, %s125
      %s129 = sphi 0, %s128
      %s145 = sphi 0, %s129
      %s149 = sphi 0, %s149
      %s151 = sphi 0, %s149
      %s152 = sphi 0, %s151
      %s166 = sphi 0, %s152
      %s170 = sphi 0, %s170
      %s172 = sphi 0, %s170
      %s173 = sphi 0, %s172
      %s187 = sphi 0, %s173
      %s191 = sphi 0, %s191
      %s193 = sphi 0, %s191
      %s194 = sphi 0, %s193
      %s208 = sphi 0, %s194
      %s212 = sphi 0, %s212
      %s214 = sphi 0, %s212
      %s215 = sphi 0, %s214
      %s229 = sphi 0, %s215
      %s233 = sphi 0, %s233
      %s235 = sphi 0, %s233
      %s236 = sphi 0, %s235
      %s250 = sphi 0, %s236
      %s254 = sphi 0, %s254
      %s256 = sphi 0, %s254
      %s257 = sphi 0, %s256
      %s271 = sphi 0, %s257
      %s275 = sphi 0, %s275
      %s277 = sphi 0, %s275
      %s278 = sphi 0, %s277
      %s292 = sphi 0, %s278
      %s296 = sphi 0, %s296
      %s298 = sphi 0, %s296
      %s299 = sphi 0, %s298
      %s313 = sphi 0, %s299
      %s317 = sphi 0, %s317
      %s319 = sphi 0, %s317
      %s320 = sphi 0, %s319
      %s334 = sphi 0, %s320
      %s342 = sphi 0, %s344
      %s345 = sphi 0, %s342
      %s346 = sphi 0, %s345
      %s362 = sphi 0, %s346
    $region4: #{tpu_custom_call.1} parent=1 // loop_header_branch
      %32 = sbr.rel (%p30) target = $region8
    $region5: #{tpu_custom_call.1} parent=1 // loop_body
      %s34 = ssub.s32 %s29, 1
      %s35 = ssub.s32 %s29, 2
      %s42 = sadd.s32 1, %s37
      %p43 = scmp.ge.s32.totalorder %s42, 2
      %s44 = scalar_select %p43, 0, %s42
      %s45 = sadd.s32 1, %s36
      %s46 = scalar_select %p43, %s45, %s36
      %p47 = scmp.ge.s32.totalorder %s46, 2
      %s48 = scalar_select %p47, 0, %s46
      %s49 = ssub.s32 %s36, %s48
      %s50 = ssub.s32 %s37, %s44
      %s51 = sor.u32 %s49, %s50
      %p52 = scmp.eq.s32.totalorder %s51, 0
      %s54 = sadd.s32 %s53, 1
      %s55 = scalar_select %p52, %s53, %s54
      %p58 = pneg %p52
      %p59 = scmp.eq.s32.totalorder %s29, 3
      %p60 = por %p58, %p59
      %p61 = scmp.ne.s32.totalorder %s53, %s56
      %p62 = scmp.eq.s32.totalorder %s29, 0
      %p63 = por %p61, %p62
      %p64 = scmp.ne.s32.totalorder %s53, %s56
      %p65 = scmp.eq.s32.totalorder %s34, 3
      %p66 = por %p64, %p65
      %p67 = scmp.ne.s32.totalorder %s56, %s57
      %p68 = scmp.eq.s32.totalorder %s34, 0
      %p69 = por %p67, %p68
      %p70 = scmp.ne.s32.totalorder %s56, %s57
      %p71 = scmp.eq.s32.totalorder %s35, 3
      %p72 = por %p70, %p71
      %p74 = scmp.ne.s32.totalorder %s57, %s73
      %p75 = scmp.eq.s32.totalorder %s35, 0
      %p76 = por %p74, %p75
      %s77 = smul.u32 %s37, 32
      %s78 = ssub.s32 %s77, 1
      %p79 = scmp.gt.s32.totalorder %s78, 0
      %s80 = scalar_select %p79, %s78, 0
      %s81 = smul.u32 %s44, 32
      %s82 = ssub.s32 %s81, 1
      %p83 = scmp.gt.s32.totalorder %s82, 0
      %s84 = scalar_select %p83, %s82, 0
      %s85 = ssub.s32 %s36, %s48
      %s86 = ssub.s32 %s80, %s84
      %s87 = sor.u32 %s85, %s86
      %p88 = scmp.eq.s32.totalorder %s87, 0
      %s90 = sadd.s32 %s89, 1
      %s91 = scalar_select %p88, %s89, %s90
      %p94 = pneg %p88
      %p95 = scmp.eq.s32.totalorder %s29, 3
      %p96 = por %p94, %p95
      %p97 = scmp.ne.s32.totalorder %s89, %s92
      %p98 = scmp.eq.s32.totalorder %s29, 0
      %p99 = por %p97, %p98
      %p100 = scmp.ne.s32.totalorder %s89, %s92
      %p101 = scmp.eq.s32.totalorder %s34, 3
      %p102 = por %p100, %p101
      %p103 = scmp.ne.s32.totalorder %s92, %s93
      %p104 = scmp.eq.s32.totalorder %s34, 0
      %p105 = por %p103, %p104
      %p106 = scmp.ne.s32.totalorder %s92, %s93
      %p107 = scmp.eq.s32.totalorder %s35, 3
      %p108 = por %p106, %p107
      %p110 = scmp.ne.s32.totalorder %s93, %s109
      %p111 = scmp.eq.s32.totalorder %s35, 0
      %p112 = por %p110, %p111
      %s113 = sadd.s32 %s37, 1
      %s114 = smul.u32 %s113, 32
      %p115 = scmp.lt.s32.totalorder %s114, 63
      %s116 = scalar_select %p115, %s114, 63
      %s117 = sadd.s32 %s44, 1
      %s118 = smul.u32 %s117, 32
      %p119 = scmp.lt.s32.totalorder %s118, 63
      %s120 = scalar_select %p119, %s118, 63
      %s121 = ssub.s32 %s36, %s48
      %s122 = ssub.s32 %s116, %s120
      %s123 = sor.u32 %s121, %s122
      %p124 = scmp.eq.s32.totalorder %s123, 0
      %s126 = sadd.s32 %s125, 1
      %s127 = scalar_select %p124, %s125, %s126
      %p130 = pneg %p124
      %p131 = scmp.eq.s32.totalorder %s29, 3
      %p132 = por %p130, %p131
      %p133 = scmp.ne.s32.totalorder %s125, %s128
      %p134 = scmp.eq.s32.totalorder %s29, 0
      %p135 = por %p133, %p134
      %p136 = scmp.ne.s32.totalorder %s125, %s128
      %p137 = scmp.eq.s32.totalorder %s34, 3
      %p138 = por %p136, %p137
      %p139 = scmp.ne.s32.totalorder %s128, %s129
      %p140 = scmp.eq.s32.totalorder %s34, 0
      %p141 = por %p139, %p140
      %p142 = scmp.ne.s32.totalorder %s128, %s129
      %p143 = scmp.eq.s32.totalorder %s35, 3
      %p144 = por %p142, %p143
      %p146 = scmp.ne.s32.totalorder %s129, %s145
      %p147 = scmp.eq.s32.totalorder %s35, 0
      %p148 = por %p146, %p147
      %s150 = sadd.s32 %s149, 1
      %p153 = scmp.eq.s32.totalorder %s29, 3
      %p154 = scmp.ne.s32.totalorder %s149, %s151
      %p155 = scmp.eq.s32.totalorder %s29, 0
      %p156 = por %p154, %p155
      %p157 = scmp.ne.s32.totalorder %s149, %s151
      %p158 = scmp.eq.s32.totalorder %s34, 3
      %p159 = por %p157, %p158
      %p160 = scmp.ne.s32.totalorder %s151, %s152
      %p161 = scmp.eq.s32.totalorder %s34, 0
      %p162 = por %p160, %p161
      %p163 = scmp.ne.s32.totalorder %s151, %s152
      %p164 = scmp.eq.s32.totalorder %s35, 3
      %p165 = por %p163, %p164
      %p167 = scmp.ne.s32.totalorder %s152, %s166
      %p168 = scmp.eq.s32.totalorder %s35, 0
      %p169 = por %p167, %p168
      %s171 = sadd.s32 %s170, 1
      %p174 = scmp.eq.s32.totalorder %s29, 3
      %p175 = scmp.ne.s32.totalorder %s170, %s172
      %p176 = scmp.eq.s32.totalorder %s29, 0
      %p177 = por %p175, %p176
      %p178 = scmp.ne.s32.totalorder %s170, %s172
      %p179 = scmp.eq.s32.totalorder %s34, 3
      %p180 = por %p178, %p179
      %p181 = scmp.ne.s32.totalorder %s172, %s173
      %p182 = scmp.eq.s32.totalorder %s34, 0
      %p183 = por %p181, %p182
      %p184 = scmp.ne.s32.totalorder %s172, %s173
      %p185 = scmp.eq.s32.totalorder %s35, 3
      %p186 = por %p184, %p185
      %p188 = scmp.ne.s32.totalorder %s173, %s187
      %p189 = scmp.eq.s32.totalorder %s35, 0
      %p190 = por %p188, %p189
      %s192 = sadd.s32 %s191, 1
      %p195 = scmp.eq.s32.totalorder %s29, 3
      %p196 = scmp.ne.s32.totalorder %s191, %s193
      %p197 = scmp.eq.s32.totalorder %s29, 0
      %p198 = por %p196, %p197
      %p199 = scmp.ne.s32.totalorder %s191, %s193
      %p200 = scmp.eq.s32.totalorder %s34, 3
      %p201 = por %p199, %p200
      %p202 = scmp.ne.s32.totalorder %s193, %s194
      %p203 = scmp.eq.s32.totalorder %s34, 0
      %p204 = por %p202, %p203
      %p205 = scmp.ne.s32.totalorder %s193, %s194
      %p206 = scmp.eq.s32.totalorder %s35, 3
      %p207 = por %p205, %p206
      %p209 = scmp.ne.s32.totalorder %s194, %s208
      %p210 = scmp.eq.s32.totalorder %s35, 0
      %p211 = por %p209, %p210
      %s213 = sadd.s32 %s212, 1
      %p216 = scmp.eq.s32.totalorder %s29, 3
      %p217 = scmp.ne.s32.totalorder %s212, %s214
      %p218 = scmp.eq.s32.totalorder %s29, 0
      %p219 = por %p217, %p218
      %p220 = scmp.ne.s32.totalorder %s212, %s214
      %p221 = scmp.eq.s32.totalorder %s34, 3
      %p222 = por %p220, %p221
      %p223 = scmp.ne.s32.totalorder %s214, %s215
      %p224 = scmp.eq.s32.totalorder %s34, 0
      %p225 = por %p223, %p224
      %p226 = scmp.ne.s32.totalorder %s214, %s215
      %p227 = scmp.eq.s32.totalorder %s35, 3
      %p228 = por %p226, %p227
      %p230 = scmp.ne.s32.totalorder %s215, %s229
      %p231 = scmp.eq.s32.totalorder %s35, 0
      %p232 = por %p230, %p231
      %s234 = sadd.s32 %s233, 1
      %p237 = scmp.eq.s32.totalorder %s29, 3
      %p238 = scmp.ne.s32.totalorder %s233, %s235
      %p239 = scmp.eq.s32.totalorder %s29, 0
      %p240 = por %p238, %p239
      %p241 = scmp.ne.s32.totalorder %s233, %s235
      %p242 = scmp.eq.s32.totalorder %s34, 3
      %p243 = por %p241, %p242
      %p244 = scmp.ne.s32.totalorder %s235, %s236
      %p245 = scmp.eq.s32.totalorder %s34, 0
      %p246 = por %p244, %p245
      %p247 = scmp.ne.s32.totalorder %s235, %s236
      %p248 = scmp.eq.s32.totalorder %s35, 3
      %p249 = por %p247, %p248
      %p251 = scmp.ne.s32.totalorder %s236, %s250
      %p252 = scmp.eq.s32.totalorder %s35, 0
      %p253 = por %p251, %p252
      %s255 = sadd.s32 %s254, 1
      %p258 = scmp.eq.s32.totalorder %s29, 3
      %p259 = scmp.ne.s32.totalorder %s254, %s256
      %p260 = scmp.eq.s32.totalorder %s29, 0
      %p261 = por %p259, %p260
      %p262 = scmp.ne.s32.totalorder %s254, %s256
      %p263 = scmp.eq.s32.totalorder %s34, 3
      %p264 = por %p262, %p263
      %p265 = scmp.ne.s32.totalorder %s256, %s257
      %p266 = scmp.eq.s32.totalorder %s34, 0
      %p267 = por %p265, %p266
      %p268 = scmp.ne.s32.totalorder %s256, %s257
      %p269 = scmp.eq.s32.totalorder %s35, 3
      %p270 = por %p268, %p269
      %p272 = scmp.ne.s32.totalorder %s257, %s271
      %p273 = scmp.eq.s32.totalorder %s35, 0
      %p274 = por %p272, %p273
      %s276 = sadd.s32 %s275, 1
      %p279 = scmp.eq.s32.totalorder %s29, 3
      %p280 = scmp.ne.s32.totalorder %s275, %s277
      %p281 = scmp.eq.s32.totalorder %s29, 0
      %p282 = por %p280, %p281
      %p283 = scmp.ne.s32.totalorder %s275, %s277
      %p284 = scmp.eq.s32.totalorder %s34, 3
      %p285 = por %p283, %p284
      %p286 = scmp.ne.s32.totalorder %s277, %s278
      %p287 = scmp.eq.s32.totalorder %s34, 0
      %p288 = por %p286, %p287
      %p289 = scmp.ne.s32.totalorder %s277, %s278
      %p290 = scmp.eq.s32.totalorder %s35, 3
      %p291 = por %p289, %p290
      %p293 = scmp.ne.s32.totalorder %s278, %s292
      %p294 = scmp.eq.s32.totalorder %s35, 0
      %p295 = por %p293, %p294
      %s297 = sadd.s32 %s296, 1
      %p300 = scmp.eq.s32.totalorder %s29, 3
      %p301 = scmp.ne.s32.totalorder %s296, %s298
      %p302 = scmp.eq.s32.totalorder %s29, 0
      %p303 = por %p301, %p302
      %p304 = scmp.ne.s32.totalorder %s296, %s298
      %p305 = scmp.eq.s32.totalorder %s34, 3
      %p306 = por %p304, %p305
      %p307 = scmp.ne.s32.totalorder %s298, %s299
      %p308 = scmp.eq.s32.totalorder %s34, 0
      %p309 = por %p307, %p308
      %p310 = scmp.ne.s32.totalorder %s298, %s299
      %p311 = scmp.eq.s32.totalorder %s35, 3
      %p312 = por %p310, %p311
      %p314 = scmp.ne.s32.totalorder %s299, %s313
      %p315 = scmp.eq.s32.totalorder %s35, 0
      %p316 = por %p314, %p315
      %s318 = sadd.s32 %s317, 1
      %p321 = scmp.eq.s32.totalorder %s29, 3
      %p322 = scmp.ne.s32.totalorder %s317, %s319
      %p323 = scmp.eq.s32.totalorder %s29, 0
      %p324 = por %p322, %p323
      %p325 = scmp.ne.s32.totalorder %s317, %s319
      %p326 = scmp.eq.s32.totalorder %s34, 3
      %p327 = por %p325, %p326
      %p328 = scmp.ne.s32.totalorder %s319, %s320
      %p329 = scmp.eq.s32.totalorder %s34, 0
      %p330 = por %p328, %p329
      %p331 = scmp.ne.s32.totalorder %s319, %s320
      %p332 = scmp.eq.s32.totalorder %s35, 3
      %p333 = por %p331, %p332
      %p335 = scmp.ne.s32.totalorder %s320, %s334
      %p336 = scmp.eq.s32.totalorder %s35, 0
      %p337 = por %p335, %p336
      %s338 = ssub.s32 %s36, %s48
      %s339 = ssub.s32 %s37, %s44
      %s340 = sor.u32 %s338, %s339
      %p341 = scmp.eq.s32.totalorder %s340, 0
      %s343 = sadd.s32 %s342, 1
      %s344 = scalar_select %p341, %s342, %s343
      %p347 = pneg %p341
      %p348 = scmp.eq.s32.totalorder %s29, 3
      %p349 = por %p347, %p348
      %p350 = scmp.ne.s32.totalorder %s342, %s345
      %p351 = scmp.eq.s32.totalorder %s29, 0
      %p352 = por %p350, %p351
      %p353 = scmp.ne.s32.totalorder %s342, %s345
      %p354 = scmp.eq.s32.totalorder %s34, 3
      %p355 = por %p353, %p354
      %p356 = scmp.ne.s32.totalorder %s345, %s346
      %p357 = scmp.eq.s32.totalorder %s34, 0
      %p358 = por %p356, %p357
      %p359 = scmp.ne.s32.totalorder %s345, %s346
      %p360 = scmp.eq.s32.totalorder %s35, 3
      %p361 = por %p359, %p360
      %p363 = scmp.ne.s32.totalorder %s346, %s362
      %p364 = scmp.eq.s32.totalorder %s35, 0
      %p365 = por %p363, %p364
      %p366 = scmp.le.s32.totalorder 1, %s29
      %p367 = scmp.lt.s32.totalorder %s29, 5
      %p368 = pnand %p366, %p367
      %p369 = pneg %p368
      // Predicated region
      $region9: #{tpu_custom_call.1} parent=5 // pred_check
        _
      $region10: #{tpu_custom_call.1} parent=5 // pred_check_branch
        %371 = sbr.rel (%p368) target = $region12
      $region11: #{tpu_custom_call.1} parent=5 // pred_region
        %s372 = ssub.s32 %s29, 1
        // Predicated region
        $region13: #{tpu_custom_call.1} parent=11 // pred_check
          %p373 = pneg %p162
        $region14: #{tpu_custom_call.1} parent=11 // pred_check_branch
          %375 = sbr.rel (%p373) target = $region16
        $region15: #{tpu_custom_call.1} parent=11 // pred_region
          %377 = vsyncadd [#allocation10], 0
          %s379 = sshll.u32 %s3, 4
          %s380 = int_to_ptr.hbm [resolvable:$true] %s379
          %s381 = sshll.u32 [#allocation9], 4
          %s382 = int_to_ptr.vmem [resolvable:$true] %s381
          %384 = dma.hbm_to_vmem [thread:$0]  %s380, 128, %s382, [#allocation10]
        $region16: #{tpu_custom_call.1} parent=11 // pred_fallthru
          _
        // Predicated region
        $region17: #{tpu_custom_call.1} parent=11 // pred_check
          %p385 = pneg %p183
        $region18: #{tpu_custom_call.1} parent=11 // pred_check_branch
          %387 = sbr.rel (%p385) target = $region20
        $region19: #{tpu_custom_call.1} parent=11 // pred_region
          _
        $region20: #{tpu_custom_call.1} parent=11 // pred_fallthru
          _
        // Predicated region
        $region21: #{tpu_custom_call.1} parent=11 // pred_check
          %p388 = pneg %p204
        $region22: #{tpu_custom_call.1} parent=11 // pred_check_branch
          %390 = sbr.rel (%p388) target = $region24
        $region23: #{tpu_custom_call.1} parent=11 // pred_region
          _
        $region24: #{tpu_custom_call.1} parent=11 // pred_fallthru
          _
        // Predicated region
        $region25: #{tpu_custom_call.1} parent=11 // pred_check
          %p391 = pneg %p225
        $region26: #{tpu_custom_call.1} parent=11 // pred_check_branch
          %393 = sbr.rel (%p391) target = $region28
        $region27: #{tpu_custom_call.1} parent=11 // pred_region
          _
        $region28: #{tpu_custom_call.1} parent=11 // pred_fallthru
          _
        // Predicated region
        $region29: #{tpu_custom_call.1} parent=11 // pred_check
          %p394 = pneg %p246
        $region30: #{tpu_custom_call.1} parent=11 // pred_check_branch
          %396 = sbr.rel (%p394) target = $region32
        $region31: #{tpu_custom_call.1} parent=11 // pred_region
          %398 = vsyncadd [#allocation10], 0
          %s399 = sshll.u32 %s7, 4
          %s400 = int_to_ptr.hbm [resolvable:$true] %s399
          %s401 = sshll.u32 [#allocation11], 4
          %s402 = int_to_ptr.vmem [resolvable:$true] %s401
          %407 = dma.hbm_to_vmem [thread:$0]  %s400, 2048, %s402, [#allocation10], 128, 128, 8
        $region32: #{tpu_custom_call.1} parent=11 // pred_fallthru
          _
        // Predicated region
        $region33: #{tpu_custom_call.1} parent=11 // pred_check
          %p408 = pneg %p267
        $region34: #{tpu_custom_call.1} parent=11 // pred_check_branch
          %410 = sbr.rel (%p408) target = $region36
        $region35: #{tpu_custom_call.1} parent=11 // pred_region
          _
        $region36: #{tpu_custom_call.1} parent=11 // pred_fallthru
          _
        // Predicated region
        $region37: #{tpu_custom_call.1} parent=11 // pred_check
          %p411 = pneg %p288
        $region38: #{tpu_custom_call.1} parent=11 // pred_check_branch
          %413 = sbr.rel (%p411) target = $region40
        $region39: #{tpu_custom_call.1} parent=11 // pred_region
          %415 = vsyncadd [#allocation13], 0
          %s416 = sshll.u32 %s9, 4
          %s417 = int_to_ptr.hbm [resolvable:$true] %s416
          %s418 = sshll.u32 [#allocation12], 4
          %s419 = int_to_ptr.vmem [resolvable:$true] %s418
          %424 = dma.hbm_to_vmem [thread:$0]  %s417, 2048, %s419, [#allocation13], 64, 64, 4
        $region40: #{tpu_custom_call.1} parent=11 // pred_fallthru
          _
        // Predicated region
        $region41: #{tpu_custom_call.1} parent=11 // pred_check
          %p425 = pneg %p309
        $region42: #{tpu_custom_call.1} parent=11 // pred_check_branch
          %427 = sbr.rel (%p425) target = $region44
        $region43: #{tpu_custom_call.1} parent=11 // pred_region
          _
        $region44: #{tpu_custom_call.1} parent=11 // pred_fallthru
          _
        // Predicated region
        $region45: #{tpu_custom_call.1} parent=11 // pred_check
          %p428 = pneg %p330
        $region46: #{tpu_custom_call.1} parent=11 // pred_check_branch
          %430 = sbr.rel (%p428) target = $region48
        $region47: #{tpu_custom_call.1} parent=11 // pred_region
          _
        $region48: #{tpu_custom_call.1} parent=11 // pred_fallthru
          _
      $region12: #{tpu_custom_call.1} parent=5 // pred_fallthru
        _
      %p431 = scmp.lt.s32.totalorder %s29, 4
      // Predicated region
      $region49: #{tpu_custom_call.1} parent=5 // pred_check
        %p432 = pneg %p431
      $region50: #{tpu_custom_call.1} parent=5 // pred_check_branch
        %434 = sbr.rel (%p432) target = $region52
      $region51: #{tpu_custom_call.1} parent=5 // pred_region
        // Predicated region
        $region53: #{tpu_custom_call.1} parent=51 // pred_check
          %p435 = pneg %p63
        $region54: #{tpu_custom_call.1} parent=51 // pred_check_branch
          %437 = sbr.rel (%p435) target = $region56
        $region55: #{tpu_custom_call.1} parent=51 // pred_region
          %s438 = sand.u32 %s53, 1
          %s439 = scalar_lea.sflag [#allocation4], %s438
          %s440 = sand.u32 %s53, 1
          %s441 = smul.addr %s440, 256
          %s442 = scalar_lea.vmem [#allocation3], %s441
          %s443 = smul.u32 32, %s37
          %445 = vsyncadd %s439, 0
          %s446 = smul.addr %s36, 64
          %s447 = sadd.s32 %s443, %s446
          %s448 = smul.addr %s447, 8
          %s449 = scalar_lea.hbm %s0, %s448
          %s450 = sshll.u32 %s449, 4
          %s451 = int_to_ptr.hbm [resolvable:$true] %s450
          %s452 = sshll.u32 %s442, 4
          %s453 = int_to_ptr.vmem [resolvable:$true] %s452
          %458 = dma.hbm_to_vmem [thread:$0]  %s451, 4096, %s453, %s439, 128, 128, 8
        $region56: #{tpu_custom_call.1} parent=51 // pred_fallthru
          _
        // Predicated region
        $region57: #{tpu_custom_call.1} parent=51 // pred_check
          %p459 = pneg %p99
        $region58: #{tpu_custom_call.1} parent=51 // pred_check_branch
          %461 = sbr.rel (%p459) target = $region60
        $region59: #{tpu_custom_call.1} parent=51 // pred_region
          %s462 = sand.u32 %s29, 1
          %s463 = scalar_lea.sflag [#allocation7], %s462
          %s464 = sand.u32 %s89, 1
          %s465 = smul.addr %s464, 8
          %s466 = scalar_lea.vmem [#allocation6], %s465
          %s467 = smul.u32 %s37, 32
          %s468 = ssub.s32 %s467, 1
          %p469 = scmp.gt.s32.totalorder %s468, 0
          %s470 = scalar_select %p469, %s468, 0
          %472 = vsyncadd %s463, 0
          %s473 = smul.addr %s36, 64
          %s474 = sadd.s32 %s470, %s473
          %s475 = smul.addr %s474, 8
          %s476 = scalar_lea.hbm %s1, %s475
          %s478 = sshll.u32 %s476, 4
          %s479 = int_to_ptr.hbm [resolvable:$true] %s478
          %s480 = sshll.u32 %s466, 4
          %s481 = int_to_ptr.vmem [resolvable:$true] %s480
          %483 = dma.hbm_to_vmem [thread:$0]  %s479, 128, %s481, %s463
        $region60: #{tpu_custom_call.1} parent=51 // pred_fallthru
          _
        // Predicated region
        $region61: #{tpu_custom_call.1} parent=51 // pred_check
          %p484 = pneg %p135
        $region62: #{tpu_custom_call.1} parent=51 // pred_check_branch
          %486 = sbr.rel (%p484) target = $region64
        $region63: #{tpu_custom_call.1} parent=51 // pred_region
          %s487 = sand.u32 %s29, 1
          %s488 = scalar_lea.sflag [#allocation7], %s487
          %s489 = sand.u32 %s125, 1
          %s490 = smul.addr %s489, 8
          %s491 = scalar_lea.vmem [#allocation8], %s490
          %s492 = sadd.s32 %s37, 1
          %s493 = smul.u32 %s492, 32
          %p494 = scmp.lt.s32.totalorder %s493, 63
          %s495 = scalar_select %p494, %s493, 63
          %497 = vsyncadd %s488, 0
          %s498 = smul.addr %s36, 64
          %s499 = sadd.s32 %s495, %s498
          %s500 = smul.addr %s499, 8
          %s501 = scalar_lea.hbm %s2, %s500
          %s503 = sshll.u32 %s501, 4
          %s504 = int_to_ptr.hbm [resolvable:$true] %s503
          %s505 = sshll.u32 %s491, 4
          %s506 = int_to_ptr.vmem [resolvable:$true] %s505
          %508 = dma.hbm_to_vmem [thread:$0]  %s504, 128, %s506, %s488
        $region64: #{tpu_custom_call.1} parent=51 // pred_fallthru
          _
      $region52: #{tpu_custom_call.1} parent=5 // pred_fallthru
        _
      %p509 = scmp.le.s32.totalorder 1, %s29
      %p510 = scmp.lt.s32.totalorder %s29, 5
      %p511 = pnand %p509, %p510
      %p512 = pneg %p511
      // Predicated region
      $region65: #{tpu_custom_call.1} parent=5 // pred_check
        _
      $region66: #{tpu_custom_call.1} parent=5 // pred_check_branch
        %514 = sbr.rel (%p511) target = $region68
      $region67: #{tpu_custom_call.1} parent=5 // pred_region
        %s515 = ssub.s32 %s29, 1
        %s516 = sand.u32 %s56, 1
        %s517 = scalar_lea.sflag [#allocation4], %s516
        %s518 = sand.u32 %s56, 1
        %s519 = smul.addr %s518, 256
        %s520 = scalar_lea.vmem [#allocation3], %s519
        // Predicated region
        $region69: #{tpu_custom_call.1} parent=67 // pred_check
          %p521 = pneg %p69
        $region70: #{tpu_custom_call.1} parent=67 // pred_check_branch
          %523 = sbr.rel (%p521) target = $region72
        $region71: #{tpu_custom_call.1} parent=67 // pred_region
          %525 = dma.done %s517, 4096
        $region72: #{tpu_custom_call.1} parent=67 // pred_fallthru
          _
        %s526 = sand.u32 %s34, 1
        %s527 = scalar_lea.sflag [#allocation7], %s526
        %s528 = sand.u32 %s92, 1
        %s529 = smul.addr %s528, 8
        %s530 = scalar_lea.vmem [#allocation6], %s529
        // Predicated region
        $region73: #{tpu_custom_call.1} parent=67 // pred_check
          %p531 = pneg %p105
        $region74: #{tpu_custom_call.1} parent=67 // pred_check_branch
          %533 = sbr.rel (%p531) target = $region76
        $region75: #{tpu_custom_call.1} parent=67 // pred_region
          %535 = dma.done %s527, 128
        $region76: #{tpu_custom_call.1} parent=67 // pred_fallthru
          _
        %s536 = sand.u32 %s34, 1
        %s537 = scalar_lea.sflag [#allocation7], %s536
        %s538 = sand.u32 %s128, 1
        %s539 = smul.addr %s538, 8
        %s540 = scalar_lea.vmem [#allocation8], %s539
        // Predicated region
        $region77: #{tpu_custom_call.1} parent=67 // pred_check
          %p541 = pneg %p141
        $region78: #{tpu_custom_call.1} parent=67 // pred_check_branch
          %543 = sbr.rel (%p541) target = $region80
        $region79: #{tpu_custom_call.1} parent=67 // pred_region
          %545 = dma.done %s537, 128
        $region80: #{tpu_custom_call.1} parent=67 // pred_fallthru
          _
        // Predicated region
        $region81: #{tpu_custom_call.1} parent=67 // pred_check
          %p546 = pneg %p162
        $region82: #{tpu_custom_call.1} parent=67 // pred_check_branch
          %548 = sbr.rel (%p546) target = $region84
        $region83: #{tpu_custom_call.1} parent=67 // pred_region
          %550 = dma.done [#allocation10], 128
        $region84: #{tpu_custom_call.1} parent=67 // pred_fallthru
          _
        // Predicated region
        $region85: #{tpu_custom_call.1} parent=67 // pred_check
          %p551 = pneg %p246
        $region86: #{tpu_custom_call.1} parent=67 // pred_check_branch
          %553 = sbr.rel (%p551) target = $region88
        $region87: #{tpu_custom_call.1} parent=67 // pred_region
          %555 = dma.done [#allocation10], 2048
        $region88: #{tpu_custom_call.1} parent=67 // pred_fallthru
          _
        // Predicated region
        $region89: #{tpu_custom_call.1} parent=67 // pred_check
          %p556 = pneg %p288
        $region90: #{tpu_custom_call.1} parent=67 // pred_check_branch
          %558 = sbr.rel (%p556) target = $region92
        $region91: #{tpu_custom_call.1} parent=67 // pred_region
          %560 = dma.done [#allocation13], 2048
        $region92: #{tpu_custom_call.1} parent=67 // pred_fallthru
          _
        %s561 = sand.u32 %s56, 1
        %s562 = scalar_lea.sflag [#allocation4], %s561
        %s563 = sand.u32 %s56, 1
        %s564 = smul.addr %s563, 256
        %s565 = scalar_lea.vmem [#allocation3], %s564
        %p566 = pneg %p69
        %p567 = pneg %p66
        %s568 = sand.u32 %s34, 1
        %s569 = scalar_lea.sflag [#allocation7], %s568
        %s570 = sand.u32 %s92, 1
        %s571 = smul.addr %s570, 8
        %s572 = scalar_lea.vmem [#allocation6], %s571
        %p573 = pneg %p105
        %p574 = pneg %p102
        %s575 = sand.u32 %s34, 1
        %s576 = scalar_lea.sflag [#allocation7], %s575
        %s577 = sand.u32 %s128, 1
        %s578 = smul.addr %s577, 8
        %s579 = scalar_lea.vmem [#allocation8], %s578
        %p580 = pneg %p141
        %p581 = pneg %p138
        %p582 = pneg %p162
        %p583 = pneg %p159
        %p584 = pneg %p183
        %p585 = pneg %p180
        %p586 = pneg %p204
        %p587 = pneg %p201
        %p588 = pneg %p225
        %p589 = pneg %p222
        %p590 = pneg %p246
        %p591 = pneg %p243
        %p592 = pneg %p267
        %p593 = pneg %p264
        %p594 = pneg %p288
        %p595 = pneg %p285
        %p596 = pneg %p309
        %p597 = pneg %p306
        %p598 = pneg %p330
        %p599 = pneg %p327
        %p600 = pneg %p358
        %p601 = pneg %p355
        %s602 = sand.u32 %s345, 1
        %s603 = scalar_lea.sflag [#allocation5], %s602
        %s604 = sand.u32 %s345, 1
        %s605 = smul.addr %s604, 256
        %s606 = scalar_lea.vmem [#allocation14], %s605
        %s607 = smul.u32 32, %s39
        %s608 = smul.u32 %s39, 32
        %s609 = ssub.s32 %s608, 1
        %p610 = scmp.gt.s32.totalorder %s609, 0
        %s611 = scalar_select %p610, %s609, 0
        %s612 = sadd.s32 %s39, 1
        %s613 = smul.u32 %s612, 32
        %p614 = scmp.lt.s32.totalorder %s613, 63
        %s615 = scalar_select %p614, %s613, 63
        %s616 = smul.u32 32, %s39
        %v617 = vld [vmem:[%s530] sm:$0xff]
        %618 = vst [vmem:[#allocation2] sm:$0xff] %v617
        %v619 = vld [vmem:[%s520] sm:$0xff]
        %v620 = vld [vmem:[%s520 + $0x8] sm:$0xff]
        %v621 = vld [vmem:[%s520 + $0x10] sm:$0xff]
        %v622 = vld [vmem:[%s520 + $0x18] sm:$0xff]
        %v623 = vld [vmem:[%s520 + $0x20] sm:$0xff]
        %v624 = vld [vmem:[%s520 + $0x28] sm:$0xff]
        %v625 = vld [vmem:[%s520 + $0x30] sm:$0xff]
        %v626 = vld [vmem:[%s520 + $0x38] sm:$0xff]
        %v627 = vld [vmem:[%s520 + $0x40] sm:$0xff]
        %v628 = vld [vmem:[%s520 + $0x48] sm:$0xff]
        %v629 = vld [vmem:[%s520 + $0x50] sm:$0xff]
        %v630 = vld [vmem:[%s520 + $0x58] sm:$0xff]
        %v631 = vld [vmem:[%s520 + $0x60] sm:$0xff]
        %v632 = vld [vmem:[%s520 + $0x68] sm:$0xff]
        %v633 = vld [vmem:[%s520 + $0x70] sm:$0xff]
        %v634 = vld [vmem:[%s520 + $0x78] sm:$0xff]
        %v635 = vld [vmem:[%s520 + $0x80] sm:$0xff]
        %v636 = vld [vmem:[%s520 + $0x88] sm:$0xff]
        %v637 = vld [vmem:[%s520 + $0x90] sm:$0xff]
        %v638 = vld [vmem:[%s520 + $0x98] sm:$0xff]
        %v639 = vld [vmem:[%s520 + $0xa0] sm:$0xff]
        %v640 = vld [vmem:[%s520 + $0xa8] sm:$0xff]
        %v641 = vld [vmem:[%s520 + $0xb0] sm:$0xff]
        %v642 = vld [vmem:[%s520 + $0xb8] sm:$0xff]
        %v643 = vld [vmem:[%s520 + $0xc0] sm:$0xff]
        %v644 = vld [vmem:[%s520 + $0xc8] sm:$0xff]
        %v645 = vld [vmem:[%s520 + $0xd0] sm:$0xff]
        %v646 = vld [vmem:[%s520 + $0xd8] sm:$0xff]
        %v647 = vld [vmem:[%s520 + $0xe0] sm:$0xff]
        %v648 = vld [vmem:[%s520 + $0xe8] sm:$0xff]
        %v649 = vld [vmem:[%s520 + $0xf0] sm:$0xff]
        %v650 = vld [vmem:[%s520 + $0xf8] sm:$0xff]
        %651 = vst [vmem:[#allocation2 + $0x8] sm:$0xff] %v619
        %652 = vst [vmem:[#allocation2 + $0x10] sm:$0xff] %v620
        %653 = vst [vmem:[#allocation2 + $0x18] sm:$0xff] %v621
        %654 = vst [vmem:[#allocation2 + $0x20] sm:$0xff] %v622
        %655 = vst [vmem:[#allocation2 + $0x28] sm:$0xff] %v623
        %656 = vst [vmem:[#allocation2 + $0x30] sm:$0xff] %v624
        %657 = vst [vmem:[#allocation2 + $0x38] sm:$0xff] %v625
        %658 = vst [vmem:[#allocation2 + $0x40] sm:$0xff] %v626
        %659 = vst [vmem:[#allocation2 + $0x48] sm:$0xff] %v627
        %660 = vst [vmem:[#allocation2 + $0x50] sm:$0xff] %v628
        %661 = vst [vmem:[#allocation2 + $0x58] sm:$0xff] %v629
        %662 = vst [vmem:[#allocation2 + $0x60] sm:$0xff] %v630
        %663 = vst [vmem:[#allocation2 + $0x68] sm:$0xff] %v631
        %664 = vst [vmem:[#allocation2 + $0x70] sm:$0xff] %v632
        %665 = vst [vmem:[#allocation2 + $0x78] sm:$0xff] %v633
        %666 = vst [vmem:[#allocation2 + $0x80] sm:$0xff] %v634
        %667 = vst [vmem:[#allocation2 + $0x88] sm:$0xff] %v635
        %668 = vst [vmem:[#allocation2 + $0x90] sm:$0xff] %v636
        %669 = vst [vmem:[#allocation2 + $0x98] sm:$0xff] %v637
        %670 = vst [vmem:[#allocation2 + $0xa0] sm:$0xff] %v638
        %671 = vst [vmem:[#allocation2 + $0xa8] sm:$0xff] %v639
        %672 = vst [vmem:[#allocation2 + $0xb0] sm:$0xff] %v640
        %673 = vst [vmem:[#allocation2 + $0xb8] sm:$0xff] %v641
        %674 = vst [vmem:[#allocation2 + $0xc0] sm:$0xff] %v642
        %675 = vst [vmem:[#allocation2 + $0xc8] sm:$0xff] %v643
        %676 = vst [vmem:[#allocation2 + $0xd0] sm:$0xff] %v644
        %677 = vst [vmem:[#allocation2 + $0xd8] sm:$0xff] %v645
        %678 = vst [vmem:[#allocation2 + $0xe0] sm:$0xff] %v646
        %679 = vst [vmem:[#allocation2 + $0xe8] sm:$0xff] %v647
        %680 = vst [vmem:[#allocation2 + $0xf0] sm:$0xff] %v648
        %681 = vst [vmem:[#allocation2 + $0xf8] sm:$0xff] %v649
        %682 = vst [vmem:[#allocation2 + $0x100] sm:$0xff] %v650
        %v683 = vld [vmem:[%s540] sm:$0xff]
        %684 = vst [vmem:[#allocation2 + $0x108] sm:$0xff] %v683
        %p685 = scmp.eq.s32.totalorder %s39, 0
        // Predicated region
        $region93: #{tpu_custom_call.1} parent=67 // pred_check
          %p686 = pneg %p685
        $region94: #{tpu_custom_call.1} parent=67 // pred_check_branch
          %688 = sbr.rel (%p686) target = $region96
        $region95: #{tpu_custom_call.1} parent=67 // pred_region
          %689 = vst [vmem:[#allocation2] sm:$0xff] 0.0
        $region96: #{tpu_custom_call.1} parent=67 // pred_fallthru
          _
        %p690 = scmp.eq.s32.totalorder %s39, 1
        // Predicated region
        $region97: #{tpu_custom_call.1} parent=67 // pred_check
          %p691 = pneg %p690
        $region98: #{tpu_custom_call.1} parent=67 // pred_check_branch
          %693 = sbr.rel (%p691) target = $region100
        $region99: #{tpu_custom_call.1} parent=67 // pred_region
          %694 = vst [vmem:[#allocation2 + $0x108] sm:$0xff] 0.0
        $region100: #{tpu_custom_call.1} parent=67 // pred_fallthru
          _
        %v695 = vld [vmem:[#allocation9] sm:$0x7f]
        %v696 = vld [vmem:[#allocation2 + $0x5] sm:$0xff]
        %v697 = vld [vmem:[#allocation2 + $0xd] sm:$0xff]
        %v698 = vld [vmem:[#allocation2 + $0x15] sm:$0xff]
        %v699 = vld [vmem:[#allocation2 + $0x1d] sm:$0xff]
        %v700 = vld [vmem:[#allocation2 + $0x25] sm:$0xff]
        %v701 = vld [vmem:[#allocation2 + $0x2d] sm:$0xff]
        %v702 = vld [vmem:[#allocation2 + $0x35] sm:$0xff]
        %v703 = vld [vmem:[#allocation2 + $0x3d] sm:$0xff]
        %v704 = vld [vmem:[#allocation2 + $0x45] sm:$0xff]
        %v705 = vld [vmem:[#allocation2 + $0x4d] sm:$0xff]
        %v706 = vld [vmem:[#allocation2 + $0x55] sm:$0xff]
        %v707 = vld [vmem:[#allocation2 + $0x5d] sm:$0xff]
        %v708 = vld [vmem:[#allocation2 + $0x65] sm:$0xff]
        %v709 = vld [vmem:[#allocation2 + $0x6d] sm:$0xff]
        %v710 = vld [vmem:[#allocation2 + $0x75] sm:$0xff]
        %v711 = vld [vmem:[#allocation2 + $0x7d] sm:$0xff]
        %v712 = vld [vmem:[#allocation2 + $0x85] sm:$0xff]
        %v713 = vld [vmem:[#allocation2 + $0x8d] sm:$0xff]
        %v714 = vld [vmem:[#allocation2 + $0x95] sm:$0xff]
        %v715 = vld [vmem:[#allocation2 + $0x9d] sm:$0xff]
        %v716 = vld [vmem:[#allocation2 + $0xa5] sm:$0xff]
        %v717 = vld [vmem:[#allocation2 + $0xad] sm:$0xff]
        %v718 = vld [vmem:[#allocation2 + $0xb5] sm:$0xff]
        %v719 = vld [vmem:[#allocation2 + $0xbd] sm:$0xff]
        %v720 = vld [vmem:[#allocation2 + $0xc5] sm:$0xff]
        %v721 = vld [vmem:[#allocation2 + $0xcd] sm:$0xff]
        %v722 = vld [vmem:[#allocation2 + $0xd5] sm:$0xff]
        %v723 = vld [vmem:[#allocation2 + $0xdd] sm:$0xff]
        %v724 = vld [vmem:[#allocation2 + $0xe5] sm:$0xff]
        %v725 = vld [vmem:[#allocation2 + $0xed] sm:$0xff]
        %v726 = vld [vmem:[#allocation2 + $0xf5] sm:$0xff]
        %v727 = vld [vmem:[#allocation2 + $0xfd] sm:$0xff]
        %v728 = vperm.slane %v695, 0
        %v729 = vmul.f32 %v696, %v728
        %v730 = vmul.f32 %v697, %v728
        %v731 = vmul.f32 %v698, %v728
        %v732 = vmul.f32 %v699, %v728
        %v733 = vmul.f32 %v700, %v728
        %v734 = vmul.f32 %v701, %v728
        %v735 = vmul.f32 %v702, %v728
        %v736 = vmul.f32 %v703, %v728
        %v737 = vmul.f32 %v704, %v728
        %v738 = vmul.f32 %v705, %v728
        %v739 = vmul.f32 %v706, %v728
        %v740 = vmul.f32 %v707, %v728
        %v741 = vmul.f32 %v708, %v728
        %v742 = vmul.f32 %v709, %v728
        %v743 = vmul.f32 %v710, %v728
        %v744 = vmul.f32 %v711, %v728
        %v745 = vmul.f32 %v712, %v728
        %v746 = vmul.f32 %v713, %v728
        %v747 = vmul.f32 %v714, %v728
        %v748 = vmul.f32 %v715, %v728
        %v749 = vmul.f32 %v716, %v728
        %v750 = vmul.f32 %v717, %v728
        %v751 = vmul.f32 %v718, %v728
        %v752 = vmul.f32 %v719, %v728
        %v753 = vmul.f32 %v720, %v728
        %v754 = vmul.f32 %v721, %v728
        %v755 = vmul.f32 %v722, %v728
        %v756 = vmul.f32 %v723, %v728
        %v757 = vmul.f32 %v724, %v728
        %v758 = vmul.f32 %v725, %v728
        %v759 = vmul.f32 %v726, %v728
        %v760 = vmul.f32 %v727, %v728
        %v761 = vld [vmem:[#allocation2 + $0x6] sm:$0xff]
        %v762 = vld [vmem:[#allocation2 + $0xe] sm:$0xff]
        %v763 = vld [vmem:[#allocation2 + $0x16] sm:$0xff]
        %v764 = vld [vmem:[#allocation2 + $0x1e] sm:$0xff]
        %v765 = vld [vmem:[#allocation2 + $0x26] sm:$0xff]
        %v766 = vld [vmem:[#allocation2 + $0x2e] sm:$0xff]
        %v767 = vld [vmem:[#allocation2 + $0x36] sm:$0xff]
        %v768 = vld [vmem:[#allocation2 + $0x3e] sm:$0xff]
        %v769 = vld [vmem:[#allocation2 + $0x46] sm:$0xff]
        %v770 = vld [vmem:[#allocation2 + $0x4e] sm:$0xff]
        %v771 = vld [vmem:[#allocation2 + $0x56] sm:$0xff]
        %v772 = vld [vmem:[#allocation2 + $0x5e] sm:$0xff]
        %v773 = vld [vmem:[#allocation2 + $0x66] sm:$0xff]
        %v774 = vld [vmem:[#allocation2 + $0x6e] sm:$0xff]
        %v775 = vld [vmem:[#allocation2 + $0x76] sm:$0xff]
        %v776 = vld [vmem:[#allocation2 + $0x7e] sm:$0xff]
        %v777 = vld [vmem:[#allocation2 + $0x86] sm:$0xff]
        %v778 = vld [vmem:[#allocation2 + $0x8e] sm:$0xff]
        %v779 = vld [vmem:[#allocation2 + $0x96] sm:$0xff]
        %v780 = vld [vmem:[#allocation2 + $0x9e] sm:$0xff]
        %v781 = vld [vmem:[#allocation2 + $0xa6] sm:$0xff]
        %v782 = vld [vmem:[#allocation2 + $0xae] sm:$0xff]
        %v783 = vld [vmem:[#allocation2 + $0xb6] sm:$0xff]
        %v784 = vld [vmem:[#allocation2 + $0xbe] sm:$0xff]
        %v785 = vld [vmem:[#allocation2 + $0xc6] sm:$0xff]
        %v786 = vld [vmem:[#allocation2 + $0xce] sm:$0xff]
        %v787 = vld [vmem:[#allocation2 + $0xd6] sm:$0xff]
        %v788 = vld [vmem:[#allocation2 + $0xde] sm:$0xff]
        %v789 = vld [vmem:[#allocation2 + $0xe6] sm:$0xff]
        %v790 = vld [vmem:[#allocation2 + $0xee] sm:$0xff]
        %v791 = vld [vmem:[#allocation2 + $0xf6] sm:$0xff]
        %v792 = vld [vmem:[#allocation2 + $0xfe] sm:$0xff]
        %v793 = vperm.slane %v695, 1
        %v794 = vmul.f32 %v761, %v793
        %v795 = vmul.f32 %v762, %v793
        %v796 = vmul.f32 %v763, %v793
        %v797 = vmul.f32 %v764, %v793
        %v798 = vmul.f32 %v765, %v793
        %v799 = vmul.f32 %v766, %v793
        %v800 = vmul.f32 %v767, %v793
        %v801 = vmul.f32 %v768, %v793
        %v802 = vmul.f32 %v769, %v793
        %v803 = vmul.f32 %v770, %v793
        %v804 = vmul.f32 %v771, %v793
        %v805 = vmul.f32 %v772, %v793
        %v806 = vmul.f32 %v773, %v793
        %v807 = vmul.f32 %v774, %v793
        %v808 = vmul.f32 %v775, %v793
        %v809 = vmul.f32 %v776, %v793
        %v810 = vmul.f32 %v777, %v793
        %v811 = vmul.f32 %v778, %v793
        %v812 = vmul.f32 %v779, %v793
        %v813 = vmul.f32 %v780, %v793
        %v814 = vmul.f32 %v781, %v793
        %v815 = vmul.f32 %v782, %v793
        %v816 = vmul.f32 %v783, %v793
        %v817 = vmul.f32 %v784, %v793
        %v818 = vmul.f32 %v785, %v793
        %v819 = vmul.f32 %v786, %v793
        %v820 = vmul.f32 %v787, %v793
        %v821 = vmul.f32 %v788, %v793
        %v822 = vmul.f32 %v789, %v793
        %v823 = vmul.f32 %v790, %v793
        %v824 = vmul.f32 %v791, %v793
        %v825 = vmul.f32 %v792, %v793
        %v826 = vadd.f32 %v729, %v794
        %v827 = vadd.f32 %v730, %v795
        %v828 = vadd.f32 %v731, %v796
        %v829 = vadd.f32 %v732, %v797
        %v830 = vadd.f32 %v733, %v798
        %v831 = vadd.f32 %v734, %v799
        %v832 = vadd.f32 %v735, %v800
        %v833 = vadd.f32 %v736, %v801
        %v834 = vadd.f32 %v737, %v802
        %v835 = vadd.f32 %v738, %v803
        %v836 = vadd.f32 %v739, %v804
        %v837 = vadd.f32 %v740, %v805
        %v838 = vadd.f32 %v741, %v806
        %v839 = vadd.f32 %v742, %v807
        %v840 = vadd.f32 %v743, %v808
        %v841 = vadd.f32 %v744, %v809
        %v842 = vadd.f32 %v745, %v810
        %v843 = vadd.f32 %v746, %v811
        %v844 = vadd.f32 %v747, %v812
        %v845 = vadd.f32 %v748, %v813
        %v846 = vadd.f32 %v749, %v814
        %v847 = vadd.f32 %v750, %v815
        %v848 = vadd.f32 %v751, %v816
        %v849 = vadd.f32 %v752, %v817
        %v850 = vadd.f32 %v753, %v818
        %v851 = vadd.f32 %v754, %v819
        %v852 = vadd.f32 %v755, %v820
        %v853 = vadd.f32 %v756, %v821
        %v854 = vadd.f32 %v757, %v822
        %v855 = vadd.f32 %v758, %v823
        %v856 = vadd.f32 %v759, %v824
        %v857 = vadd.f32 %v760, %v825
        %v858 = vld [vmem:[#allocation2 + $0x7] sm:$0xff]
        %v859 = vld [vmem:[#allocation2 + $0xf] sm:$0xff]
        %v860 = vld [vmem:[#allocation2 + $0x17] sm:$0xff]
        %v861 = vld [vmem:[#allocation2 + $0x1f] sm:$0xff]
        %v862 = vld [vmem:[#allocation2 + $0x27] sm:$0xff]
        %v863 = vld [vmem:[#allocation2 + $0x2f] sm:$0xff]
        %v864 = vld [vmem:[#allocation2 + $0x37] sm:$0xff]
        %v865 = vld [vmem:[#allocation2 + $0x3f] sm:$0xff]
        %v866 = vld [vmem:[#allocation2 + $0x47] sm:$0xff]
        %v867 = vld [vmem:[#allocation2 + $0x4f] sm:$0xff]
        %v868 = vld [vmem:[#allocation2 + $0x57] sm:$0xff]
        %v869 = vld [vmem:[#allocation2 + $0x5f] sm:$0xff]
        %v870 = vld [vmem:[#allocation2 + $0x67] sm:$0xff]
        %v871 = vld [vmem:[#allocation2 + $0x6f] sm:$0xff]
        %v872 = vld [vmem:[#allocation2 + $0x77] sm:$0xff]
        %v873 = vld [vmem:[#allocation2 + $0x7f] sm:$0xff]
        %v874 = vld [vmem:[#allocation2 + $0x87] sm:$0xff]
        %v875 = vld [vmem:[#allocation2 + $0x8f] sm:$0xff]
        %v876 = vld [vmem:[#allocation2 + $0x97] sm:$0xff]
        %v877 = vld [vmem:[#allocation2 + $0x9f] sm:$0xff]
        %v878 = vld [vmem:[#allocation2 + $0xa7] sm:$0xff]
        %v879 = vld [vmem:[#allocation2 + $0xaf] sm:$0xff]
        %v880 = vld [vmem:[#allocation2 + $0xb7] sm:$0xff]
        %v881 = vld [vmem:[#allocation2 + $0xbf] sm:$0xff]
        %v882 = vld [vmem:[#allocation2 + $0xc7] sm:$0xff]
        %v883 = vld [vmem:[#allocation2 + $0xcf] sm:$0xff]
        %v884 = vld [vmem:[#allocation2 + $0xd7] sm:$0xff]
        %v885 = vld [vmem:[#allocation2 + $0xdf] sm:$0xff]
        %v886 = vld [vmem:[#allocation2 + $0xe7] sm:$0xff]
        %v887 = vld [vmem:[#allocation2 + $0xef] sm:$0xff]
        %v888 = vld [vmem:[#allocation2 + $0xf7] sm:$0xff]
        %v889 = vld [vmem:[#allocation2 + $0xff] sm:$0xff]
        %v890 = vperm.slane %v695, 2
        %v891 = vmul.f32 %v858, %v890
        %v892 = vmul.f32 %v859, %v890
        %v893 = vmul.f32 %v860, %v890
        %v894 = vmul.f32 %v861, %v890
        %v895 = vmul.f32 %v862, %v890
        %v896 = vmul.f32 %v863, %v890
        %v897 = vmul.f32 %v864, %v890
        %v898 = vmul.f32 %v865, %v890
        %v899 = vmul.f32 %v866, %v890
        %v900 = vmul.f32 %v867, %v890
        %v901 = vmul.f32 %v868, %v890
        %v902 = vmul.f32 %v869, %v890
        %v903 = vmul.f32 %v870, %v890
        %v904 = vmul.f32 %v871, %v890
        %v905 = vmul.f32 %v872, %v890
        %v906 = vmul.f32 %v873, %v890
        %v907 = vmul.f32 %v874, %v890
        %v908 = vmul.f32 %v875, %v890
        %v909 = vmul.f32 %v876, %v890
        %v910 = vmul.f32 %v877, %v890
        %v911 = vmul.f32 %v878, %v890
        %v912 = vmul.f32 %v879, %v890
        %v913 = vmul.f32 %v880, %v890
        %v914 = vmul.f32 %v881, %v890
        %v915 = vmul.f32 %v882, %v890
        %v916 = vmul.f32 %v883, %v890
        %v917 = vmul.f32 %v884, %v890
        %v918 = vmul.f32 %v885, %v890
        %v919 = vmul.f32 %v886, %v890
        %v920 = vmul.f32 %v887, %v890
        %v921 = vmul.f32 %v888, %v890
        %v922 = vmul.f32 %v889, %v890
        %v923 = vadd.f32 %v826, %v891
        %v924 = vadd.f32 %v827, %v892
        %v925 = vadd.f32 %v828, %v893
        %v926 = vadd.f32 %v829, %v894
        %v927 = vadd.f32 %v830, %v895
        %v928 = vadd.f32 %v831, %v896
        %v929 = vadd.f32 %v832, %v897
        %v930 = vadd.f32 %v833, %v898
        %v931 = vadd.f32 %v834, %v899
        %v932 = vadd.f32 %v835, %v900
        %v933 = vadd.f32 %v836, %v901
        %v934 = vadd.f32 %v837, %v902
        %v935 = vadd.f32 %v838, %v903
        %v936 = vadd.f32 %v839, %v904
        %v937 = vadd.f32 %v840, %v905
        %v938 = vadd.f32 %v841, %v906
        %v939 = vadd.f32 %v842, %v907
        %v940 = vadd.f32 %v843, %v908
        %v941 = vadd.f32 %v844, %v909
        %v942 = vadd.f32 %v845, %v910
        %v943 = vadd.f32 %v846, %v911
        %v944 = vadd.f32 %v847, %v912
        %v945 = vadd.f32 %v848, %v913
        %v946 = vadd.f32 %v849, %v914
        %v947 = vadd.f32 %v850, %v915
        %v948 = vadd.f32 %v851, %v916
        %v949 = vadd.f32 %v852, %v917
        %v950 = vadd.f32 %v853, %v918
        %v951 = vadd.f32 %v854, %v919
        %v952 = vadd.f32 %v855, %v920
        %v953 = vadd.f32 %v856, %v921
        %v954 = vadd.f32 %v857, %v922
        %v955 = vld [vmem:[#allocation2 + $0x8] sm:$0xff]
        %v956 = vld [vmem:[#allocation2 + $0x10] sm:$0xff]
        %v957 = vld [vmem:[#allocation2 + $0x18] sm:$0xff]
        %v958 = vld [vmem:[#allocation2 + $0x20] sm:$0xff]
        %v959 = vld [vmem:[#allocation2 + $0x28] sm:$0xff]
        %v960 = vld [vmem:[#allocation2 + $0x30] sm:$0xff]
        %v961 = vld [vmem:[#allocation2 + $0x38] sm:$0xff]
        %v962 = vld [vmem:[#allocation2 + $0x40] sm:$0xff]
        %v963 = vld [vmem:[#allocation2 + $0x48] sm:$0xff]
        %v964 = vld [vmem:[#allocation2 + $0x50] sm:$0xff]
        %v965 = vld [vmem:[#allocation2 + $0x58] sm:$0xff]
        %v966 = vld [vmem:[#allocation2 + $0x60] sm:$0xff]
        %v967 = vld [vmem:[#allocation2 + $0x68] sm:$0xff]
        %v968 = vld [vmem:[#allocation2 + $0x70] sm:$0xff]
        %v969 = vld [vmem:[#allocation2 + $0x78] sm:$0xff]
        %v970 = vld [vmem:[#allocation2 + $0x80] sm:$0xff]
        %v971 = vld [vmem:[#allocation2 + $0x88] sm:$0xff]
        %v972 = vld [vmem:[#allocation2 + $0x90] sm:$0xff]
        %v973 = vld [vmem:[#allocation2 + $0x98] sm:$0xff]
        %v974 = vld [vmem:[#allocation2 + $0xa0] sm:$0xff]
        %v975 = vld [vmem:[#allocation2 + $0xa8] sm:$0xff]
        %v976 = vld [vmem:[#allocation2 + $0xb0] sm:$0xff]
        %v977 = vld [vmem:[#allocation2 + $0xb8] sm:$0xff]
        %v978 = vld [vmem:[#allocation2 + $0xc0] sm:$0xff]
        %v979 = vld [vmem:[#allocation2 + $0xc8] sm:$0xff]
        %v980 = vld [vmem:[#allocation2 + $0xd0] sm:$0xff]
        %v981 = vld [vmem:[#allocation2 + $0xd8] sm:$0xff]
        %v982 = vld [vmem:[#allocation2 + $0xe0] sm:$0xff]
        %v983 = vld [vmem:[#allocation2 + $0xe8] sm:$0xff]
        %v984 = vld [vmem:[#allocation2 + $0xf0] sm:$0xff]
        %v985 = vld [vmem:[#allocation2 + $0xf8] sm:$0xff]
        %v986 = vld [vmem:[#allocation2 + $0x100] sm:$0xff]
        %v987 = vperm.slane %v695, 3
        %v988 = vmul.f32 %v955, %v987
        %v989 = vmul.f32 %v956, %v987
        %v990 = vmul.f32 %v957, %v987
        %v991 = vmul.f32 %v958, %v987
        %v992 = vmul.f32 %v959, %v987
        %v993 = vmul.f32 %v960, %v987
        %v994 = vmul.f32 %v961, %v987
        %v995 = vmul.f32 %v962, %v987
        %v996 = vmul.f32 %v963, %v987
        %v997 = vmul.f32 %v964, %v987
        %v998 = vmul.f32 %v965, %v987
        %v999 = vmul.f32 %v966, %v987
        %v1000 = vmul.f32 %v967, %v987
        %v1001 = vmul.f32 %v968, %v987
        %v1002 = vmul.f32 %v969, %v987
        %v1003 = vmul.f32 %v970, %v987
        %v1004 = vmul.f32 %v971, %v987
        %v1005 = vmul.f32 %v972, %v987
        %v1006 = vmul.f32 %v973, %v987
        %v1007 = vmul.f32 %v974, %v987
        %v1008 = vmul.f32 %v975, %v987
        %v1009 = vmul.f32 %v976, %v987
        %v1010 = vmul.f32 %v977, %v987
        %v1011 = vmul.f32 %v978, %v987
        %v1012 = vmul.f32 %v979, %v987
        %v1013 = vmul.f32 %v980, %v987
        %v1014 = vmul.f32 %v981, %v987
        %v1015 = vmul.f32 %v982, %v987
        %v1016 = vmul.f32 %v983, %v987
        %v1017 = vmul.f32 %v984, %v987
        %v1018 = vmul.f32 %v985, %v987
        %v1019 = vmul.f32 %v986, %v987
        %v1020 = vadd.f32 %v923, %v988
        %v1021 = vadd.f32 %v924, %v989
        %v1022 = vadd.f32 %v925, %v990
        %v1023 = vadd.f32 %v926, %v991
        %v1024 = vadd.f32 %v927, %v992
        %v1025 = vadd.f32 %v928, %v993
        %v1026 = vadd.f32 %v929, %v994
        %v1027 = vadd.f32 %v930, %v995
        %v1028 = vadd.f32 %v931, %v996
        %v1029 = vadd.f32 %v932, %v997
        %v1030 = vadd.f32 %v933, %v998
        %v1031 = vadd.f32 %v934, %v999
        %v1032 = vadd.f32 %v935, %v1000
        %v1033 = vadd.f32 %v936, %v1001
        %v1034 = vadd.f32 %v937, %v1002
        %v1035 = vadd.f32 %v938, %v1003
        %v1036 = vadd.f32 %v939, %v1004
        %v1037 = vadd.f32 %v940, %v1005
        %v1038 = vadd.f32 %v941, %v1006
        %v1039 = vadd.f32 %v942, %v1007
        %v1040 = vadd.f32 %v943, %v1008
        %v1041 = vadd.f32 %v944, %v1009
        %v1042 = vadd.f32 %v945, %v1010
        %v1043 = vadd.f32 %v946, %v1011
        %v1044 = vadd.f32 %v947, %v1012
        %v1045 = vadd.f32 %v948, %v1013
        %v1046 = vadd.f32 %v949, %v1014
        %v1047 = vadd.f32 %v950, %v1015
        %v1048 = vadd.f32 %v951, %v1016
        %v1049 = vadd.f32 %v952, %v1017
        %v1050 = vadd.f32 %v953, %v1018
        %v1051 = vadd.f32 %v954, %v1019
        %v1052 = vld [vmem:[#allocation2 + $0x9] sm:$0xff]
        %v1053 = vld [vmem:[#allocation2 + $0x11] sm:$0xff]
        %v1054 = vld [vmem:[#allocation2 + $0x19] sm:$0xff]
        %v1055 = vld [vmem:[#allocation2 + $0x21] sm:$0xff]
        %v1056 = vld [vmem:[#allocation2 + $0x29] sm:$0xff]
        %v1057 = vld [vmem:[#allocation2 + $0x31] sm:$0xff]
        %v1058 = vld [vmem:[#allocation2 + $0x39] sm:$0xff]
        %v1059 = vld [vmem:[#allocation2 + $0x41] sm:$0xff]
        %v1060 = vld [vmem:[#allocation2 + $0x49] sm:$0xff]
        %v1061 = vld [vmem:[#allocation2 + $0x51] sm:$0xff]
        %v1062 = vld [vmem:[#allocation2 + $0x59] sm:$0xff]
        %v1063 = vld [vmem:[#allocation2 + $0x61] sm:$0xff]
        %v1064 = vld [vmem:[#allocation2 + $0x69] sm:$0xff]
        %v1065 = vld [vmem:[#allocation2 + $0x71] sm:$0xff]
        %v1066 = vld [vmem:[#allocation2 + $0x79] sm:$0xff]
        %v1067 = vld [vmem:[#allocation2 + $0x81] sm:$0xff]
        %v1068 = vld [vmem:[#allocation2 + $0x89] sm:$0xff]
        %v1069 = vld [vmem:[#allocation2 + $0x91] sm:$0xff]
        %v1070 = vld [vmem:[#allocation2 + $0x99] sm:$0xff]
        %v1071 = vld [vmem:[#allocation2 + $0xa1] sm:$0xff]
        %v1072 = vld [vmem:[#allocation2 + $0xa9] sm:$0xff]
        %v1073 = vld [vmem:[#allocation2 + $0xb1] sm:$0xff]
        %v1074 = vld [vmem:[#allocation2 + $0xb9] sm:$0xff]
        %v1075 = vld [vmem:[#allocation2 + $0xc1] sm:$0xff]
        %v1076 = vld [vmem:[#allocation2 + $0xc9] sm:$0xff]
        %v1077 = vld [vmem:[#allocation2 + $0xd1] sm:$0xff]
        %v1078 = vld [vmem:[#allocation2 + $0xd9] sm:$0xff]
        %v1079 = vld [vmem:[#allocation2 + $0xe1] sm:$0xff]
        %v1080 = vld [vmem:[#allocation2 + $0xe9] sm:$0xff]
        %v1081 = vld [vmem:[#allocation2 + $0xf1] sm:$0xff]
        %v1082 = vld [vmem:[#allocation2 + $0xf9] sm:$0xff]
        %v1083 = vld [vmem:[#allocation2 + $0x101] sm:$0xff]
        %v1084 = vperm.slane %v695, 4
        %v1085 = vmul.f32 %v1052, %v1084
        %v1086 = vmul.f32 %v1053, %v1084
        %v1087 = vmul.f32 %v1054, %v1084
        %v1088 = vmul.f32 %v1055, %v1084
        %v1089 = vmul.f32 %v1056, %v1084
        %v1090 = vmul.f32 %v1057, %v1084
        %v1091 = vmul.f32 %v1058, %v1084
        %v1092 = vmul.f32 %v1059, %v1084
        %v1093 = vmul.f32 %v1060, %v1084
        %v1094 = vmul.f32 %v1061, %v1084
        %v1095 = vmul.f32 %v1062, %v1084
        %v1096 = vmul.f32 %v1063, %v1084
        %v1097 = vmul.f32 %v1064, %v1084
        %v1098 = vmul.f32 %v1065, %v1084
        %v1099 = vmul.f32 %v1066, %v1084
        %v1100 = vmul.f32 %v1067, %v1084
        %v1101 = vmul.f32 %v1068, %v1084
        %v1102 = vmul.f32 %v1069, %v1084
        %v1103 = vmul.f32 %v1070, %v1084
        %v1104 = vmul.f32 %v1071, %v1084
        %v1105 = vmul.f32 %v1072, %v1084
        %v1106 = vmul.f32 %v1073, %v1084
        %v1107 = vmul.f32 %v1074, %v1084
        %v1108 = vmul.f32 %v1075, %v1084
        %v1109 = vmul.f32 %v1076, %v1084
        %v1110 = vmul.f32 %v1077, %v1084
        %v1111 = vmul.f32 %v1078, %v1084
        %v1112 = vmul.f32 %v1079, %v1084
        %v1113 = vmul.f32 %v1080, %v1084
        %v1114 = vmul.f32 %v1081, %v1084
        %v1115 = vmul.f32 %v1082, %v1084
        %v1116 = vmul.f32 %v1083, %v1084
        %v1117 = vadd.f32 %v1020, %v1085
        %v1118 = vadd.f32 %v1021, %v1086
        %v1119 = vadd.f32 %v1022, %v1087
        %v1120 = vadd.f32 %v1023, %v1088
        %v1121 = vadd.f32 %v1024, %v1089
        %v1122 = vadd.f32 %v1025, %v1090
        %v1123 = vadd.f32 %v1026, %v1091
        %v1124 = vadd.f32 %v1027, %v1092
        %v1125 = vadd.f32 %v1028, %v1093
        %v1126 = vadd.f32 %v1029, %v1094
        %v1127 = vadd.f32 %v1030, %v1095
        %v1128 = vadd.f32 %v1031, %v1096
        %v1129 = vadd.f32 %v1032, %v1097
        %v1130 = vadd.f32 %v1033, %v1098
        %v1131 = vadd.f32 %v1034, %v1099
        %v1132 = vadd.f32 %v1035, %v1100
        %v1133 = vadd.f32 %v1036, %v1101
        %v1134 = vadd.f32 %v1037, %v1102
        %v1135 = vadd.f32 %v1038, %v1103
        %v1136 = vadd.f32 %v1039, %v1104
        %v1137 = vadd.f32 %v1040, %v1105
        %v1138 = vadd.f32 %v1041, %v1106
        %v1139 = vadd.f32 %v1042, %v1107
        %v1140 = vadd.f32 %v1043, %v1108
        %v1141 = vadd.f32 %v1044, %v1109
        %v1142 = vadd.f32 %v1045, %v1110
        %v1143 = vadd.f32 %v1046, %v1111
        %v1144 = vadd.f32 %v1047, %v1112
        %v1145 = vadd.f32 %v1048, %v1113
        %v1146 = vadd.f32 %v1049, %v1114
        %v1147 = vadd.f32 %v1050, %v1115
        %v1148 = vadd.f32 %v1051, %v1116
        %v1149 = vld [vmem:[#allocation2 + $0xa] sm:$0xff]
        %v1150 = vld [vmem:[#allocation2 + $0x12] sm:$0xff]
        %v1151 = vld [vmem:[#allocation2 + $0x1a] sm:$0xff]
        %v1152 = vld [vmem:[#allocation2 + $0x22] sm:$0xff]
        %v1153 = vld [vmem:[#allocation2 + $0x2a] sm:$0xff]
        %v1154 = vld [vmem:[#allocation2 + $0x32] sm:$0xff]
        %v1155 = vld [vmem:[#allocation2 + $0x3a] sm:$0xff]
        %v1156 = vld [vmem:[#allocation2 + $0x42] sm:$0xff]
        %v1157 = vld [vmem:[#allocation2 + $0x4a] sm:$0xff]
        %v1158 = vld [vmem:[#allocation2 + $0x52] sm:$0xff]
        %v1159 = vld [vmem:[#allocation2 + $0x5a] sm:$0xff]
        %v1160 = vld [vmem:[#allocation2 + $0x62] sm:$0xff]
        %v1161 = vld [vmem:[#allocation2 + $0x6a] sm:$0xff]
        %v1162 = vld [vmem:[#allocation2 + $0x72] sm:$0xff]
        %v1163 = vld [vmem:[#allocation2 + $0x7a] sm:$0xff]
        %v1164 = vld [vmem:[#allocation2 + $0x82] sm:$0xff]
        %v1165 = vld [vmem:[#allocation2 + $0x8a] sm:$0xff]
        %v1166 = vld [vmem:[#allocation2 + $0x92] sm:$0xff]
        %v1167 = vld [vmem:[#allocation2 + $0x9a] sm:$0xff]
        %v1168 = vld [vmem:[#allocation2 + $0xa2] sm:$0xff]
        %v1169 = vld [vmem:[#allocation2 + $0xaa] sm:$0xff]
        %v1170 = vld [vmem:[#allocation2 + $0xb2] sm:$0xff]
        %v1171 = vld [vmem:[#allocation2 + $0xba] sm:$0xff]
        %v1172 = vld [vmem:[#allocation2 + $0xc2] sm:$0xff]
        %v1173 = vld [vmem:[#allocation2 + $0xca] sm:$0xff]
        %v1174 = vld [vmem:[#allocation2 + $0xd2] sm:$0xff]
        %v1175 = vld [vmem:[#allocation2 + $0xda] sm:$0xff]
        %v1176 = vld [vmem:[#allocation2 + $0xe2] sm:$0xff]
        %v1177 = vld [vmem:[#allocation2 + $0xea] sm:$0xff]
        %v1178 = vld [vmem:[#allocation2 + $0xf2] sm:$0xff]
        %v1179 = vld [vmem:[#allocation2 + $0xfa] sm:$0xff]
        %v1180 = vld [vmem:[#allocation2 + $0x102] sm:$0xff]
        %v1181 = vperm.slane %v695, 5
        %v1182 = vmul.f32 %v1149, %v1181
        %v1183 = vmul.f32 %v1150, %v1181
        %v1184 = vmul.f32 %v1151, %v1181
        %v1185 = vmul.f32 %v1152, %v1181
        %v1186 = vmul.f32 %v1153, %v1181
        %v1187 = vmul.f32 %v1154, %v1181
        %v1188 = vmul.f32 %v1155, %v1181
        %v1189 = vmul.f32 %v1156, %v1181
        %v1190 = vmul.f32 %v1157, %v1181
        %v1191 = vmul.f32 %v1158, %v1181
        %v1192 = vmul.f32 %v1159, %v1181
        %v1193 = vmul.f32 %v1160, %v1181
        %v1194 = vmul.f32 %v1161, %v1181
        %v1195 = vmul.f32 %v1162, %v1181
        %v1196 = vmul.f32 %v1163, %v1181
        %v1197 = vmul.f32 %v1164, %v1181
        %v1198 = vmul.f32 %v1165, %v1181
        %v1199 = vmul.f32 %v1166, %v1181
        %v1200 = vmul.f32 %v1167, %v1181
        %v1201 = vmul.f32 %v1168, %v1181
        %v1202 = vmul.f32 %v1169, %v1181
        %v1203 = vmul.f32 %v1170, %v1181
        %v1204 = vmul.f32 %v1171, %v1181
        %v1205 = vmul.f32 %v1172, %v1181
        %v1206 = vmul.f32 %v1173, %v1181
        %v1207 = vmul.f32 %v1174, %v1181
        %v1208 = vmul.f32 %v1175, %v1181
        %v1209 = vmul.f32 %v1176, %v1181
        %v1210 = vmul.f32 %v1177, %v1181
        %v1211 = vmul.f32 %v1178, %v1181
        %v1212 = vmul.f32 %v1179, %v1181
        %v1213 = vmul.f32 %v1180, %v1181
        %v1214 = vadd.f32 %v1117, %v1182
        %v1215 = vadd.f32 %v1118, %v1183
        %v1216 = vadd.f32 %v1119, %v1184
        %v1217 = vadd.f32 %v1120, %v1185
        %v1218 = vadd.f32 %v1121, %v1186
        %v1219 = vadd.f32 %v1122, %v1187
        %v1220 = vadd.f32 %v1123, %v1188
        %v1221 = vadd.f32 %v1124, %v1189
        %v1222 = vadd.f32 %v1125, %v1190
        %v1223 = vadd.f32 %v1126, %v1191
        %v1224 = vadd.f32 %v1127, %v1192
        %v1225 = vadd.f32 %v1128, %v1193
        %v1226 = vadd.f32 %v1129, %v1194
        %v1227 = vadd.f32 %v1130, %v1195
        %v1228 = vadd.f32 %v1131, %v1196
        %v1229 = vadd.f32 %v1132, %v1197
        %v1230 = vadd.f32 %v1133, %v1198
        %v1231 = vadd.f32 %v1134, %v1199
        %v1232 = vadd.f32 %v1135, %v1200
        %v1233 = vadd.f32 %v1136, %v1201
        %v1234 = vadd.f32 %v1137, %v1202
        %v1235 = vadd.f32 %v1138, %v1203
        %v1236 = vadd.f32 %v1139, %v1204
        %v1237 = vadd.f32 %v1140, %v1205
        %v1238 = vadd.f32 %v1141, %v1206
        %v1239 = vadd.f32 %v1142, %v1207
        %v1240 = vadd.f32 %v1143, %v1208
        %v1241 = vadd.f32 %v1144, %v1209
        %v1242 = vadd.f32 %v1145, %v1210
        %v1243 = vadd.f32 %v1146, %v1211
        %v1244 = vadd.f32 %v1147, %v1212
        %v1245 = vadd.f32 %v1148, %v1213
        %v1246 = vld [vmem:[#allocation2 + $0xb] sm:$0xff]
        %v1247 = vld [vmem:[#allocation2 + $0x13] sm:$0xff]
        %v1248 = vld [vmem:[#allocation2 + $0x1b] sm:$0xff]
        %v1249 = vld [vmem:[#allocation2 + $0x23] sm:$0xff]
        %v1250 = vld [vmem:[#allocation2 + $0x2b] sm:$0xff]
        %v1251 = vld [vmem:[#allocation2 + $0x33] sm:$0xff]
        %v1252 = vld [vmem:[#allocation2 + $0x3b] sm:$0xff]
        %v1253 = vld [vmem:[#allocation2 + $0x43] sm:$0xff]
        %v1254 = vld [vmem:[#allocation2 + $0x4b] sm:$0xff]
        %v1255 = vld [vmem:[#allocation2 + $0x53] sm:$0xff]
        %v1256 = vld [vmem:[#allocation2 + $0x5b] sm:$0xff]
        %v1257 = vld [vmem:[#allocation2 + $0x63] sm:$0xff]
        %v1258 = vld [vmem:[#allocation2 + $0x6b] sm:$0xff]
        %v1259 = vld [vmem:[#allocation2 + $0x73] sm:$0xff]
        %v1260 = vld [vmem:[#allocation2 + $0x7b] sm:$0xff]
        %v1261 = vld [vmem:[#allocation2 + $0x83] sm:$0xff]
        %v1262 = vld [vmem:[#allocation2 + $0x8b] sm:$0xff]
        %v1263 = vld [vmem:[#allocation2 + $0x93] sm:$0xff]
        %v1264 = vld [vmem:[#allocation2 + $0x9b] sm:$0xff]
        %v1265 = vld [vmem:[#allocation2 + $0xa3] sm:$0xff]
        %v1266 = vld [vmem:[#allocation2 + $0xab] sm:$0xff]
        %v1267 = vld [vmem:[#allocation2 + $0xb3] sm:$0xff]
        %v1268 = vld [vmem:[#allocation2 + $0xbb] sm:$0xff]
        %v1269 = vld [vmem:[#allocation2 + $0xc3] sm:$0xff]
        %v1270 = vld [vmem:[#allocation2 + $0xcb] sm:$0xff]
        %v1271 = vld [vmem:[#allocation2 + $0xd3] sm:$0xff]
        %v1272 = vld [vmem:[#allocation2 + $0xdb] sm:$0xff]
        %v1273 = vld [vmem:[#allocation2 + $0xe3] sm:$0xff]
        %v1274 = vld [vmem:[#allocation2 + $0xeb] sm:$0xff]
        %v1275 = vld [vmem:[#allocation2 + $0xf3] sm:$0xff]
        %v1276 = vld [vmem:[#allocation2 + $0xfb] sm:$0xff]
        %v1277 = vld [vmem:[#allocation2 + $0x103] sm:$0xff]
        %v1278 = vperm.slane %v695, 6
        %v1279 = vmul.f32 %v1246, %v1278
        %v1280 = vmul.f32 %v1247, %v1278
        %v1281 = vmul.f32 %v1248, %v1278
        %v1282 = vmul.f32 %v1249, %v1278
        %v1283 = vmul.f32 %v1250, %v1278
        %v1284 = vmul.f32 %v1251, %v1278
        %v1285 = vmul.f32 %v1252, %v1278
        %v1286 = vmul.f32 %v1253, %v1278
        %v1287 = vmul.f32 %v1254, %v1278
        %v1288 = vmul.f32 %v1255, %v1278
        %v1289 = vmul.f32 %v1256, %v1278
        %v1290 = vmul.f32 %v1257, %v1278
        %v1291 = vmul.f32 %v1258, %v1278
        %v1292 = vmul.f32 %v1259, %v1278
        %v1293 = vmul.f32 %v1260, %v1278
        %v1294 = vmul.f32 %v1261, %v1278
        %v1295 = vmul.f32 %v1262, %v1278
        %v1296 = vmul.f32 %v1263, %v1278
        %v1297 = vmul.f32 %v1264, %v1278
        %v1298 = vmul.f32 %v1265, %v1278
        %v1299 = vmul.f32 %v1266, %v1278
        %v1300 = vmul.f32 %v1267, %v1278
        %v1301 = vmul.f32 %v1268, %v1278
        %v1302 = vmul.f32 %v1269, %v1278
        %v1303 = vmul.f32 %v1270, %v1278
        %v1304 = vmul.f32 %v1271, %v1278
        %v1305 = vmul.f32 %v1272, %v1278
        %v1306 = vmul.f32 %v1273, %v1278
        %v1307 = vmul.f32 %v1274, %v1278
        %v1308 = vmul.f32 %v1275, %v1278
        %v1309 = vmul.f32 %v1276, %v1278
        %v1310 = vmul.f32 %v1277, %v1278
        %v1311 = vadd.f32 %v1214, %v1279
        %v1312 = vadd.f32 %v1215, %v1280
        %v1313 = vadd.f32 %v1216, %v1281
        %v1314 = vadd.f32 %v1217, %v1282
        %v1315 = vadd.f32 %v1218, %v1283
        %v1316 = vadd.f32 %v1219, %v1284
        %v1317 = vadd.f32 %v1220, %v1285
        %v1318 = vadd.f32 %v1221, %v1286
        %v1319 = vadd.f32 %v1222, %v1287
        %v1320 = vadd.f32 %v1223, %v1288
        %v1321 = vadd.f32 %v1224, %v1289
        %v1322 = vadd.f32 %v1225, %v1290
        %v1323 = vadd.f32 %v1226, %v1291
        %v1324 = vadd.f32 %v1227, %v1292
        %v1325 = vadd.f32 %v1228, %v1293
        %v1326 = vadd.f32 %v1229, %v1294
        %v1327 = vadd.f32 %v1230, %v1295
        %v1328 = vadd.f32 %v1231, %v1296
        %v1329 = vadd.f32 %v1232, %v1297
        %v1330 = vadd.f32 %v1233, %v1298
        %v1331 = vadd.f32 %v1234, %v1299
        %v1332 = vadd.f32 %v1235, %v1300
        %v1333 = vadd.f32 %v1236, %v1301
        %v1334 = vadd.f32 %v1237, %v1302
        %v1335 = vadd.f32 %v1238, %v1303
        %v1336 = vadd.f32 %v1239, %v1304
        %v1337 = vadd.f32 %v1240, %v1305
        %v1338 = vadd.f32 %v1241, %v1306
        %v1339 = vadd.f32 %v1242, %v1307
        %v1340 = vadd.f32 %v1243, %v1308
        %v1341 = vadd.f32 %v1244, %v1309
        %v1342 = vadd.f32 %v1245, %v1310
        %v1343 = vld [vmem:[%s4] sm:$0x1]
        %v1345 = vperm.slane %v1343, 0
        %v1347 = vadd.f32 %v1311, %v1345
        %v1348 = vadd.f32 %v1312, %v1345
        %v1349 = vadd.f32 %v1313, %v1345
        %v1350 = vadd.f32 %v1314, %v1345
        %v1351 = vadd.f32 %v1315, %v1345
        %v1352 = vadd.f32 %v1316, %v1345
        %v1353 = vadd.f32 %v1317, %v1345
        %v1354 = vadd.f32 %v1318, %v1345
        %v1355 = vadd.f32 %v1319, %v1345
        %v1356 = vadd.f32 %v1320, %v1345
        %v1357 = vadd.f32 %v1321, %v1345
        %v1358 = vadd.f32 %v1322, %v1345
        %v1359 = vadd.f32 %v1323, %v1345
        %v1360 = vadd.f32 %v1324, %v1345
        %v1361 = vadd.f32 %v1325, %v1345
        %v1362 = vadd.f32 %v1326, %v1345
        %v1363 = vadd.f32 %v1327, %v1345
        %v1364 = vadd.f32 %v1328, %v1345
        %v1365 = vadd.f32 %v1329, %v1345
        %v1366 = vadd.f32 %v1330, %v1345
        %v1367 = vadd.f32 %v1331, %v1345
        %v1368 = vadd.f32 %v1332, %v1345
        %v1369 = vadd.f32 %v1333, %v1345
        %v1370 = vadd.f32 %v1334, %v1345
        %v1371 = vadd.f32 %v1335, %v1345
        %v1372 = vadd.f32 %v1336, %v1345
        %v1373 = vadd.f32 %v1337, %v1345
        %v1374 = vadd.f32 %v1338, %v1345
        %v1375 = vadd.f32 %v1339, %v1345
        %v1376 = vadd.f32 %v1340, %v1345
        %v1377 = vadd.f32 %v1341, %v1345
        %v1378 = vadd.f32 %v1342, %v1345
        %1379 = vadd.xlane.f32.xlu0 %v1347
        %v1380 = vpop.xlane.xlu0 %1379
        %1381 = vadd.xlane.f32.xlu0 %v1348
        %v1382 = vpop.xlane.xlu0 %1381
        %1383 = vadd.xlane.f32.xlu0 %v1349
        %v1384 = vpop.xlane.xlu0 %1383
        %1385 = vadd.xlane.f32.xlu0 %v1350
        %v1386 = vpop.xlane.xlu0 %1385
        %1387 = vadd.xlane.f32.xlu0 %v1351
        %v1388 = vpop.xlane.xlu0 %1387
        %1389 = vadd.xlane.f32.xlu0 %v1352
        %v1390 = vpop.xlane.xlu0 %1389
        %1391 = vadd.xlane.f32.xlu0 %v1353
        %v1392 = vpop.xlane.xlu0 %1391
        %1393 = vadd.xlane.f32.xlu0 %v1354
        %v1394 = vpop.xlane.xlu0 %1393
        %1395 = vadd.xlane.f32.xlu0 %v1355
        %v1396 = vpop.xlane.xlu0 %1395
        %1397 = vadd.xlane.f32.xlu0 %v1356
        %v1398 = vpop.xlane.xlu0 %1397
        %1399 = vadd.xlane.f32.xlu0 %v1357
        %v1400 = vpop.xlane.xlu0 %1399
        %1401 = vadd.xlane.f32.xlu0 %v1358
        %v1402 = vpop.xlane.xlu0 %1401
        %1403 = vadd.xlane.f32.xlu0 %v1359
        %v1404 = vpop.xlane.xlu0 %1403
        %1405 = vadd.xlane.f32.xlu0 %v1360
        %v1406 = vpop.xlane.xlu0 %1405
        %1407 = vadd.xlane.f32.xlu0 %v1361
        %v1408 = vpop.xlane.xlu0 %1407
        %1409 = vadd.xlane.f32.xlu0 %v1362
        %v1410 = vpop.xlane.xlu0 %1409
        %1411 = vadd.xlane.f32.xlu0 %v1363
        %v1412 = vpop.xlane.xlu0 %1411
        %1413 = vadd.xlane.f32.xlu0 %v1364
        %v1414 = vpop.xlane.xlu0 %1413
        %1415 = vadd.xlane.f32.xlu0 %v1365
        %v1416 = vpop.xlane.xlu0 %1415
        %1417 = vadd.xlane.f32.xlu0 %v1366
        %v1418 = vpop.xlane.xlu0 %1417
        %1419 = vadd.xlane.f32.xlu0 %v1367
        %v1420 = vpop.xlane.xlu0 %1419
        %1421 = vadd.xlane.f32.xlu0 %v1368
        %v1422 = vpop.xlane.xlu0 %1421
        %1423 = vadd.xlane.f32.xlu0 %v1369
        %v1424 = vpop.xlane.xlu0 %1423
        %1425 = vadd.xlane.f32.xlu0 %v1370
        %v1426 = vpop.xlane.xlu0 %1425
        %1427 = vadd.xlane.f32.xlu0 %v1371
        %v1428 = vpop.xlane.xlu0 %1427
        %1429 = vadd.xlane.f32.xlu0 %v1372
        %v1430 = vpop.xlane.xlu0 %1429
        %1431 = vadd.xlane.f32.xlu0 %v1373
        %v1432 = vpop.xlane.xlu0 %1431
        %1433 = vadd.xlane.f32.xlu0 %v1374
        %v1434 = vpop.xlane.xlu0 %1433
        %1435 = vadd.xlane.f32.xlu0 %v1375
        %v1436 = vpop.xlane.xlu0 %1435
        %1437 = vadd.xlane.f32.xlu0 %v1376
        %v1438 = vpop.xlane.xlu0 %1437
        %1439 = vadd.xlane.f32.xlu0 %v1377
        %v1440 = vpop.xlane.xlu0 %1439
        %1441 = vadd.xlane.f32.xlu0 %v1378
        %v1442 = vpop.xlane.xlu0 %1441
        %v1443 = vrcp.pop 128.0
        %v1444 = vmul.f32 128.0, %v1443
        %v1445 = vsub.f32 1.0, %v1444
        %v1446 = vmul.f32 %v1443, %v1445
        %v1447 = vadd.f32 %v1443, %v1446
        %vm1448 = vweird.f32 %v1443
        %v1449 = vsel %vm1448, %v1443, %v1447
        %v1450 = vmul.f32 %v1380, %v1449
        %v1451 = vmul.f32 %v1382, %v1449
        %v1452 = vmul.f32 %v1384, %v1449
        %v1453 = vmul.f32 %v1386, %v1449
        %v1454 = vmul.f32 %v1388, %v1449
        %v1455 = vmul.f32 %v1390, %v1449
        %v1456 = vmul.f32 %v1392, %v1449
        %v1457 = vmul.f32 %v1394, %v1449
        %v1458 = vmul.f32 %v1396, %v1449
        %v1459 = vmul.f32 %v1398, %v1449
        %v1460 = vmul.f32 %v1400, %v1449
        %v1461 = vmul.f32 %v1402, %v1449
        %v1462 = vmul.f32 %v1404, %v1449
        %v1463 = vmul.f32 %v1406, %v1449
        %v1464 = vmul.f32 %v1408, %v1449
        %v1465 = vmul.f32 %v1410, %v1449
        %v1466 = vmul.f32 %v1412, %v1449
        %v1467 = vmul.f32 %v1414, %v1449
        %v1468 = vmul.f32 %v1416, %v1449
        %v1469 = vmul.f32 %v1418, %v1449
        %v1470 = vmul.f32 %v1420, %v1449
        %v1471 = vmul.f32 %v1422, %v1449
        %v1472 = vmul.f32 %v1424, %v1449
        %v1473 = vmul.f32 %v1426, %v1449
        %v1474 = vmul.f32 %v1428, %v1449
        %v1475 = vmul.f32 %v1430, %v1449
        %v1476 = vmul.f32 %v1432, %v1449
        %v1477 = vmul.f32 %v1434, %v1449
        %v1478 = vmul.f32 %v1436, %v1449
        %v1479 = vmul.f32 %v1438, %v1449
        %v1480 = vmul.f32 %v1440, %v1449
        %v1481 = vmul.f32 %v1442, %v1449
        %v1482 = vsub.f32 %v1347, %v1450
        %v1483 = vsub.f32 %v1348, %v1451
        %v1484 = vsub.f32 %v1349, %v1452
        %v1485 = vsub.f32 %v1350, %v1453
        %v1486 = vsub.f32 %v1351, %v1454
        %v1487 = vsub.f32 %v1352, %v1455
        %v1488 = vsub.f32 %v1353, %v1456
        %v1489 = vsub.f32 %v1354, %v1457
        %v1490 = vsub.f32 %v1355, %v1458
        %v1491 = vsub.f32 %v1356, %v1459
        %v1492 = vsub.f32 %v1357, %v1460
        %v1493 = vsub.f32 %v1358, %v1461
        %v1494 = vsub.f32 %v1359, %v1462
        %v1495 = vsub.f32 %v1360, %v1463
        %v1496 = vsub.f32 %v1361, %v1464
        %v1497 = vsub.f32 %v1362, %v1465
        %v1498 = vsub.f32 %v1363, %v1466
        %v1499 = vsub.f32 %v1364, %v1467
        %v1500 = vsub.f32 %v1365, %v1468
        %v1501 = vsub.f32 %v1366, %v1469
        %v1502 = vsub.f32 %v1367, %v1470
        %v1503 = vsub.f32 %v1368, %v1471
        %v1504 = vsub.f32 %v1369, %v1472
        %v1505 = vsub.f32 %v1370, %v1473
        %v1506 = vsub.f32 %v1371, %v1474
        %v1507 = vsub.f32 %v1372, %v1475
        %v1508 = vsub.f32 %v1373, %v1476
        %v1509 = vsub.f32 %v1374, %v1477
        %v1510 = vsub.f32 %v1375, %v1478
        %v1511 = vsub.f32 %v1376, %v1479
        %v1512 = vsub.f32 %v1377, %v1480
        %v1513 = vsub.f32 %v1378, %v1481
        %v1514 = vmul.f32 %v1482, %v1482
        %v1515 = vmul.f32 %v1483, %v1483
        %v1516 = vmul.f32 %v1484, %v1484
        %v1517 = vmul.f32 %v1485, %v1485
        %v1518 = vmul.f32 %v1486, %v1486
        %v1519 = vmul.f32 %v1487, %v1487
        %v1520 = vmul.f32 %v1488, %v1488
        %v1521 = vmul.f32 %v1489, %v1489
        %v1522 = vmul.f32 %v1490, %v1490
        %v1523 = vmul.f32 %v1491, %v1491
        %v1524 = vmul.f32 %v1492, %v1492
        %v1525 = vmul.f32 %v1493, %v1493
        %v1526 = vmul.f32 %v1494, %v1494
        %v1527 = vmul.f32 %v1495, %v1495
        %v1528 = vmul.f32 %v1496, %v1496
        %v1529 = vmul.f32 %v1497, %v1497
        %v1530 = vmul.f32 %v1498, %v1498
        %v1531 = vmul.f32 %v1499, %v1499
        %v1532 = vmul.f32 %v1500, %v1500
        %v1533 = vmul.f32 %v1501, %v1501
        %v1534 = vmul.f32 %v1502, %v1502
        %v1535 = vmul.f32 %v1503, %v1503
        %v1536 = vmul.f32 %v1504, %v1504
        %v1537 = vmul.f32 %v1505, %v1505
        %v1538 = vmul.f32 %v1506, %v1506
        %v1539 = vmul.f32 %v1507, %v1507
        %v1540 = vmul.f32 %v1508, %v1508
        %v1541 = vmul.f32 %v1509, %v1509
        %v1542 = vmul.f32 %v1510, %v1510
        %v1543 = vmul.f32 %v1511, %v1511
        %v1544 = vmul.f32 %v1512, %v1512
        %v1545 = vmul.f32 %v1513, %v1513
        %1546 = vadd.xlane.f32.xlu0 %v1514
        %v1547 = vpop.xlane.xlu0 %1546
        %1548 = vadd.xlane.f32.xlu0 %v1515
        %v1549 = vpop.xlane.xlu0 %1548
        %1550 = vadd.xlane.f32.xlu0 %v1516
        %v1551 = vpop.xlane.xlu0 %1550
        %1552 = vadd.xlane.f32.xlu0 %v1517
        %v1553 = vpop.xlane.xlu0 %1552
        %1554 = vadd.xlane.f32.xlu0 %v1518
        %v1555 = vpop.xlane.xlu0 %1554
        %1556 = vadd.xlane.f32.xlu0 %v1519
        %v1557 = vpop.xlane.xlu0 %1556
        %1558 = vadd.xlane.f32.xlu0 %v1520
        %v1559 = vpop.xlane.xlu0 %1558
        %1560 = vadd.xlane.f32.xlu0 %v1521
        %v1561 = vpop.xlane.xlu0 %1560
        %1562 = vadd.xlane.f32.xlu0 %v1522
        %v1563 = vpop.xlane.xlu0 %1562
        %1564 = vadd.xlane.f32.xlu0 %v1523
        %v1565 = vpop.xlane.xlu0 %1564
        %1566 = vadd.xlane.f32.xlu0 %v1524
        %v1567 = vpop.xlane.xlu0 %1566
        %1568 = vadd.xlane.f32.xlu0 %v1525
        %v1569 = vpop.xlane.xlu0 %1568
        %1570 = vadd.xlane.f32.xlu0 %v1526
        %v1571 = vpop.xlane.xlu0 %1570
        %1572 = vadd.xlane.f32.xlu0 %v1527
        %v1573 = vpop.xlane.xlu0 %1572
        %1574 = vadd.xlane.f32.xlu0 %v1528
        %v1575 = vpop.xlane.xlu0 %1574
        %1576 = vadd.xlane.f32.xlu0 %v1529
        %v1577 = vpop.xlane.xlu0 %1576
        %1578 = vadd.xlane.f32.xlu0 %v1530
        %v1579 = vpop.xlane.xlu0 %1578
        %1580 = vadd.xlane.f32.xlu0 %v1531
        %v1581 = vpop.xlane.xlu0 %1580
        %1582 = vadd.xlane.f32.xlu0 %v1532
        %v1583 = vpop.xlane.xlu0 %1582
        %1584 = vadd.xlane.f32.xlu0 %v1533
        %v1585 = vpop.xlane.xlu0 %1584
        %1586 = vadd.xlane.f32.xlu0 %v1534
        %v1587 = vpop.xlane.xlu0 %1586
        %1588 = vadd.xlane.f32.xlu0 %v1535
        %v1589 = vpop.xlane.xlu0 %1588
        %1590 = vadd.xlane.f32.xlu0 %v1536
        %v1591 = vpop.xlane.xlu0 %1590
        %1592 = vadd.xlane.f32.xlu0 %v1537
        %v1593 = vpop.xlane.xlu0 %1592
        %1594 = vadd.xlane.f32.xlu0 %v1538
        %v1595 = vpop.xlane.xlu0 %1594
        %1596 = vadd.xlane.f32.xlu0 %v1539
        %v1597 = vpop.xlane.xlu0 %1596
        %1598 = vadd.xlane.f32.xlu0 %v1540
        %v1599 = vpop.xlane.xlu0 %1598
        %1600 = vadd.xlane.f32.xlu0 %v1541
        %v1601 = vpop.xlane.xlu0 %1600
        %1602 = vadd.xlane.f32.xlu0 %v1542
        %v1603 = vpop.xlane.xlu0 %1602
        %1604 = vadd.xlane.f32.xlu0 %v1543
        %v1605 = vpop.xlane.xlu0 %1604
        %1606 = vadd.xlane.f32.xlu0 %v1544
        %v1607 = vpop.xlane.xlu0 %1606
        %1608 = vadd.xlane.f32.xlu0 %v1545
        %v1609 = vpop.xlane.xlu0 %1608
        %v1610 = vmul.f32 %v1547, %v1449
        %v1611 = vmul.f32 %v1549, %v1449
        %v1612 = vmul.f32 %v1551, %v1449
        %v1613 = vmul.f32 %v1553, %v1449
        %v1614 = vmul.f32 %v1555, %v1449
        %v1615 = vmul.f32 %v1557, %v1449
        %v1616 = vmul.f32 %v1559, %v1449
        %v1617 = vmul.f32 %v1561, %v1449
        %v1618 = vmul.f32 %v1563, %v1449
        %v1619 = vmul.f32 %v1565, %v1449
        %v1620 = vmul.f32 %v1567, %v1449
        %v1621 = vmul.f32 %v1569, %v1449
        %v1622 = vmul.f32 %v1571, %v1449
        %v1623 = vmul.f32 %v1573, %v1449
        %v1624 = vmul.f32 %v1575, %v1449
        %v1625 = vmul.f32 %v1577, %v1449
        %v1626 = vmul.f32 %v1579, %v1449
        %v1627 = vmul.f32 %v1581, %v1449
        %v1628 = vmul.f32 %v1583, %v1449
        %v1629 = vmul.f32 %v1585, %v1449
        %v1630 = vmul.f32 %v1587, %v1449
        %v1631 = vmul.f32 %v1589, %v1449
        %v1632 = vmul.f32 %v1591, %v1449
        %v1633 = vmul.f32 %v1593, %v1449
        %v1634 = vmul.f32 %v1595, %v1449
        %v1635 = vmul.f32 %v1597, %v1449
        %v1636 = vmul.f32 %v1599, %v1449
        %v1637 = vmul.f32 %v1601, %v1449
        %v1638 = vmul.f32 %v1603, %v1449
        %v1639 = vmul.f32 %v1605, %v1449
        %v1640 = vmul.f32 %v1607, %v1449
        %v1641 = vmul.f32 %v1609, %v1449
        %v1642 = vadd.f32 %v1610, 1e-05
        %v1643 = vadd.f32 %v1611, 1e-05
        %v1644 = vadd.f32 %v1612, 1e-05
        %v1645 = vadd.f32 %v1613, 1e-05
        %v1646 = vadd.f32 %v1614, 1e-05
        %v1647 = vadd.f32 %v1615, 1e-05
        %v1648 = vadd.f32 %v1616, 1e-05
        %v1649 = vadd.f32 %v1617, 1e-05
        %v1650 = vadd.f32 %v1618, 1e-05
        %v1651 = vadd.f32 %v1619, 1e-05
        %v1652 = vadd.f32 %v1620, 1e-05
        %v1653 = vadd.f32 %v1621, 1e-05
        %v1654 = vadd.f32 %v1622, 1e-05
        %v1655 = vadd.f32 %v1623, 1e-05
        %v1656 = vadd.f32 %v1624, 1e-05
        %v1657 = vadd.f32 %v1625, 1e-05
        %v1658 = vadd.f32 %v1626, 1e-05
        %v1659 = vadd.f32 %v1627, 1e-05
        %v1660 = vadd.f32 %v1628, 1e-05
        %v1661 = vadd.f32 %v1629, 1e-05
        %v1662 = vadd.f32 %v1630, 1e-05
        %v1663 = vadd.f32 %v1631, 1e-05
        %v1664 = vadd.f32 %v1632, 1e-05
        %v1665 = vadd.f32 %v1633, 1e-05
        %v1666 = vadd.f32 %v1634, 1e-05
        %v1667 = vadd.f32 %v1635, 1e-05
        %v1668 = vadd.f32 %v1636, 1e-05
        %v1669 = vadd.f32 %v1637, 1e-05
        %v1670 = vadd.f32 %v1638, 1e-05
        %v1671 = vadd.f32 %v1639, 1e-05
        %v1672 = vadd.f32 %v1640, 1e-05
        %v1673 = vadd.f32 %v1641, 1e-05
        %v1674 = vrsqrt.pop %v1642
        %v1675 = vmul.f32 %v1674, %v1642
        %v1676 = vmul.f32 %v1675, %v1674
        %v1677 = vmul.f32 0.5, %v1676
        %v1678 = vsub.f32 1.5, %v1677
        %v1679 = vmul.f32 %v1674, %v1678
        %vm1680 = vweird.f32 %v1642
        %vm1681 = vweird.f32 %v1674
        %vm1682 = vmor %vm1680, %vm1681
        %v1683 = vsel %vm1682, %v1674, %v1679
        %v1684 = vrsqrt.pop %v1643
        %v1685 = vmul.f32 %v1684, %v1643
        %v1686 = vmul.f32 %v1685, %v1684
        %v1687 = vmul.f32 0.5, %v1686
        %v1688 = vsub.f32 1.5, %v1687
        %v1689 = vmul.f32 %v1684, %v1688
        %vm1690 = vweird.f32 %v1643
        %vm1691 = vweird.f32 %v1684
        %vm1692 = vmor %vm1690, %vm1691
        %v1693 = vsel %vm1692, %v1684, %v1689
        %v1694 = vrsqrt.pop %v1644
        %v1695 = vmul.f32 %v1694, %v1644
        %v1696 = vmul.f32 %v1695, %v1694
        %v1697 = vmul.f32 0.5, %v1696
        %v1698 = vsub.f32 1.5, %v1697
        %v1699 = vmul.f32 %v1694, %v1698
        %vm1700 = vweird.f32 %v1644
        %vm1701 = vweird.f32 %v1694
        %vm1702 = vmor %vm1700, %vm1701
        %v1703 = vsel %vm1702, %v1694, %v1699
        %v1704 = vrsqrt.pop %v1645
        %v1705 = vmul.f32 %v1704, %v1645
        %v1706 = vmul.f32 %v1705, %v1704
        %v1707 = vmul.f32 0.5, %v1706
        %v1708 = vsub.f32 1.5, %v1707
        %v1709 = vmul.f32 %v1704, %v1708
        %vm1710 = vweird.f32 %v1645
        %vm1711 = vweird.f32 %v1704
        %vm1712 = vmor %vm1710, %vm1711
        %v1713 = vsel %vm1712, %v1704, %v1709
        %v1714 = vrsqrt.pop %v1646
        %v1715 = vmul.f32 %v1714, %v1646
        %v1716 = vmul.f32 %v1715, %v1714
        %v1717 = vmul.f32 0.5, %v1716
        %v1718 = vsub.f32 1.5, %v1717
        %v1719 = vmul.f32 %v1714, %v1718
        %vm1720 = vweird.f32 %v1646
        %vm1721 = vweird.f32 %v1714
        %vm1722 = vmor %vm1720, %vm1721
        %v1723 = vsel %vm1722, %v1714, %v1719
        %v1724 = vrsqrt.pop %v1647
        %v1725 = vmul.f32 %v1724, %v1647
        %v1726 = vmul.f32 %v1725, %v1724
        %v1727 = vmul.f32 0.5, %v1726
        %v1728 = vsub.f32 1.5, %v1727
        %v1729 = vmul.f32 %v1724, %v1728
        %vm1730 = vweird.f32 %v1647
        %vm1731 = vweird.f32 %v1724
        %vm1732 = vmor %vm1730, %vm1731
        %v1733 = vsel %vm1732, %v1724, %v1729
        %v1734 = vrsqrt.pop %v1648
        %v1735 = vmul.f32 %v1734, %v1648
        %v1736 = vmul.f32 %v1735, %v1734
        %v1737 = vmul.f32 0.5, %v1736
        %v1738 = vsub.f32 1.5, %v1737
        %v1739 = vmul.f32 %v1734, %v1738
        %vm1740 = vweird.f32 %v1648
        %vm1741 = vweird.f32 %v1734
        %vm1742 = vmor %vm1740, %vm1741
        %v1743 = vsel %vm1742, %v1734, %v1739
        %v1744 = vrsqrt.pop %v1649
        %v1745 = vmul.f32 %v1744, %v1649
        %v1746 = vmul.f32 %v1745, %v1744
        %v1747 = vmul.f32 0.5, %v1746
        %v1748 = vsub.f32 1.5, %v1747
        %v1749 = vmul.f32 %v1744, %v1748
        %vm1750 = vweird.f32 %v1649
        %vm1751 = vweird.f32 %v1744
        %vm1752 = vmor %vm1750, %vm1751
        %v1753 = vsel %vm1752, %v1744, %v1749
        %v1754 = vrsqrt.pop %v1650
        %v1755 = vmul.f32 %v1754, %v1650
        %v1756 = vmul.f32 %v1755, %v1754
        %v1757 = vmul.f32 0.5, %v1756
        %v1758 = vsub.f32 1.5, %v1757
        %v1759 = vmul.f32 %v1754, %v1758
        %vm1760 = vweird.f32 %v1650
        %vm1761 = vweird.f32 %v1754
        %vm1762 = vmor %vm1760, %vm1761
        %v1763 = vsel %vm1762, %v1754, %v1759
        %v1764 = vrsqrt.pop %v1651
        %v1765 = vmul.f32 %v1764, %v1651
        %v1766 = vmul.f32 %v1765, %v1764
        %v1767 = vmul.f32 0.5, %v1766
        %v1768 = vsub.f32 1.5, %v1767
        %v1769 = vmul.f32 %v1764, %v1768
        %vm1770 = vweird.f32 %v1651
        %vm1771 = vweird.f32 %v1764
        %vm1772 = vmor %vm1770, %vm1771
        %v1773 = vsel %vm1772, %v1764, %v1769
        %v1774 = vrsqrt.pop %v1652
        %v1775 = vmul.f32 %v1774, %v1652
        %v1776 = vmul.f32 %v1775, %v1774
        %v1777 = vmul.f32 0.5, %v1776
        %v1778 = vsub.f32 1.5, %v1777
        %v1779 = vmul.f32 %v1774, %v1778
        %vm1780 = vweird.f32 %v1652
        %vm1781 = vweird.f32 %v1774
        %vm1782 = vmor %vm1780, %vm1781
        %v1783 = vsel %vm1782, %v1774, %v1779
        %v1784 = vrsqrt.pop %v1653
        %v1785 = vmul.f32 %v1784, %v1653
        %v1786 = vmul.f32 %v1785, %v1784
        %v1787 = vmul.f32 0.5, %v1786
        %v1788 = vsub.f32 1.5, %v1787
        %v1789 = vmul.f32 %v1784, %v1788
        %vm1790 = vweird.f32 %v1653
        %vm1791 = vweird.f32 %v1784
        %vm1792 = vmor %vm1790, %vm1791
        %v1793 = vsel %vm1792, %v1784, %v1789
        %v1794 = vrsqrt.pop %v1654
        %v1795 = vmul.f32 %v1794, %v1654
        %v1796 = vmul.f32 %v1795, %v1794
        %v1797 = vmul.f32 0.5, %v1796
        %v1798 = vsub.f32 1.5, %v1797
        %v1799 = vmul.f32 %v1794, %v1798
        %vm1800 = vweird.f32 %v1654
        %vm1801 = vweird.f32 %v1794
        %vm1802 = vmor %vm1800, %vm1801
        %v1803 = vsel %vm1802, %v1794, %v1799
        %v1804 = vrsqrt.pop %v1655
        %v1805 = vmul.f32 %v1804, %v1655
        %v1806 = vmul.f32 %v1805, %v1804
        %v1807 = vmul.f32 0.5, %v1806
        %v1808 = vsub.f32 1.5, %v1807
        %v1809 = vmul.f32 %v1804, %v1808
        %vm1810 = vweird.f32 %v1655
        %vm1811 = vweird.f32 %v1804
        %vm1812 = vmor %vm1810, %vm1811
        %v1813 = vsel %vm1812, %v1804, %v1809
        %v1814 = vrsqrt.pop %v1656
        %v1815 = vmul.f32 %v1814, %v1656
        %v1816 = vmul.f32 %v1815, %v1814
        %v1817 = vmul.f32 0.5, %v1816
        %v1818 = vsub.f32 1.5, %v1817
        %v1819 = vmul.f32 %v1814, %v1818
        %vm1820 = vweird.f32 %v1656
        %vm1821 = vweird.f32 %v1814
        %vm1822 = vmor %vm1820, %vm1821
        %v1823 = vsel %vm1822, %v1814, %v1819
        %v1824 = vrsqrt.pop %v1657
        %v1825 = vmul.f32 %v1824, %v1657
        %v1826 = vmul.f32 %v1825, %v1824
        %v1827 = vmul.f32 0.5, %v1826
        %v1828 = vsub.f32 1.5, %v1827
        %v1829 = vmul.f32 %v1824, %v1828
        %vm1830 = vweird.f32 %v1657
        %vm1831 = vweird.f32 %v1824
        %vm1832 = vmor %vm1830, %vm1831
        %v1833 = vsel %vm1832, %v1824, %v1829
        %v1834 = vrsqrt.pop %v1658
        %v1835 = vmul.f32 %v1834, %v1658
        %v1836 = vmul.f32 %v1835, %v1834
        %v1837 = vmul.f32 0.5, %v1836
        %v1838 = vsub.f32 1.5, %v1837
        %v1839 = vmul.f32 %v1834, %v1838
        %vm1840 = vweird.f32 %v1658
        %vm1841 = vweird.f32 %v1834
        %vm1842 = vmor %vm1840, %vm1841
        %v1843 = vsel %vm1842, %v1834, %v1839
        %v1844 = vrsqrt.pop %v1659
        %v1845 = vmul.f32 %v1844, %v1659
        %v1846 = vmul.f32 %v1845, %v1844
        %v1847 = vmul.f32 0.5, %v1846
        %v1848 = vsub.f32 1.5, %v1847
        %v1849 = vmul.f32 %v1844, %v1848
        %vm1850 = vweird.f32 %v1659
        %vm1851 = vweird.f32 %v1844
        %vm1852 = vmor %vm1850, %vm1851
        %v1853 = vsel %vm1852, %v1844, %v1849
        %v1854 = vrsqrt.pop %v1660
        %v1855 = vmul.f32 %v1854, %v1660
        %v1856 = vmul.f32 %v1855, %v1854
        %v1857 = vmul.f32 0.5, %v1856
        %v1858 = vsub.f32 1.5, %v1857
        %v1859 = vmul.f32 %v1854, %v1858
        %vm1860 = vweird.f32 %v1660
        %vm1861 = vweird.f32 %v1854
        %vm1862 = vmor %vm1860, %vm1861
        %v1863 = vsel %vm1862, %v1854, %v1859
        %v1864 = vrsqrt.pop %v1661
        %v1865 = vmul.f32 %v1864, %v1661
        %v1866 = vmul.f32 %v1865, %v1864
        %v1867 = vmul.f32 0.5, %v1866
        %v1868 = vsub.f32 1.5, %v1867
        %v1869 = vmul.f32 %v1864, %v1868
        %vm1870 = vweird.f32 %v1661
        %vm1871 = vweird.f32 %v1864
        %vm1872 = vmor %vm1870, %vm1871
        %v1873 = vsel %vm1872, %v1864, %v1869
        %v1874 = vrsqrt.pop %v1662
        %v1875 = vmul.f32 %v1874, %v1662
        %v1876 = vmul.f32 %v1875, %v1874
        %v1877 = vmul.f32 0.5, %v1876
        %v1878 = vsub.f32 1.5, %v1877
        %v1879 = vmul.f32 %v1874, %v1878
        %vm1880 = vweird.f32 %v1662
        %vm1881 = vweird.f32 %v1874
        %vm1882 = vmor %vm1880, %vm1881
        %v1883 = vsel %vm1882, %v1874, %v1879
        %v1884 = vrsqrt.pop %v1663
        %v1885 = vmul.f32 %v1884, %v1663
        %v1886 = vmul.f32 %v1885, %v1884
        %v1887 = vmul.f32 0.5, %v1886
        %v1888 = vsub.f32 1.5, %v1887
        %v1889 = vmul.f32 %v1884, %v1888
        %vm1890 = vweird.f32 %v1663
        %vm1891 = vweird.f32 %v1884
        %vm1892 = vmor %vm1890, %vm1891
        %v1893 = vsel %vm1892, %v1884, %v1889
        %v1894 = vrsqrt.pop %v1664
        %v1895 = vmul.f32 %v1894, %v1664
        %v1896 = vmul.f32 %v1895, %v1894
        %v1897 = vmul.f32 0.5, %v1896
        %v1898 = vsub.f32 1.5, %v1897
        %v1899 = vmul.f32 %v1894, %v1898
        %vm1900 = vweird.f32 %v1664
        %vm1901 = vweird.f32 %v1894
        %vm1902 = vmor %vm1900, %vm1901
        %v1903 = vsel %vm1902, %v1894, %v1899
        %v1904 = vrsqrt.pop %v1665
        %v1905 = vmul.f32 %v1904, %v1665
        %v1906 = vmul.f32 %v1905, %v1904
        %v1907 = vmul.f32 0.5, %v1906
        %v1908 = vsub.f32 1.5, %v1907
        %v1909 = vmul.f32 %v1904, %v1908
        %vm1910 = vweird.f32 %v1665
        %vm1911 = vweird.f32 %v1904
        %vm1912 = vmor %vm1910, %vm1911
        %v1913 = vsel %vm1912, %v1904, %v1909
        %v1914 = vrsqrt.pop %v1666
        %v1915 = vmul.f32 %v1914, %v1666
        %v1916 = vmul.f32 %v1915, %v1914
        %v1917 = vmul.f32 0.5, %v1916
        %v1918 = vsub.f32 1.5, %v1917
        %v1919 = vmul.f32 %v1914, %v1918
        %vm1920 = vweird.f32 %v1666
        %vm1921 = vweird.f32 %v1914
        %vm1922 = vmor %vm1920, %vm1921
        %v1923 = vsel %vm1922, %v1914, %v1919
        %v1924 = vrsqrt.pop %v1667
        %v1925 = vmul.f32 %v1924, %v1667
        %v1926 = vmul.f32 %v1925, %v1924
        %v1927 = vmul.f32 0.5, %v1926
        %v1928 = vsub.f32 1.5, %v1927
        %v1929 = vmul.f32 %v1924, %v1928
        %vm1930 = vweird.f32 %v1667
        %vm1931 = vweird.f32 %v1924
        %vm1932 = vmor %vm1930, %vm1931
        %v1933 = vsel %vm1932, %v1924, %v1929
        %v1934 = vrsqrt.pop %v1668
        %v1935 = vmul.f32 %v1934, %v1668
        %v1936 = vmul.f32 %v1935, %v1934
        %v1937 = vmul.f32 0.5, %v1936
        %v1938 = vsub.f32 1.5, %v1937
        %v1939 = vmul.f32 %v1934, %v1938
        %vm1940 = vweird.f32 %v1668
        %vm1941 = vweird.f32 %v1934
        %vm1942 = vmor %vm1940, %vm1941
        %v1943 = vsel %vm1942, %v1934, %v1939
        %v1944 = vrsqrt.pop %v1669
        %v1945 = vmul.f32 %v1944, %v1669
        %v1946 = vmul.f32 %v1945, %v1944
        %v1947 = vmul.f32 0.5, %v1946
        %v1948 = vsub.f32 1.5, %v1947
        %v1949 = vmul.f32 %v1944, %v1948
        %vm1950 = vweird.f32 %v1669
        %vm1951 = vweird.f32 %v1944
        %vm1952 = vmor %vm1950, %vm1951
        %v1953 = vsel %vm1952, %v1944, %v1949
        %v1954 = vrsqrt.pop %v1670
        %v1955 = vmul.f32 %v1954, %v1670
        %v1956 = vmul.f32 %v1955, %v1954
        %v1957 = vmul.f32 0.5, %v1956
        %v1958 = vsub.f32 1.5, %v1957
        %v1959 = vmul.f32 %v1954, %v1958
        %vm1960 = vweird.f32 %v1670
        %vm1961 = vweird.f32 %v1954
        %vm1962 = vmor %vm1960, %vm1961
        %v1963 = vsel %vm1962, %v1954, %v1959
        %v1964 = vrsqrt.pop %v1671
        %v1965 = vmul.f32 %v1964, %v1671
        %v1966 = vmul.f32 %v1965, %v1964
        %v1967 = vmul.f32 0.5, %v1966
        %v1968 = vsub.f32 1.5, %v1967
        %v1969 = vmul.f32 %v1964, %v1968
        %vm1970 = vweird.f32 %v1671
        %vm1971 = vweird.f32 %v1964
        %vm1972 = vmor %vm1970, %vm1971
        %v1973 = vsel %vm1972, %v1964, %v1969
        %v1974 = vrsqrt.pop %v1672
        %v1975 = vmul.f32 %v1974, %v1672
        %v1976 = vmul.f32 %v1975, %v1974
        %v1977 = vmul.f32 0.5, %v1976
        %v1978 = vsub.f32 1.5, %v1977
        %v1979 = vmul.f32 %v1974, %v1978
        %vm1980 = vweird.f32 %v1672
        %vm1981 = vweird.f32 %v1974
        %vm1982 = vmor %vm1980, %vm1981
        %v1983 = vsel %vm1982, %v1974, %v1979
        %v1984 = vrsqrt.pop %v1673
        %v1985 = vmul.f32 %v1984, %v1673
        %v1986 = vmul.f32 %v1985, %v1984
        %v1987 = vmul.f32 0.5, %v1986
        %v1988 = vsub.f32 1.5, %v1987
        %v1989 = vmul.f32 %v1984, %v1988
        %vm1990 = vweird.f32 %v1673
        %vm1991 = vweird.f32 %v1984
        %vm1992 = vmor %vm1990, %vm1991
        %v1993 = vsel %vm1992, %v1984, %v1989
        %v1994 = vmul.f32 %v1482, %v1683
        %v1995 = vmul.f32 %v1483, %v1693
        %v1996 = vmul.f32 %v1484, %v1703
        %v1997 = vmul.f32 %v1485, %v1713
        %v1998 = vmul.f32 %v1486, %v1723
        %v1999 = vmul.f32 %v1487, %v1733
        %v2000 = vmul.f32 %v1488, %v1743
        %v2001 = vmul.f32 %v1489, %v1753
        %v2002 = vmul.f32 %v1490, %v1763
        %v2003 = vmul.f32 %v1491, %v1773
        %v2004 = vmul.f32 %v1492, %v1783
        %v2005 = vmul.f32 %v1493, %v1793
        %v2006 = vmul.f32 %v1494, %v1803
        %v2007 = vmul.f32 %v1495, %v1813
        %v2008 = vmul.f32 %v1496, %v1823
        %v2009 = vmul.f32 %v1497, %v1833
        %v2010 = vmul.f32 %v1498, %v1843
        %v2011 = vmul.f32 %v1499, %v1853
        %v2012 = vmul.f32 %v1500, %v1863
        %v2013 = vmul.f32 %v1501, %v1873
        %v2014 = vmul.f32 %v1502, %v1883
        %v2015 = vmul.f32 %v1503, %v1893
        %v2016 = vmul.f32 %v1504, %v1903
        %v2017 = vmul.f32 %v1505, %v1913
        %v2018 = vmul.f32 %v1506, %v1923
        %v2019 = vmul.f32 %v1507, %v1933
        %v2020 = vmul.f32 %v1508, %v1943
        %v2021 = vmul.f32 %v1509, %v1953
        %v2022 = vmul.f32 %v1510, %v1963
        %v2023 = vmul.f32 %v1511, %v1973
        %v2024 = vmul.f32 %v1512, %v1983
        %v2025 = vmul.f32 %v1513, %v1993
        %v2026 = vld [vmem:[%s5] sm:$0x1]
        %v2028 = vperm.slane %v2026, 0
        %v2030 = vmul.f32 %v1994, %v2028
        %v2031 = vmul.f32 %v1995, %v2028
        %v2032 = vmul.f32 %v1996, %v2028
        %v2033 = vmul.f32 %v1997, %v2028
        %v2034 = vmul.f32 %v1998, %v2028
        %v2035 = vmul.f32 %v1999, %v2028
        %v2036 = vmul.f32 %v2000, %v2028
        %v2037 = vmul.f32 %v2001, %v2028
        %v2038 = vmul.f32 %v2002, %v2028
        %v2039 = vmul.f32 %v2003, %v2028
        %v2040 = vmul.f32 %v2004, %v2028
        %v2041 = vmul.f32 %v2005, %v2028
        %v2042 = vmul.f32 %v2006, %v2028
        %v2043 = vmul.f32 %v2007, %v2028
        %v2044 = vmul.f32 %v2008, %v2028
        %v2045 = vmul.f32 %v2009, %v2028
        %v2046 = vmul.f32 %v2010, %v2028
        %v2047 = vmul.f32 %v2011, %v2028
        %v2048 = vmul.f32 %v2012, %v2028
        %v2049 = vmul.f32 %v2013, %v2028
        %v2050 = vmul.f32 %v2014, %v2028
        %v2051 = vmul.f32 %v2015, %v2028
        %v2052 = vmul.f32 %v2016, %v2028
        %v2053 = vmul.f32 %v2017, %v2028
        %v2054 = vmul.f32 %v2018, %v2028
        %v2055 = vmul.f32 %v2019, %v2028
        %v2056 = vmul.f32 %v2020, %v2028
        %v2057 = vmul.f32 %v2021, %v2028
        %v2058 = vmul.f32 %v2022, %v2028
        %v2059 = vmul.f32 %v2023, %v2028
        %v2060 = vmul.f32 %v2024, %v2028
        %v2061 = vmul.f32 %v2025, %v2028
        %v2062 = vld [vmem:[%s6] sm:$0x1]
        %v2064 = vperm.slane %v2062, 0
        %v2066 = vadd.f32 %v2030, %v2064
        %v2067 = vadd.f32 %v2031, %v2064
        %v2068 = vadd.f32 %v2032, %v2064
        %v2069 = vadd.f32 %v2033, %v2064
        %v2070 = vadd.f32 %v2034, %v2064
        %v2071 = vadd.f32 %v2035, %v2064
        %v2072 = vadd.f32 %v2036, %v2064
        %v2073 = vadd.f32 %v2037, %v2064
        %v2074 = vadd.f32 %v2038, %v2064
        %v2075 = vadd.f32 %v2039, %v2064
        %v2076 = vadd.f32 %v2040, %v2064
        %v2077 = vadd.f32 %v2041, %v2064
        %v2078 = vadd.f32 %v2042, %v2064
        %v2079 = vadd.f32 %v2043, %v2064
        %v2080 = vadd.f32 %v2044, %v2064
        %v2081 = vadd.f32 %v2045, %v2064
        %v2082 = vadd.f32 %v2046, %v2064
        %v2083 = vadd.f32 %v2047, %v2064
        %v2084 = vadd.f32 %v2048, %v2064
        %v2085 = vadd.f32 %v2049, %v2064
        %v2086 = vadd.f32 %v2050, %v2064
        %v2087 = vadd.f32 %v2051, %v2064
        %v2088 = vadd.f32 %v2052, %v2064
        %v2089 = vadd.f32 %v2053, %v2064
        %v2090 = vadd.f32 %v2054, %v2064
        %v2091 = vadd.f32 %v2055, %v2064
        %v2092 = vadd.f32 %v2056, %v2064
        %v2093 = vadd.f32 %v2057, %v2064
        %v2094 = vadd.f32 %v2058, %v2064
        %v2095 = vadd.f32 %v2059, %v2064
        %v2096 = vadd.f32 %v2060, %v2064
        %v2097 = vadd.f32 %v2061, %v2064
        %v2098 = vpack.c.bf16 %v2067, %v2066
        %v2099 = vpack.c.bf16 %v2069, %v2068
        %v2100 = vpack.c.bf16 %v2071, %v2070
        %v2101 = vpack.c.bf16 %v2073, %v2072
        %v2102 = vpack.c.bf16 %v2075, %v2074
        %v2103 = vpack.c.bf16 %v2077, %v2076
        %v2104 = vpack.c.bf16 %v2079, %v2078
        %v2105 = vpack.c.bf16 %v2081, %v2080
        %v2106 = vpack.c.bf16 %v2083, %v2082
        %v2107 = vpack.c.bf16 %v2085, %v2084
        %v2108 = vpack.c.bf16 %v2087, %v2086
        %v2109 = vpack.c.bf16 %v2089, %v2088
        %v2110 = vpack.c.bf16 %v2091, %v2090
        %v2111 = vpack.c.bf16 %v2093, %v2092
        %v2112 = vpack.c.bf16 %v2095, %v2094
        %v2113 = vpack.c.bf16 %v2097, %v2096
        %v2114 = vld [vmem:[#allocation11] sm:$0xff]
        %v2115 = vld [vmem:[#allocation11 + $0x8] sm:$0xff]
        %v2116 = vld [vmem:[#allocation11 + $0x10] sm:$0xff]
        %v2117 = vld [vmem:[#allocation11 + $0x18] sm:$0xff]
        %v2118 = vld [vmem:[#allocation11 + $0x20] sm:$0xff]
        %v2119 = vld [vmem:[#allocation11 + $0x28] sm:$0xff]
        %v2120 = vld [vmem:[#allocation11 + $0x30] sm:$0xff]
        %v2121 = vld [vmem:[#allocation11 + $0x38] sm:$0xff]
        %v2122 = vld [vmem:[#allocation11 + $0x40] sm:$0xff]
        %v2123 = vld [vmem:[#allocation11 + $0x48] sm:$0xff]
        %v2124 = vld [vmem:[#allocation11 + $0x50] sm:$0xff]
        %v2125 = vld [vmem:[#allocation11 + $0x58] sm:$0xff]
        %v2126 = vld [vmem:[#allocation11 + $0x60] sm:$0xff]
        %v2127 = vld [vmem:[#allocation11 + $0x68] sm:$0xff]
        %v2128 = vld [vmem:[#allocation11 + $0x70] sm:$0xff]
        %v2129 = vld [vmem:[#allocation11 + $0x78] sm:$0xff]
        %v2130 = vld [vmem:[%s8] sm:$0x3]
        %v2132 = vperm.slane %v2130, 0
        %v2133 = vperm.slane %v2130, 1
        %v2152 = vunpack.c.l.b16 %v2114
        %v2153 = vunpack.c.h.b16 %v2114
        %v2154 = vunpack.c.l.b16 %v2115
        %v2155 = vunpack.c.h.b16 %v2115
        %v2156 = vunpack.c.l.b16 %v2116
        %v2157 = vunpack.c.h.b16 %v2116
        %v2158 = vunpack.c.l.b16 %v2117
        %v2159 = vunpack.c.h.b16 %v2117
        %v2160 = vunpack.c.l.b16 %v2118
        %v2161 = vunpack.c.h.b16 %v2118
        %v2162 = vunpack.c.l.b16 %v2119
        %v2163 = vunpack.c.h.b16 %v2119
        %v2164 = vunpack.c.l.b16 %v2120
        %v2165 = vunpack.c.h.b16 %v2120
        %v2166 = vunpack.c.l.b16 %v2121
        %v2167 = vunpack.c.h.b16 %v2121
        %v2168 = vunpack.c.l.b16 %v2122
        %v2169 = vunpack.c.h.b16 %v2122
        %v2170 = vunpack.c.l.b16 %v2123
        %v2171 = vunpack.c.h.b16 %v2123
        %v2172 = vunpack.c.l.b16 %v2124
        %v2173 = vunpack.c.h.b16 %v2124
        %v2174 = vunpack.c.l.b16 %v2125
        %v2175 = vunpack.c.h.b16 %v2125
        %v2176 = vunpack.c.l.b16 %v2126
        %v2177 = vunpack.c.h.b16 %v2126
        %v2178 = vunpack.c.l.b16 %v2127
        %v2179 = vunpack.c.h.b16 %v2127
        %v2180 = vunpack.c.l.b16 %v2128
        %v2181 = vunpack.c.h.b16 %v2128
        %v2182 = vunpack.c.l.b16 %v2129
        %v2183 = vunpack.c.h.b16 %v2129
        %v2184 = vpack.c.b16 %v2154, %v2152
        %v2185 = vpack.c.b16 %v2155, %v2153
        %v2186 = vpack.c.b16 %v2158, %v2156
        %v2187 = vpack.c.b16 %v2159, %v2157
        %v2188 = vpack.c.b16 %v2162, %v2160
        %v2189 = vpack.c.b16 %v2163, %v2161
        %v2190 = vpack.c.b16 %v2166, %v2164
        %v2191 = vpack.c.b16 %v2167, %v2165
        %v2192 = vpack.c.b16 %v2170, %v2168
        %v2193 = vpack.c.b16 %v2171, %v2169
        %v2194 = vpack.c.b16 %v2174, %v2172
        %v2195 = vpack.c.b16 %v2175, %v2173
        %v2196 = vpack.c.b16 %v2178, %v2176
        %v2197 = vpack.c.b16 %v2179, %v2177
        %v2198 = vpack.c.b16 %v2182, %v2180
        %v2199 = vpack.c.b16 %v2183, %v2181
        %2216 = vmatpush.bf16.msra.mxu0 %v2198
        %2217 = vmatpush.bf16.msra.mxu0 %v2196
        %2218 = vmatpush.bf16.msra.mxu0 %v2194
        %2219 = vmatpush.bf16.msra.mxu0 %v2192
        %2220 = vmatpush.bf16.msra.mxu0 %v2190
        %2221 = vmatpush.bf16.msra.mxu0 %v2188
        %2222 = vmatpush.bf16.msra.mxu0 %v2186
        %2223 = vmatpush.bf16.msra.mxu0 %v2184
        %2224 = vmatmul.bf16.gmra.mxu0 %v2098
        %v2225 = vpop.f32.mrf.mxu0
        %v2226 = vadd.f32 %v2132, %v2225
        %v2227 = vpop.f32.mrf.mxu0
        %v2228 = vadd.f32 %v2132, %v2227
        %2229 = vmatmul.bf16.gmra.mxu0 %v2099
        %v2230 = vpop.f32.mrf.mxu0
        %v2231 = vadd.f32 %v2132, %v2230
        %v2232 = vpop.f32.mrf.mxu0
        %v2233 = vadd.f32 %v2132, %v2232
        %2234 = vmatmul.bf16.gmra.mxu0 %v2100
        %v2235 = vpop.f32.mrf.mxu0
        %v2236 = vadd.f32 %v2132, %v2235
        %v2237 = vpop.f32.mrf.mxu0
        %v2238 = vadd.f32 %v2132, %v2237
        %2239 = vmatmul.bf16.gmra.mxu0 %v2101
        %v2240 = vpop.f32.mrf.mxu0
        %v2241 = vadd.f32 %v2132, %v2240
        %v2242 = vpop.f32.mrf.mxu0
        %v2243 = vadd.f32 %v2132, %v2242
        %2244 = vmatmul.bf16.gmra.mxu0 %v2102
        %v2245 = vpop.f32.mrf.mxu0
        %v2246 = vadd.f32 %v2132, %v2245
        %v2247 = vpop.f32.mrf.mxu0
        %v2248 = vadd.f32 %v2132, %v2247
        %2249 = vmatmul.bf16.gmra.mxu0 %v2103
        %v2250 = vpop.f32.mrf.mxu0
        %v2251 = vadd.f32 %v2132, %v2250
        %v2252 = vpop.f32.mrf.mxu0
        %v2253 = vadd.f32 %v2132, %v2252
        %2254 = vmatmul.bf16.gmra.mxu0 %v2104
        %v2255 = vpop.f32.mrf.mxu0
        %v2256 = vadd.f32 %v2132, %v2255
        %v2257 = vpop.f32.mrf.mxu0
        %v2258 = vadd.f32 %v2132, %v2257
        %2259 = vmatmul.bf16.gmra.mxu0 %v2105
        %v2260 = vpop.f32.mrf.mxu0
        %v2261 = vadd.f32 %v2132, %v2260
        %v2262 = vpop.f32.mrf.mxu0
        %v2263 = vadd.f32 %v2132, %v2262
        %2264 = vmatmul.bf16.gmra.mxu0 %v2106
        %v2265 = vpop.f32.mrf.mxu0
        %v2266 = vadd.f32 %v2132, %v2265
        %v2267 = vpop.f32.mrf.mxu0
        %v2268 = vadd.f32 %v2132, %v2267
        %2269 = vmatmul.bf16.gmra.mxu0 %v2107
        %v2270 = vpop.f32.mrf.mxu0
        %v2271 = vadd.f32 %v2132, %v2270
        %v2272 = vpop.f32.mrf.mxu0
        %v2273 = vadd.f32 %v2132, %v2272
        %2274 = vmatmul.bf16.gmra.mxu0 %v2108
        %v2275 = vpop.f32.mrf.mxu0
        %v2276 = vadd.f32 %v2132, %v2275
        %v2277 = vpop.f32.mrf.mxu0
        %v2278 = vadd.f32 %v2132, %v2277
        %2279 = vmatmul.bf16.gmra.mxu0 %v2109
        %v2280 = vpop.f32.mrf.mxu0
        %v2281 = vadd.f32 %v2132, %v2280
        %v2282 = vpop.f32.mrf.mxu0
        %v2283 = vadd.f32 %v2132, %v2282
        %2284 = vmatmul.bf16.gmra.mxu0 %v2110
        %v2285 = vpop.f32.mrf.mxu0
        %v2286 = vadd.f32 %v2132, %v2285
        %v2287 = vpop.f32.mrf.mxu0
        %v2288 = vadd.f32 %v2132, %v2287
        %2289 = vmatmul.bf16.gmra.mxu0 %v2111
        %v2290 = vpop.f32.mrf.mxu0
        %v2291 = vadd.f32 %v2132, %v2290
        %v2292 = vpop.f32.mrf.mxu0
        %v2293 = vadd.f32 %v2132, %v2292
        %2294 = vmatmul.bf16.gmra.mxu0 %v2112
        %v2295 = vpop.f32.mrf.mxu0
        %v2296 = vadd.f32 %v2132, %v2295
        %v2297 = vpop.f32.mrf.mxu0
        %v2298 = vadd.f32 %v2132, %v2297
        %2299 = vmatmul.bf16.gmra.mxu0 %v2113
        %v2300 = vpop.f32.mrf.mxu0
        %v2301 = vadd.f32 %v2132, %v2300
        %v2302 = vpop.f32.mrf.mxu0
        %v2303 = vadd.f32 %v2132, %v2302
        %2304 = vdwg.mxu0
        %2305 = vmatpush.bf16.msra.mxu0 %v2199
        %2306 = vmatpush.bf16.msra.mxu0 %v2197
        %2307 = vmatpush.bf16.msra.mxu0 %v2195
        %2308 = vmatpush.bf16.msra.mxu0 %v2193
        %2309 = vmatpush.bf16.msra.mxu0 %v2191
        %2310 = vmatpush.bf16.msra.mxu0 %v2189
        %2311 = vmatpush.bf16.msra.mxu0 %v2187
        %2312 = vmatpush.bf16.msra.mxu0 %v2185
        %2313 = vmatmul.bf16.gmra.mxu0 %v2098
        %v2314 = vpop.f32.mrf.mxu0
        %v2315 = vadd.f32 %v2133, %v2314
        %v2316 = vpop.f32.mrf.mxu0
        %v2317 = vadd.f32 %v2133, %v2316
        %2318 = vmatmul.bf16.gmra.mxu0 %v2099
        %v2319 = vpop.f32.mrf.mxu0
        %v2320 = vadd.f32 %v2133, %v2319
        %v2321 = vpop.f32.mrf.mxu0
        %v2322 = vadd.f32 %v2133, %v2321
        %2323 = vmatmul.bf16.gmra.mxu0 %v2100
        %v2324 = vpop.f32.mrf.mxu0
        %v2325 = vadd.f32 %v2133, %v2324
        %v2326 = vpop.f32.mrf.mxu0
        %v2327 = vadd.f32 %v2133, %v2326
        %2328 = vmatmul.bf16.gmra.mxu0 %v2101
        %v2329 = vpop.f32.mrf.mxu0
        %v2330 = vadd.f32 %v2133, %v2329
        %v2331 = vpop.f32.mrf.mxu0
        %v2332 = vadd.f32 %v2133, %v2331
        %2333 = vmatmul.bf16.gmra.mxu0 %v2102
        %v2334 = vpop.f32.mrf.mxu0
        %v2335 = vadd.f32 %v2133, %v2334
        %v2336 = vpop.f32.mrf.mxu0
        %v2337 = vadd.f32 %v2133, %v2336
        %2338 = vmatmul.bf16.gmra.mxu0 %v2103
        %v2339 = vpop.f32.mrf.mxu0
        %v2340 = vadd.f32 %v2133, %v2339
        %v2341 = vpop.f32.mrf.mxu0
        %v2342 = vadd.f32 %v2133, %v2341
        %2343 = vmatmul.bf16.gmra.mxu0 %v2104
        %v2344 = vpop.f32.mrf.mxu0
        %v2345 = vadd.f32 %v2133, %v2344
        %v2346 = vpop.f32.mrf.mxu0
        %v2347 = vadd.f32 %v2133, %v2346
        %2348 = vmatmul.bf16.gmra.mxu0 %v2105
        %v2349 = vpop.f32.mrf.mxu0
        %v2350 = vadd.f32 %v2133, %v2349
        %v2351 = vpop.f32.mrf.mxu0
        %v2352 = vadd.f32 %v2133, %v2351
        %2353 = vmatmul.bf16.gmra.mxu0 %v2106
        %v2354 = vpop.f32.mrf.mxu0
        %v2355 = vadd.f32 %v2133, %v2354
        %v2356 = vpop.f32.mrf.mxu0
        %v2357 = vadd.f32 %v2133, %v2356
        %2358 = vmatmul.bf16.gmra.mxu0 %v2107
        %v2359 = vpop.f32.mrf.mxu0
        %v2360 = vadd.f32 %v2133, %v2359
        %v2361 = vpop.f32.mrf.mxu0
        %v2362 = vadd.f32 %v2133, %v2361
        %2363 = vmatmul.bf16.gmra.mxu0 %v2108
        %v2364 = vpop.f32.mrf.mxu0
        %v2365 = vadd.f32 %v2133, %v2364
        %v2366 = vpop.f32.mrf.mxu0
        %v2367 = vadd.f32 %v2133, %v2366
        %2368 = vmatmul.bf16.gmra.mxu0 %v2109
        %v2369 = vpop.f32.mrf.mxu0
        %v2370 = vadd.f32 %v2133, %v2369
        %v2371 = vpop.f32.mrf.mxu0
        %v2372 = vadd.f32 %v2133, %v2371
        %2373 = vmatmul.bf16.gmra.mxu0 %v2110
        %v2374 = vpop.f32.mrf.mxu0
        %v2375 = vadd.f32 %v2133, %v2374
        %v2376 = vpop.f32.mrf.mxu0
        %v2377 = vadd.f32 %v2133, %v2376
        %2378 = vmatmul.bf16.gmra.mxu0 %v2111
        %v2379 = vpop.f32.mrf.mxu0
        %v2380 = vadd.f32 %v2133, %v2379
        %v2381 = vpop.f32.mrf.mxu0
        %v2382 = vadd.f32 %v2133, %v2381
        %2383 = vmatmul.bf16.gmra.mxu0 %v2112
        %v2384 = vpop.f32.mrf.mxu0
        %v2385 = vadd.f32 %v2133, %v2384
        %v2386 = vpop.f32.mrf.mxu0
        %v2387 = vadd.f32 %v2133, %v2386
        %2388 = vmatmul.bf16.gmra.mxu0 %v2113
        %v2389 = vpop.f32.mrf.mxu0
        %v2390 = vadd.f32 %v2133, %v2389
        %v2391 = vpop.f32.mrf.mxu0
        %v2392 = vadd.f32 %v2133, %v2391
        %2393 = vdwg.mxu0
        %v2394 = vmul.f32 %v2226, 0.5
        %v2395 = vmul.f32 %v2315, 0.5
        %v2396 = vmul.f32 %v2228, 0.5
        %v2397 = vmul.f32 %v2317, 0.5
        %v2398 = vmul.f32 %v2231, 0.5
        %v2399 = vmul.f32 %v2320, 0.5
        %v2400 = vmul.f32 %v2233, 0.5
        %v2401 = vmul.f32 %v2322, 0.5
        %v2402 = vmul.f32 %v2236, 0.5
        %v2403 = vmul.f32 %v2325, 0.5
        %v2404 = vmul.f32 %v2238, 0.5
        %v2405 = vmul.f32 %v2327, 0.5
        %v2406 = vmul.f32 %v2241, 0.5
        %v2407 = vmul.f32 %v2330, 0.5
        %v2408 = vmul.f32 %v2243, 0.5
        %v2409 = vmul.f32 %v2332, 0.5
        %v2410 = vmul.f32 %v2246, 0.5
        %v2411 = vmul.f32 %v2335, 0.5
        %v2412 = vmul.f32 %v2248, 0.5
        %v2413 = vmul.f32 %v2337, 0.5
        %v2414 = vmul.f32 %v2251, 0.5
        %v2415 = vmul.f32 %v2340, 0.5
        %v2416 = vmul.f32 %v2253, 0.5
        %v2417 = vmul.f32 %v2342, 0.5
        %v2418 = vmul.f32 %v2256, 0.5
        %v2419 = vmul.f32 %v2345, 0.5
        %v2420 = vmul.f32 %v2258, 0.5
        %v2421 = vmul.f32 %v2347, 0.5
        %v2422 = vmul.f32 %v2261, 0.5
        %v2423 = vmul.f32 %v2350, 0.5
        %v2424 = vmul.f32 %v2263, 0.5
        %v2425 = vmul.f32 %v2352, 0.5
        %v2426 = vmul.f32 %v2266, 0.5
        %v2427 = vmul.f32 %v2355, 0.5
        %v2428 = vmul.f32 %v2268, 0.5
        %v2429 = vmul.f32 %v2357, 0.5
        %v2430 = vmul.f32 %v2271, 0.5
        %v2431 = vmul.f32 %v2360, 0.5
        %v2432 = vmul.f32 %v2273, 0.5
        %v2433 = vmul.f32 %v2362, 0.5
        %v2434 = vmul.f32 %v2276, 0.5
        %v2435 = vmul.f32 %v2365, 0.5
        %v2436 = vmul.f32 %v2278, 0.5
        %v2437 = vmul.f32 %v2367, 0.5
        %v2438 = vmul.f32 %v2281, 0.5
        %v2439 = vmul.f32 %v2370, 0.5
        %v2440 = vmul.f32 %v2283, 0.5
        %v2441 = vmul.f32 %v2372, 0.5
        %v2442 = vmul.f32 %v2286, 0.5
        %v2443 = vmul.f32 %v2375, 0.5
        %v2444 = vmul.f32 %v2288, 0.5
        %v2445 = vmul.f32 %v2377, 0.5
        %v2446 = vmul.f32 %v2291, 0.5
        %v2447 = vmul.f32 %v2380, 0.5
        %v2448 = vmul.f32 %v2293, 0.5
        %v2449 = vmul.f32 %v2382, 0.5
        %v2450 = vmul.f32 %v2296, 0.5
        %v2451 = vmul.f32 %v2385, 0.5
        %v2452 = vmul.f32 %v2298, 0.5
        %v2453 = vmul.f32 %v2387, 0.5
        %v2454 = vmul.f32 %v2301, 0.5
        %v2455 = vmul.f32 %v2390, 0.5
        %v2456 = vmul.f32 %v2303, 0.5
        %v2457 = vmul.f32 %v2392, 0.5
        %v2458 = vmul.f32 %v2226, 0.70710677
        %v2459 = vmul.f32 %v2315, 0.70710677
        %v2460 = vmul.f32 %v2228, 0.70710677
        %v2461 = vmul.f32 %v2317, 0.70710677
        %v2462 = vmul.f32 %v2231, 0.70710677
        %v2463 = vmul.f32 %v2320, 0.70710677
        %v2464 = vmul.f32 %v2233, 0.70710677
        %v2465 = vmul.f32 %v2322, 0.70710677
        %v2466 = vmul.f32 %v2236, 0.70710677
        %v2467 = vmul.f32 %v2325, 0.70710677
        %v2468 = vmul.f32 %v2238, 0.70710677
        %v2469 = vmul.f32 %v2327, 0.70710677
        %v2470 = vmul.f32 %v2241, 0.70710677
        %v2471 = vmul.f32 %v2330, 0.70710677
        %v2472 = vmul.f32 %v2243, 0.70710677
        %v2473 = vmul.f32 %v2332, 0.70710677
        %v2474 = vmul.f32 %v2246, 0.70710677
        %v2475 = vmul.f32 %v2335, 0.70710677
        %v2476 = vmul.f32 %v2248, 0.70710677
        %v2477 = vmul.f32 %v2337, 0.70710677
        %v2478 = vmul.f32 %v2251, 0.70710677
        %v2479 = vmul.f32 %v2340, 0.70710677
        %v2480 = vmul.f32 %v2253, 0.70710677
        %v2481 = vmul.f32 %v2342, 0.70710677
        %v2482 = vmul.f32 %v2256, 0.70710677
        %v2483 = vmul.f32 %v2345, 0.70710677
        %v2484 = vmul.f32 %v2258, 0.70710677
        %v2485 = vmul.f32 %v2347, 0.70710677
        %v2486 = vmul.f32 %v2261, 0.70710677
        %v2487 = vmul.f32 %v2350, 0.70710677
        %v2488 = vmul.f32 %v2263, 0.70710677
        %v2489 = vmul.f32 %v2352, 0.70710677
        %v2490 = vmul.f32 %v2266, 0.70710677
        %v2491 = vmul.f32 %v2355, 0.70710677
        %v2492 = vmul.f32 %v2268, 0.70710677
        %v2493 = vmul.f32 %v2357, 0.70710677
        %v2494 = vmul.f32 %v2271, 0.70710677
        %v2495 = vmul.f32 %v2360, 0.70710677
        %v2496 = vmul.f32 %v2273, 0.70710677
        %v2497 = vmul.f32 %v2362, 0.70710677
        %v2498 = vmul.f32 %v2276, 0.70710677
        %v2499 = vmul.f32 %v2365, 0.70710677
        %v2500 = vmul.f32 %v2278, 0.70710677
        %v2501 = vmul.f32 %v2367, 0.70710677
        %v2502 = vmul.f32 %v2281, 0.70710677
        %v2503 = vmul.f32 %v2370, 0.70710677
        %v2504 = vmul.f32 %v2283, 0.70710677
        %v2505 = vmul.f32 %v2372, 0.70710677
        %v2506 = vmul.f32 %v2286, 0.70710677
        %v2507 = vmul.f32 %v2375, 0.70710677
        %v2508 = vmul.f32 %v2288, 0.70710677
        %v2509 = vmul.f32 %v2377, 0.70710677
        %v2510 = vmul.f32 %v2291, 0.70710677
        %v2511 = vmul.f32 %v2380, 0.70710677
        %v2512 = vmul.f32 %v2293, 0.70710677
        %v2513 = vmul.f32 %v2382, 0.70710677
        %v2514 = vmul.f32 %v2296, 0.70710677
        %v2515 = vmul.f32 %v2385, 0.70710677
        %v2516 = vmul.f32 %v2298, 0.70710677
        %v2517 = vmul.f32 %v2387, 0.70710677
        %v2518 = vmul.f32 %v2301, 0.70710677
        %v2519 = vmul.f32 %v2390, 0.70710677
        %v2520 = vmul.f32 %v2303, 0.70710677
        %v2521 = vmul.f32 %v2392, 0.70710677
        %v2522 = vmul.f32 %v2458, %v2458
        %v2523 = vmin.f32 16.0, %v2522
        %v2524 = vmul.f32 %v2523, 2.1237322e-06
        %v2525 = vadd.f32 %v2524, 0.00028619796
        %v2526 = vmul.f32 %v2523, %v2525
        %v2527 = vadd.f32 %v2526, 0.0036580483
        %v2528 = vmul.f32 %v2523, %v2527
        %v2529 = vadd.f32 %v2528, 0.05243302
        %v2530 = vmul.f32 %v2523, %v2529
        %v2531 = vadd.f32 %v2530, 0.18741608
        %v2532 = vmul.f32 %v2523, %v2531
        %v2533 = vadd.f32 %v2532, 1.1283791
        %v2534 = vmul.f32 %v2458, %v2533
        %v2535 = vmul.f32 %v2523, 3.8918573e-05
        %v2536 = vadd.f32 %v2535, 0.001143296
        %v2537 = vmul.f32 %v2523, %v2536
        %v2538 = vadd.f32 %v2537, 0.014752088
        %v2539 = vmul.f32 %v2523, %v2538
        %v2540 = vadd.f32 %v2539, 0.112945676
        %v2541 = vmul.f32 %v2523, %v2540
        %v2542 = vadd.f32 %v2541, 0.4994258
        %v2543 = vmul.f32 %v2523, %v2542
        %v2544 = vadd.f32 %v2543, 1.0
        %v2545 = vrcp.pop %v2544
        %v2546 = vmul.f32 %v2544, %v2545
        %v2547 = vsub.f32 1.0, %v2546
        %v2548 = vmul.f32 %v2545, %v2547
        %v2549 = vadd.f32 %v2545, %v2548
        %vm2550 = vweird.f32 %v2544
        %vm2551 = vweird.f32 %v2545
        %vm2552 = vmor %vm2550, %vm2551
        %v2553 = vsel %vm2552, %v2545, %v2549
        %v2554 = vand.u32 2147483647, %v2544
        %vm2555 = vcmp.eq.f32.partialorder %v2554, 8.507059e+37
        %v2556 = vand.u32 %v2544, 2147483648
        %v2557 = vor.u32 1.1754944e-38, %v2556
        %v2558 = vsel %vm2555, %v2557, %v2553
        %v2559 = vmul.f32 %v2534, %v2558
        %v2560 = vmin.f32 %v2559, 1.0
        %v2561 = vmax.f32 %v2560, -1.0
        %v2562 = vmul.f32 %v2459, %v2459
        %v2563 = vmin.f32 16.0, %v2562
        %v2564 = vmul.f32 %v2563, 2.1237322e-06
        %v2565 = vadd.f32 %v2564, 0.00028619796
        %v2566 = vmul.f32 %v2563, %v2565
        %v2567 = vadd.f32 %v2566, 0.0036580483
        %v2568 = vmul.f32 %v2563, %v2567
        %v2569 = vadd.f32 %v2568, 0.05243302
        %v2570 = vmul.f32 %v2563, %v2569
        %v2571 = vadd.f32 %v2570, 0.18741608
        %v2572 = vmul.f32 %v2563, %v2571
        %v2573 = vadd.f32 %v2572, 1.1283791
        %v2574 = vmul.f32 %v2459, %v2573
        %v2575 = vmul.f32 %v2563, 3.8918573e-05
        %v2576 = vadd.f32 %v2575, 0.001143296
        %v2577 = vmul.f32 %v2563, %v2576
        %v2578 = vadd.f32 %v2577, 0.014752088
        %v2579 = vmul.f32 %v2563, %v2578
        %v2580 = vadd.f32 %v2579, 0.112945676
        %v2581 = vmul.f32 %v2563, %v2580
        %v2582 = vadd.f32 %v2581, 0.4994258
        %v2583 = vmul.f32 %v2563, %v2582
        %v2584 = vadd.f32 %v2583, 1.0
        %v2585 = vrcp.pop %v2584
        %v2586 = vmul.f32 %v2584, %v2585
        %v2587 = vsub.f32 1.0, %v2586
        %v2588 = vmul.f32 %v2585, %v2587
        %v2589 = vadd.f32 %v2585, %v2588
        %vm2590 = vweird.f32 %v2584
        %vm2591 = vweird.f32 %v2585
        %vm2592 = vmor %vm2590, %vm2591
        %v2593 = vsel %vm2592, %v2585, %v2589
        %v2594 = vand.u32 2147483647, %v2584
        %vm2595 = vcmp.eq.f32.partialorder %v2594, 8.507059e+37
        %v2596 = vand.u32 %v2584, 2147483648
        %v2597 = vor.u32 1.1754944e-38, %v2596
        %v2598 = vsel %vm2595, %v2597, %v2593
        %v2599 = vmul.f32 %v2574, %v2598
        %v2600 = vmin.f32 %v2599, 1.0
        %v2601 = vmax.f32 %v2600, -1.0
        %v2602 = vmul.f32 %v2460, %v2460
        %v2603 = vmin.f32 16.0, %v2602
        %v2604 = vmul.f32 %v2603, 2.1237322e-06
        %v2605 = vadd.f32 %v2604, 0.00028619796
        %v2606 = vmul.f32 %v2603, %v2605
        %v2607 = vadd.f32 %v2606, 0.0036580483
        %v2608 = vmul.f32 %v2603, %v2607
        %v2609 = vadd.f32 %v2608, 0.05243302
        %v2610 = vmul.f32 %v2603, %v2609
        %v2611 = vadd.f32 %v2610, 0.18741608
        %v2612 = vmul.f32 %v2603, %v2611
        %v2613 = vadd.f32 %v2612, 1.1283791
        %v2614 = vmul.f32 %v2460, %v2613
        %v2615 = vmul.f32 %v2603, 3.8918573e-05
        %v2616 = vadd.f32 %v2615, 0.001143296
        %v2617 = vmul.f32 %v2603, %v2616
        %v2618 = vadd.f32 %v2617, 0.014752088
        %v2619 = vmul.f32 %v2603, %v2618
        %v2620 = vadd.f32 %v2619, 0.112945676
        %v2621 = vmul.f32 %v2603, %v2620
        %v2622 = vadd.f32 %v2621, 0.4994258
        %v2623 = vmul.f32 %v2603, %v2622
        %v2624 = vadd.f32 %v2623, 1.0
        %v2625 = vrcp.pop %v2624
        %v2626 = vmul.f32 %v2624, %v2625
        %v2627 = vsub.f32 1.0, %v2626
        %v2628 = vmul.f32 %v2625, %v2627
        %v2629 = vadd.f32 %v2625, %v2628
        %vm2630 = vweird.f32 %v2624
        %vm2631 = vweird.f32 %v2625
        %vm2632 = vmor %vm2630, %vm2631
        %v2633 = vsel %vm2632, %v2625, %v2629
        %v2634 = vand.u32 2147483647, %v2624
        %vm2635 = vcmp.eq.f32.partialorder %v2634, 8.507059e+37
        %v2636 = vand.u32 %v2624, 2147483648
        %v2637 = vor.u32 1.1754944e-38, %v2636
        %v2638 = vsel %vm2635, %v2637, %v2633
        %v2639 = vmul.f32 %v2614, %v2638
        %v2640 = vmin.f32 %v2639, 1.0
        %v2641 = vmax.f32 %v2640, -1.0
        %v2642 = vmul.f32 %v2461, %v2461
        %v2643 = vmin.f32 16.0, %v2642
        %v2644 = vmul.f32 %v2643, 2.1237322e-06
        %v2645 = vadd.f32 %v2644, 0.00028619796
        %v2646 = vmul.f32 %v2643, %v2645
        %v2647 = vadd.f32 %v2646, 0.0036580483
        %v2648 = vmul.f32 %v2643, %v2647
        %v2649 = vadd.f32 %v2648, 0.05243302
        %v2650 = vmul.f32 %v2643, %v2649
        %v2651 = vadd.f32 %v2650, 0.18741608
        %v2652 = vmul.f32 %v2643, %v2651
        %v2653 = vadd.f32 %v2652, 1.1283791
        %v2654 = vmul.f32 %v2461, %v2653
        %v2655 = vmul.f32 %v2643, 3.8918573e-05
        %v2656 = vadd.f32 %v2655, 0.001143296
        %v2657 = vmul.f32 %v2643, %v2656
        %v2658 = vadd.f32 %v2657, 0.014752088
        %v2659 = vmul.f32 %v2643, %v2658
        %v2660 = vadd.f32 %v2659, 0.112945676
        %v2661 = vmul.f32 %v2643, %v2660
        %v2662 = vadd.f32 %v2661, 0.4994258
        %v2663 = vmul.f32 %v2643, %v2662
        %v2664 = vadd.f32 %v2663, 1.0
        %v2665 = vrcp.pop %v2664
        %v2666 = vmul.f32 %v2664, %v2665
        %v2667 = vsub.f32 1.0, %v2666
        %v2668 = vmul.f32 %v2665, %v2667
        %v2669 = vadd.f32 %v2665, %v2668
        %vm2670 = vweird.f32 %v2664
        %vm2671 = vweird.f32 %v2665
        %vm2672 = vmor %vm2670, %vm2671
        %v2673 = vsel %vm2672, %v2665, %v2669
        %v2674 = vand.u32 2147483647, %v2664
        %vm2675 = vcmp.eq.f32.partialorder %v2674, 8.507059e+37
        %v2676 = vand.u32 %v2664, 2147483648
        %v2677 = vor.u32 1.1754944e-38, %v2676
        %v2678 = vsel %vm2675, %v2677, %v2673
        %v2679 = vmul.f32 %v2654, %v2678
        %v2680 = vmin.f32 %v2679, 1.0
        %v2681 = vmax.f32 %v2680, -1.0
        %v2682 = vmul.f32 %v2462, %v2462
        %v2683 = vmin.f32 16.0, %v2682
        %v2684 = vmul.f32 %v2683, 2.1237322e-06
        %v2685 = vadd.f32 %v2684, 0.00028619796
        %v2686 = vmul.f32 %v2683, %v2685
        %v2687 = vadd.f32 %v2686, 0.0036580483
        %v2688 = vmul.f32 %v2683, %v2687
        %v2689 = vadd.f32 %v2688, 0.05243302
        %v2690 = vmul.f32 %v2683, %v2689
        %v2691 = vadd.f32 %v2690, 0.18741608
        %v2692 = vmul.f32 %v2683, %v2691
        %v2693 = vadd.f32 %v2692, 1.1283791
        %v2694 = vmul.f32 %v2462, %v2693
        %v2695 = vmul.f32 %v2683, 3.8918573e-05
        %v2696 = vadd.f32 %v2695, 0.001143296
        %v2697 = vmul.f32 %v2683, %v2696
        %v2698 = vadd.f32 %v2697, 0.014752088
        %v2699 = vmul.f32 %v2683, %v2698
        %v2700 = vadd.f32 %v2699, 0.112945676
        %v2701 = vmul.f32 %v2683, %v2700
        %v2702 = vadd.f32 %v2701, 0.4994258
        %v2703 = vmul.f32 %v2683, %v2702
        %v2704 = vadd.f32 %v2703, 1.0
        %v2705 = vrcp.pop %v2704
        %v2706 = vmul.f32 %v2704, %v2705
        %v2707 = vsub.f32 1.0, %v2706
        %v2708 = vmul.f32 %v2705, %v2707
        %v2709 = vadd.f32 %v2705, %v2708
        %vm2710 = vweird.f32 %v2704
        %vm2711 = vweird.f32 %v2705
        %vm2712 = vmor %vm2710, %vm2711
        %v2713 = vsel %vm2712, %v2705, %v2709
        %v2714 = vand.u32 2147483647, %v2704
        %vm2715 = vcmp.eq.f32.partialorder %v2714, 8.507059e+37
        %v2716 = vand.u32 %v2704, 2147483648
        %v2717 = vor.u32 1.1754944e-38, %v2716
        %v2718 = vsel %vm2715, %v2717, %v2713
        %v2719 = vmul.f32 %v2694, %v2718
        %v2720 = vmin.f32 %v2719, 1.0
        %v2721 = vmax.f32 %v2720, -1.0
        %v2722 = vmul.f32 %v2463, %v2463
        %v2723 = vmin.f32 16.0, %v2722
        %v2724 = vmul.f32 %v2723, 2.1237322e-06
        %v2725 = vadd.f32 %v2724, 0.00028619796
        %v2726 = vmul.f32 %v2723, %v2725
        %v2727 = vadd.f32 %v2726, 0.0036580483
        %v2728 = vmul.f32 %v2723, %v2727
        %v2729 = vadd.f32 %v2728, 0.05243302
        %v2730 = vmul.f32 %v2723, %v2729
        %v2731 = vadd.f32 %v2730, 0.18741608
        %v2732 = vmul.f32 %v2723, %v2731
        %v2733 = vadd.f32 %v2732, 1.1283791
        %v2734 = vmul.f32 %v2463, %v2733
        %v2735 = vmul.f32 %v2723, 3.8918573e-05
        %v2736 = vadd.f32 %v2735, 0.001143296
        %v2737 = vmul.f32 %v2723, %v2736
        %v2738 = vadd.f32 %v2737, 0.014752088
        %v2739 = vmul.f32 %v2723, %v2738
        %v2740 = vadd.f32 %v2739, 0.112945676
        %v2741 = vmul.f32 %v2723, %v2740
        %v2742 = vadd.f32 %v2741, 0.4994258
        %v2743 = vmul.f32 %v2723, %v2742
        %v2744 = vadd.f32 %v2743, 1.0
        %v2745 = vrcp.pop %v2744
        %v2746 = vmul.f32 %v2744, %v2745
        %v2747 = vsub.f32 1.0, %v2746
        %v2748 = vmul.f32 %v2745, %v2747
        %v2749 = vadd.f32 %v2745, %v2748
        %vm2750 = vweird.f32 %v2744
        %vm2751 = vweird.f32 %v2745
        %vm2752 = vmor %vm2750, %vm2751
        %v2753 = vsel %vm2752, %v2745, %v2749
        %v2754 = vand.u32 2147483647, %v2744
        %vm2755 = vcmp.eq.f32.partialorder %v2754, 8.507059e+37
        %v2756 = vand.u32 %v2744, 2147483648
        %v2757 = vor.u32 1.1754944e-38, %v2756
        %v2758 = vsel %vm2755, %v2757, %v2753
        %v2759 = vmul.f32 %v2734, %v2758
        %v2760 = vmin.f32 %v2759, 1.0
        %v2761 = vmax.f32 %v2760, -1.0
        %v2762 = vmul.f32 %v2464, %v2464
        %v2763 = vmin.f32 16.0, %v2762
        %v2764 = vmul.f32 %v2763, 2.1237322e-06
        %v2765 = vadd.f32 %v2764, 0.00028619796
        %v2766 = vmul.f32 %v2763, %v2765
        %v2767 = vadd.f32 %v2766, 0.0036580483
        %v2768 = vmul.f32 %v2763, %v2767
        %v2769 = vadd.f32 %v2768, 0.05243302
        %v2770 = vmul.f32 %v2763, %v2769
        %v2771 = vadd.f32 %v2770, 0.18741608
        %v2772 = vmul.f32 %v2763, %v2771
        %v2773 = vadd.f32 %v2772, 1.1283791
        %v2774 = vmul.f32 %v2464, %v2773
        %v2775 = vmul.f32 %v2763, 3.8918573e-05
        %v2776 = vadd.f32 %v2775, 0.001143296
        %v2777 = vmul.f32 %v2763, %v2776
        %v2778 = vadd.f32 %v2777, 0.014752088
        %v2779 = vmul.f32 %v2763, %v2778
        %v2780 = vadd.f32 %v2779, 0.112945676
        %v2781 = vmul.f32 %v2763, %v2780
        %v2782 = vadd.f32 %v2781, 0.4994258
        %v2783 = vmul.f32 %v2763, %v2782
        %v2784 = vadd.f32 %v2783, 1.0
        %v2785 = vrcp.pop %v2784
        %v2786 = vmul.f32 %v2784, %v2785
        %v2787 = vsub.f32 1.0, %v2786
        %v2788 = vmul.f32 %v2785, %v2787
        %v2789 = vadd.f32 %v2785, %v2788
        %vm2790 = vweird.f32 %v2784
        %vm2791 = vweird.f32 %v2785
        %vm2792 = vmor %vm2790, %vm2791
        %v2793 = vsel %vm2792, %v2785, %v2789
        %v2794 = vand.u32 2147483647, %v2784
        %vm2795 = vcmp.eq.f32.partialorder %v2794, 8.507059e+37
        %v2796 = vand.u32 %v2784, 2147483648
        %v2797 = vor.u32 1.1754944e-38, %v2796
        %v2798 = vsel %vm2795, %v2797, %v2793
        %v2799 = vmul.f32 %v2774, %v2798
        %v2800 = vmin.f32 %v2799, 1.0
        %v2801 = vmax.f32 %v2800, -1.0
        %v2802 = vmul.f32 %v2465, %v2465
        %v2803 = vmin.f32 16.0, %v2802
        %v2804 = vmul.f32 %v2803, 2.1237322e-06
        %v2805 = vadd.f32 %v2804, 0.00028619796
        %v2806 = vmul.f32 %v2803, %v2805
        %v2807 = vadd.f32 %v2806, 0.0036580483
        %v2808 = vmul.f32 %v2803, %v2807
        %v2809 = vadd.f32 %v2808, 0.05243302
        %v2810 = vmul.f32 %v2803, %v2809
        %v2811 = vadd.f32 %v2810, 0.18741608
        %v2812 = vmul.f32 %v2803, %v2811
        %v2813 = vadd.f32 %v2812, 1.1283791
        %v2814 = vmul.f32 %v2465, %v2813
        %v2815 = vmul.f32 %v2803, 3.8918573e-05
        %v2816 = vadd.f32 %v2815, 0.001143296
        %v2817 = vmul.f32 %v2803, %v2816
        %v2818 = vadd.f32 %v2817, 0.014752088
        %v2819 = vmul.f32 %v2803, %v2818
        %v2820 = vadd.f32 %v2819, 0.112945676
        %v2821 = vmul.f32 %v2803, %v2820
        %v2822 = vadd.f32 %v2821, 0.4994258
        %v2823 = vmul.f32 %v2803, %v2822
        %v2824 = vadd.f32 %v2823, 1.0
        %v2825 = vrcp.pop %v2824
        %v2826 = vmul.f32 %v2824, %v2825
        %v2827 = vsub.f32 1.0, %v2826
        %v2828 = vmul.f32 %v2825, %v2827
        %v2829 = vadd.f32 %v2825, %v2828
        %vm2830 = vweird.f32 %v2824
        %vm2831 = vweird.f32 %v2825
        %vm2832 = vmor %vm2830, %vm2831
        %v2833 = vsel %vm2832, %v2825, %v2829
        %v2834 = vand.u32 2147483647, %v2824
        %vm2835 = vcmp.eq.f32.partialorder %v2834, 8.507059e+37
        %v2836 = vand.u32 %v2824, 2147483648
        %v2837 = vor.u32 1.1754944e-38, %v2836
        %v2838 = vsel %vm2835, %v2837, %v2833
        %v2839 = vmul.f32 %v2814, %v2838
        %v2840 = vmin.f32 %v2839, 1.0
        %v2841 = vmax.f32 %v2840, -1.0
        %v2842 = vmul.f32 %v2466, %v2466
        %v2843 = vmin.f32 16.0, %v2842
        %v2844 = vmul.f32 %v2843, 2.1237322e-06
        %v2845 = vadd.f32 %v2844, 0.00028619796
        %v2846 = vmul.f32 %v2843, %v2845
        %v2847 = vadd.f32 %v2846, 0.0036580483
        %v2848 = vmul.f32 %v2843, %v2847
        %v2849 = vadd.f32 %v2848, 0.05243302
        %v2850 = vmul.f32 %v2843, %v2849
        %v2851 = vadd.f32 %v2850, 0.18741608
        %v2852 = vmul.f32 %v2843, %v2851
        %v2853 = vadd.f32 %v2852, 1.1283791
        %v2854 = vmul.f32 %v2466, %v2853
        %v2855 = vmul.f32 %v2843, 3.8918573e-05
        %v2856 = vadd.f32 %v2855, 0.001143296
        %v2857 = vmul.f32 %v2843, %v2856
        %v2858 = vadd.f32 %v2857, 0.014752088
        %v2859 = vmul.f32 %v2843, %v2858
        %v2860 = vadd.f32 %v2859, 0.112945676
        %v2861 = vmul.f32 %v2843, %v2860
        %v2862 = vadd.f32 %v2861, 0.4994258
        %v2863 = vmul.f32 %v2843, %v2862
        %v2864 = vadd.f32 %v2863, 1.0
        %v2865 = vrcp.pop %v2864
        %v2866 = vmul.f32 %v2864, %v2865
        %v2867 = vsub.f32 1.0, %v2866
        %v2868 = vmul.f32 %v2865, %v2867
        %v2869 = vadd.f32 %v2865, %v2868
        %vm2870 = vweird.f32 %v2864
        %vm2871 = vweird.f32 %v2865
        %vm2872 = vmor %vm2870, %vm2871
        %v2873 = vsel %vm2872, %v2865, %v2869
        %v2874 = vand.u32 2147483647, %v2864
        %vm2875 = vcmp.eq.f32.partialorder %v2874, 8.507059e+37
        %v2876 = vand.u32 %v2864, 2147483648
        %v2877 = vor.u32 1.1754944e-38, %v2876
        %v2878 = vsel %vm2875, %v2877, %v2873
        %v2879 = vmul.f32 %v2854, %v2878
        %v2880 = vmin.f32 %v2879, 1.0
        %v2881 = vmax.f32 %v2880, -1.0
        %v2882 = vmul.f32 %v2467, %v2467
        %v2883 = vmin.f32 16.0, %v2882
        %v2884 = vmul.f32 %v2883, 2.1237322e-06
        %v2885 = vadd.f32 %v2884, 0.00028619796
        %v2886 = vmul.f32 %v2883, %v2885
        %v2887 = vadd.f32 %v2886, 0.0036580483
        %v2888 = vmul.f32 %v2883, %v2887
        %v2889 = vadd.f32 %v2888, 0.05243302
        %v2890 = vmul.f32 %v2883, %v2889
        %v2891 = vadd.f32 %v2890, 0.18741608
        %v2892 = vmul.f32 %v2883, %v2891
        %v2893 = vadd.f32 %v2892, 1.1283791
        %v2894 = vmul.f32 %v2467, %v2893
        %v2895 = vmul.f32 %v2883, 3.8918573e-05
        %v2896 = vadd.f32 %v2895, 0.001143296
        %v2897 = vmul.f32 %v2883, %v2896
        %v2898 = vadd.f32 %v2897, 0.014752088
        %v2899 = vmul.f32 %v2883, %v2898
        %v2900 = vadd.f32 %v2899, 0.112945676
        %v2901 = vmul.f32 %v2883, %v2900
        %v2902 = vadd.f32 %v2901, 0.4994258
        %v2903 = vmul.f32 %v2883, %v2902
        %v2904 = vadd.f32 %v2903, 1.0
        %v2905 = vrcp.pop %v2904
        %v2906 = vmul.f32 %v2904, %v2905
        %v2907 = vsub.f32 1.0, %v2906
        %v2908 = vmul.f32 %v2905, %v2907
        %v2909 = vadd.f32 %v2905, %v2908
        %vm2910 = vweird.f32 %v2904
        %vm2911 = vweird.f32 %v2905
        %vm2912 = vmor %vm2910, %vm2911
        %v2913 = vsel %vm2912, %v2905, %v2909
        %v2914 = vand.u32 2147483647, %v2904
        %vm2915 = vcmp.eq.f32.partialorder %v2914, 8.507059e+37
        %v2916 = vand.u32 %v2904, 2147483648
        %v2917 = vor.u32 1.1754944e-38, %v2916
        %v2918 = vsel %vm2915, %v2917, %v2913
        %v2919 = vmul.f32 %v2894, %v2918
        %v2920 = vmin.f32 %v2919, 1.0
        %v2921 = vmax.f32 %v2920, -1.0
        %v2922 = vmul.f32 %v2468, %v2468
        %v2923 = vmin.f32 16.0, %v2922
        %v2924 = vmul.f32 %v2923, 2.1237322e-06
        %v2925 = vadd.f32 %v2924, 0.00028619796
        %v2926 = vmul.f32 %v2923, %v2925
        %v2927 = vadd.f32 %v2926, 0.0036580483
        %v2928 = vmul.f32 %v2923, %v2927
        %v2929 = vadd.f32 %v2928, 0.05243302
        %v2930 = vmul.f32 %v2923, %v2929
        %v2931 = vadd.f32 %v2930, 0.18741608
        %v2932 = vmul.f32 %v2923, %v2931
        %v2933 = vadd.f32 %v2932, 1.1283791
        %v2934 = vmul.f32 %v2468, %v2933
        %v2935 = vmul.f32 %v2923, 3.8918573e-05
        %v2936 = vadd.f32 %v2935, 0.001143296
        %v2937 = vmul.f32 %v2923, %v2936
        %v2938 = vadd.f32 %v2937, 0.014752088
        %v2939 = vmul.f32 %v2923, %v2938
        %v2940 = vadd.f32 %v2939, 0.112945676
        %v2941 = vmul.f32 %v2923, %v2940
        %v2942 = vadd.f32 %v2941, 0.4994258
        %v2943 = vmul.f32 %v2923, %v2942
        %v2944 = vadd.f32 %v2943, 1.0
        %v2945 = vrcp.pop %v2944
        %v2946 = vmul.f32 %v2944, %v2945
        %v2947 = vsub.f32 1.0, %v2946
        %v2948 = vmul.f32 %v2945, %v2947
        %v2949 = vadd.f32 %v2945, %v2948
        %vm2950 = vweird.f32 %v2944
        %vm2951 = vweird.f32 %v2945
        %vm2952 = vmor %vm2950, %vm2951
        %v2953 = vsel %vm2952, %v2945, %v2949
        %v2954 = vand.u32 2147483647, %v2944
        %vm2955 = vcmp.eq.f32.partialorder %v2954, 8.507059e+37
        %v2956 = vand.u32 %v2944, 2147483648
        %v2957 = vor.u32 1.1754944e-38, %v2956
        %v2958 = vsel %vm2955, %v2957, %v2953
        %v2959 = vmul.f32 %v2934, %v2958
        %v2960 = vmin.f32 %v2959, 1.0
        %v2961 = vmax.f32 %v2960, -1.0
        %v2962 = vmul.f32 %v2469, %v2469
        %v2963 = vmin.f32 16.0, %v2962
        %v2964 = vmul.f32 %v2963, 2.1237322e-06
        %v2965 = vadd.f32 %v2964, 0.00028619796
        %v2966 = vmul.f32 %v2963, %v2965
        %v2967 = vadd.f32 %v2966, 0.0036580483
        %v2968 = vmul.f32 %v2963, %v2967
        %v2969 = vadd.f32 %v2968, 0.05243302
        %v2970 = vmul.f32 %v2963, %v2969
        %v2971 = vadd.f32 %v2970, 0.18741608
        %v2972 = vmul.f32 %v2963, %v2971
        %v2973 = vadd.f32 %v2972, 1.1283791
        %v2974 = vmul.f32 %v2469, %v2973
        %v2975 = vmul.f32 %v2963, 3.8918573e-05
        %v2976 = vadd.f32 %v2975, 0.001143296
        %v2977 = vmul.f32 %v2963, %v2976
        %v2978 = vadd.f32 %v2977, 0.014752088
        %v2979 = vmul.f32 %v2963, %v2978
        %v2980 = vadd.f32 %v2979, 0.112945676
        %v2981 = vmul.f32 %v2963, %v2980
        %v2982 = vadd.f32 %v2981, 0.4994258
        %v2983 = vmul.f32 %v2963, %v2982
        %v2984 = vadd.f32 %v2983, 1.0
        %v2985 = vrcp.pop %v2984
        %v2986 = vmul.f32 %v2984, %v2985
        %v2987 = vsub.f32 1.0, %v2986
        %v2988 = vmul.f32 %v2985, %v2987
        %v2989 = vadd.f32 %v2985, %v2988
        %vm2990 = vweird.f32 %v2984
        %vm2991 = vweird.f32 %v2985
        %vm2992 = vmor %vm2990, %vm2991
        %v2993 = vsel %vm2992, %v2985, %v2989
        %v2994 = vand.u32 2147483647, %v2984
        %vm2995 = vcmp.eq.f32.partialorder %v2994, 8.507059e+37
        %v2996 = vand.u32 %v2984, 2147483648
        %v2997 = vor.u32 1.1754944e-38, %v2996
        %v2998 = vsel %vm2995, %v2997, %v2993
        %v2999 = vmul.f32 %v2974, %v2998
        %v3000 = vmin.f32 %v2999, 1.0
        %v3001 = vmax.f32 %v3000, -1.0
        %v3002 = vmul.f32 %v2470, %v2470
        %v3003 = vmin.f32 16.0, %v3002
        %v3004 = vmul.f32 %v3003, 2.1237322e-06
        %v3005 = vadd.f32 %v3004, 0.00028619796
        %v3006 = vmul.f32 %v3003, %v3005
        %v3007 = vadd.f32 %v3006, 0.0036580483
        %v3008 = vmul.f32 %v3003, %v3007
        %v3009 = vadd.f32 %v3008, 0.05243302
        %v3010 = vmul.f32 %v3003, %v3009
        %v3011 = vadd.f32 %v3010, 0.18741608
        %v3012 = vmul.f32 %v3003, %v3011
        %v3013 = vadd.f32 %v3012, 1.1283791
        %v3014 = vmul.f32 %v2470, %v3013
        %v3015 = vmul.f32 %v3003, 3.8918573e-05
        %v3016 = vadd.f32 %v3015, 0.001143296
        %v3017 = vmul.f32 %v3003, %v3016
        %v3018 = vadd.f32 %v3017, 0.014752088
        %v3019 = vmul.f32 %v3003, %v3018
        %v3020 = vadd.f32 %v3019, 0.112945676
        %v3021 = vmul.f32 %v3003, %v3020
        %v3022 = vadd.f32 %v3021, 0.4994258
        %v3023 = vmul.f32 %v3003, %v3022
        %v3024 = vadd.f32 %v3023, 1.0
        %v3025 = vrcp.pop %v3024
        %v3026 = vmul.f32 %v3024, %v3025
        %v3027 = vsub.f32 1.0, %v3026
        %v3028 = vmul.f32 %v3025, %v3027
        %v3029 = vadd.f32 %v3025, %v3028
        %vm3030 = vweird.f32 %v3024
        %vm3031 = vweird.f32 %v3025
        %vm3032 = vmor %vm3030, %vm3031
        %v3033 = vsel %vm3032, %v3025, %v3029
        %v3034 = vand.u32 2147483647, %v3024
        %vm3035 = vcmp.eq.f32.partialorder %v3034, 8.507059e+37
        %v3036 = vand.u32 %v3024, 2147483648
        %v3037 = vor.u32 1.1754944e-38, %v3036
        %v3038 = vsel %vm3035, %v3037, %v3033
        %v3039 = vmul.f32 %v3014, %v3038
        %v3040 = vmin.f32 %v3039, 1.0
        %v3041 = vmax.f32 %v3040, -1.0
        %v3042 = vmul.f32 %v2471, %v2471
        %v3043 = vmin.f32 16.0, %v3042
        %v3044 = vmul.f32 %v3043, 2.1237322e-06
        %v3045 = vadd.f32 %v3044, 0.00028619796
        %v3046 = vmul.f32 %v3043, %v3045
        %v3047 = vadd.f32 %v3046, 0.0036580483
        %v3048 = vmul.f32 %v3043, %v3047
        %v3049 = vadd.f32 %v3048, 0.05243302
        %v3050 = vmul.f32 %v3043, %v3049
        %v3051 = vadd.f32 %v3050, 0.18741608
        %v3052 = vmul.f32 %v3043, %v3051
        %v3053 = vadd.f32 %v3052, 1.1283791
        %v3054 = vmul.f32 %v2471, %v3053
        %v3055 = vmul.f32 %v3043, 3.8918573e-05
        %v3056 = vadd.f32 %v3055, 0.001143296
        %v3057 = vmul.f32 %v3043, %v3056
        %v3058 = vadd.f32 %v3057, 0.014752088
        %v3059 = vmul.f32 %v3043, %v3058
        %v3060 = vadd.f32 %v3059, 0.112945676
        %v3061 = vmul.f32 %v3043, %v3060
        %v3062 = vadd.f32 %v3061, 0.4994258
        %v3063 = vmul.f32 %v3043, %v3062
        %v3064 = vadd.f32 %v3063, 1.0
        %v3065 = vrcp.pop %v3064
        %v3066 = vmul.f32 %v3064, %v3065
        %v3067 = vsub.f32 1.0, %v3066
        %v3068 = vmul.f32 %v3065, %v3067
        %v3069 = vadd.f32 %v3065, %v3068
        %vm3070 = vweird.f32 %v3064
        %vm3071 = vweird.f32 %v3065
        %vm3072 = vmor %vm3070, %vm3071
        %v3073 = vsel %vm3072, %v3065, %v3069
        %v3074 = vand.u32 2147483647, %v3064
        %vm3075 = vcmp.eq.f32.partialorder %v3074, 8.507059e+37
        %v3076 = vand.u32 %v3064, 2147483648
        %v3077 = vor.u32 1.1754944e-38, %v3076
        %v3078 = vsel %vm3075, %v3077, %v3073
        %v3079 = vmul.f32 %v3054, %v3078
        %v3080 = vmin.f32 %v3079, 1.0
        %v3081 = vmax.f32 %v3080, -1.0
        %v3082 = vmul.f32 %v2472, %v2472
        %v3083 = vmin.f32 16.0, %v3082
        %v3084 = vmul.f32 %v3083, 2.1237322e-06
        %v3085 = vadd.f32 %v3084, 0.00028619796
        %v3086 = vmul.f32 %v3083, %v3085
        %v3087 = vadd.f32 %v3086, 0.0036580483
        %v3088 = vmul.f32 %v3083, %v3087
        %v3089 = vadd.f32 %v3088, 0.05243302
        %v3090 = vmul.f32 %v3083, %v3089
        %v3091 = vadd.f32 %v3090, 0.18741608
        %v3092 = vmul.f32 %v3083, %v3091
        %v3093 = vadd.f32 %v3092, 1.1283791
        %v3094 = vmul.f32 %v2472, %v3093
        %v3095 = vmul.f32 %v3083, 3.8918573e-05
        %v3096 = vadd.f32 %v3095, 0.001143296
        %v3097 = vmul.f32 %v3083, %v3096
        %v3098 = vadd.f32 %v3097, 0.014752088
        %v3099 = vmul.f32 %v3083, %v3098
        %v3100 = vadd.f32 %v3099, 0.112945676
        %v3101 = vmul.f32 %v3083, %v3100
        %v3102 = vadd.f32 %v3101, 0.4994258
        %v3103 = vmul.f32 %v3083, %v3102
        %v3104 = vadd.f32 %v3103, 1.0
        %v3105 = vrcp.pop %v3104
        %v3106 = vmul.f32 %v3104, %v3105
        %v3107 = vsub.f32 1.0, %v3106
        %v3108 = vmul.f32 %v3105, %v3107
        %v3109 = vadd.f32 %v3105, %v3108
        %vm3110 = vweird.f32 %v3104
        %vm3111 = vweird.f32 %v3105
        %vm3112 = vmor %vm3110, %vm3111
        %v3113 = vsel %vm3112, %v3105, %v3109
        %v3114 = vand.u32 2147483647, %v3104
        %vm3115 = vcmp.eq.f32.partialorder %v3114, 8.507059e+37
        %v3116 = vand.u32 %v3104, 2147483648
        %v3117 = vor.u32 1.1754944e-38, %v3116
        %v3118 = vsel %vm3115, %v3117, %v3113
        %v3119 = vmul.f32 %v3094, %v3118
        %v3120 = vmin.f32 %v3119, 1.0
        %v3121 = vmax.f32 %v3120, -1.0
        %v3122 = vmul.f32 %v2473, %v2473
        %v3123 = vmin.f32 16.0, %v3122
        %v3124 = vmul.f32 %v3123, 2.1237322e-06
        %v3125 = vadd.f32 %v3124, 0.00028619796
        %v3126 = vmul.f32 %v3123, %v3125
        %v3127 = vadd.f32 %v3126, 0.0036580483
        %v3128 = vmul.f32 %v3123, %v3127
        %v3129 = vadd.f32 %v3128, 0.05243302
        %v3130 = vmul.f32 %v3123, %v3129
        %v3131 = vadd.f32 %v3130, 0.18741608
        %v3132 = vmul.f32 %v3123, %v3131
        %v3133 = vadd.f32 %v3132, 1.1283791
        %v3134 = vmul.f32 %v2473, %v3133
        %v3135 = vmul.f32 %v3123, 3.8918573e-05
        %v3136 = vadd.f32 %v3135, 0.001143296
        %v3137 = vmul.f32 %v3123, %v3136
        %v3138 = vadd.f32 %v3137, 0.014752088
        %v3139 = vmul.f32 %v3123, %v3138
        %v3140 = vadd.f32 %v3139, 0.112945676
        %v3141 = vmul.f32 %v3123, %v3140
        %v3142 = vadd.f32 %v3141, 0.4994258
        %v3143 = vmul.f32 %v3123, %v3142
        %v3144 = vadd.f32 %v3143, 1.0
        %v3145 = vrcp.pop %v3144
        %v3146 = vmul.f32 %v3144, %v3145
        %v3147 = vsub.f32 1.0, %v3146
        %v3148 = vmul.f32 %v3145, %v3147
        %v3149 = vadd.f32 %v3145, %v3148
        %vm3150 = vweird.f32 %v3144
        %vm3151 = vweird.f32 %v3145
        %vm3152 = vmor %vm3150, %vm3151
        %v3153 = vsel %vm3152, %v3145, %v3149
        %v3154 = vand.u32 2147483647, %v3144
        %vm3155 = vcmp.eq.f32.partialorder %v3154, 8.507059e+37
        %v3156 = vand.u32 %v3144, 2147483648
        %v3157 = vor.u32 1.1754944e-38, %v3156
        %v3158 = vsel %vm3155, %v3157, %v3153
        %v3159 = vmul.f32 %v3134, %v3158
        %v3160 = vmin.f32 %v3159, 1.0
        %v3161 = vmax.f32 %v3160, -1.0
        %v3162 = vmul.f32 %v2474, %v2474
        %v3163 = vmin.f32 16.0, %v3162
        %v3164 = vmul.f32 %v3163, 2.1237322e-06
        %v3165 = vadd.f32 %v3164, 0.00028619796
        %v3166 = vmul.f32 %v3163, %v3165
        %v3167 = vadd.f32 %v3166, 0.0036580483
        %v3168 = vmul.f32 %v3163, %v3167
        %v3169 = vadd.f32 %v3168, 0.05243302
        %v3170 = vmul.f32 %v3163, %v3169
        %v3171 = vadd.f32 %v3170, 0.18741608
        %v3172 = vmul.f32 %v3163, %v3171
        %v3173 = vadd.f32 %v3172, 1.1283791
        %v3174 = vmul.f32 %v2474, %v3173
        %v3175 = vmul.f32 %v3163, 3.8918573e-05
        %v3176 = vadd.f32 %v3175, 0.001143296
        %v3177 = vmul.f32 %v3163, %v3176
        %v3178 = vadd.f32 %v3177, 0.014752088
        %v3179 = vmul.f32 %v3163, %v3178
        %v3180 = vadd.f32 %v3179, 0.112945676
        %v3181 = vmul.f32 %v3163, %v3180
        %v3182 = vadd.f32 %v3181, 0.4994258
        %v3183 = vmul.f32 %v3163, %v3182
        %v3184 = vadd.f32 %v3183, 1.0
        %v3185 = vrcp.pop %v3184
        %v3186 = vmul.f32 %v3184, %v3185
        %v3187 = vsub.f32 1.0, %v3186
        %v3188 = vmul.f32 %v3185, %v3187
        %v3189 = vadd.f32 %v3185, %v3188
        %vm3190 = vweird.f32 %v3184
        %vm3191 = vweird.f32 %v3185
        %vm3192 = vmor %vm3190, %vm3191
        %v3193 = vsel %vm3192, %v3185, %v3189
        %v3194 = vand.u32 2147483647, %v3184
        %vm3195 = vcmp.eq.f32.partialorder %v3194, 8.507059e+37
        %v3196 = vand.u32 %v3184, 2147483648
        %v3197 = vor.u32 1.1754944e-38, %v3196
        %v3198 = vsel %vm3195, %v3197, %v3193
        %v3199 = vmul.f32 %v3174, %v3198
        %v3200 = vmin.f32 %v3199, 1.0
        %v3201 = vmax.f32 %v3200, -1.0
        %v3202 = vmul.f32 %v2475, %v2475
        %v3203 = vmin.f32 16.0, %v3202
        %v3204 = vmul.f32 %v3203, 2.1237322e-06
        %v3205 = vadd.f32 %v3204, 0.00028619796
        %v3206 = vmul.f32 %v3203, %v3205
        %v3207 = vadd.f32 %v3206, 0.0036580483
        %v3208 = vmul.f32 %v3203, %v3207
        %v3209 = vadd.f32 %v3208, 0.05243302
        %v3210 = vmul.f32 %v3203, %v3209
        %v3211 = vadd.f32 %v3210, 0.18741608
        %v3212 = vmul.f32 %v3203, %v3211
        %v3213 = vadd.f32 %v3212, 1.1283791
        %v3214 = vmul.f32 %v2475, %v3213
        %v3215 = vmul.f32 %v3203, 3.8918573e-05
        %v3216 = vadd.f32 %v3215, 0.001143296
        %v3217 = vmul.f32 %v3203, %v3216
        %v3218 = vadd.f32 %v3217, 0.014752088
        %v3219 = vmul.f32 %v3203, %v3218
        %v3220 = vadd.f32 %v3219, 0.112945676
        %v3221 = vmul.f32 %v3203, %v3220
        %v3222 = vadd.f32 %v3221, 0.4994258
        %v3223 = vmul.f32 %v3203, %v3222
        %v3224 = vadd.f32 %v3223, 1.0
        %v3225 = vrcp.pop %v3224
        %v3226 = vmul.f32 %v3224, %v3225
        %v3227 = vsub.f32 1.0, %v3226
        %v3228 = vmul.f32 %v3225, %v3227
        %v3229 = vadd.f32 %v3225, %v3228
        %vm3230 = vweird.f32 %v3224
        %vm3231 = vweird.f32 %v3225
        %vm3232 = vmor %vm3230, %vm3231
        %v3233 = vsel %vm3232, %v3225, %v3229
        %v3234 = vand.u32 2147483647, %v3224
        %vm3235 = vcmp.eq.f32.partialorder %v3234, 8.507059e+37
        %v3236 = vand.u32 %v3224, 2147483648
        %v3237 = vor.u32 1.1754944e-38, %v3236
        %v3238 = vsel %vm3235, %v3237, %v3233
        %v3239 = vmul.f32 %v3214, %v3238
        %v3240 = vmin.f32 %v3239, 1.0
        %v3241 = vmax.f32 %v3240, -1.0
        %v3242 = vmul.f32 %v2476, %v2476
        %v3243 = vmin.f32 16.0, %v3242
        %v3244 = vmul.f32 %v3243, 2.1237322e-06
        %v3245 = vadd.f32 %v3244, 0.00028619796
        %v3246 = vmul.f32 %v3243, %v3245
        %v3247 = vadd.f32 %v3246, 0.0036580483
        %v3248 = vmul.f32 %v3243, %v3247
        %v3249 = vadd.f32 %v3248, 0.05243302
        %v3250 = vmul.f32 %v3243, %v3249
        %v3251 = vadd.f32 %v3250, 0.18741608
        %v3252 = vmul.f32 %v3243, %v3251
        %v3253 = vadd.f32 %v3252, 1.1283791
        %v3254 = vmul.f32 %v2476, %v3253
        %v3255 = vmul.f32 %v3243, 3.8918573e-05
        %v3256 = vadd.f32 %v3255, 0.001143296
        %v3257 = vmul.f32 %v3243, %v3256
        %v3258 = vadd.f32 %v3257, 0.014752088
        %v3259 = vmul.f32 %v3243, %v3258
        %v3260 = vadd.f32 %v3259, 0.112945676
        %v3261 = vmul.f32 %v3243, %v3260
        %v3262 = vadd.f32 %v3261, 0.4994258
        %v3263 = vmul.f32 %v3243, %v3262
        %v3264 = vadd.f32 %v3263, 1.0
        %v3265 = vrcp.pop %v3264
        %v3266 = vmul.f32 %v3264, %v3265
        %v3267 = vsub.f32 1.0, %v3266
        %v3268 = vmul.f32 %v3265, %v3267
        %v3269 = vadd.f32 %v3265, %v3268
        %vm3270 = vweird.f32 %v3264
        %vm3271 = vweird.f32 %v3265
        %vm3272 = vmor %vm3270, %vm3271
        %v3273 = vsel %vm3272, %v3265, %v3269
        %v3274 = vand.u32 2147483647, %v3264
        %vm3275 = vcmp.eq.f32.partialorder %v3274, 8.507059e+37
        %v3276 = vand.u32 %v3264, 2147483648
        %v3277 = vor.u32 1.1754944e-38, %v3276
        %v3278 = vsel %vm3275, %v3277, %v3273
        %v3279 = vmul.f32 %v3254, %v3278
        %v3280 = vmin.f32 %v3279, 1.0
        %v3281 = vmax.f32 %v3280, -1.0
        %v3282 = vmul.f32 %v2477, %v2477
        %v3283 = vmin.f32 16.0, %v3282
        %v3284 = vmul.f32 %v3283, 2.1237322e-06
        %v3285 = vadd.f32 %v3284, 0.00028619796
        %v3286 = vmul.f32 %v3283, %v3285
        %v3287 = vadd.f32 %v3286, 0.0036580483
        %v3288 = vmul.f32 %v3283, %v3287
        %v3289 = vadd.f32 %v3288, 0.05243302
        %v3290 = vmul.f32 %v3283, %v3289
        %v3291 = vadd.f32 %v3290, 0.18741608
        %v3292 = vmul.f32 %v3283, %v3291
        %v3293 = vadd.f32 %v3292, 1.1283791
        %v3294 = vmul.f32 %v2477, %v3293
        %v3295 = vmul.f32 %v3283, 3.8918573e-05
        %v3296 = vadd.f32 %v3295, 0.001143296
        %v3297 = vmul.f32 %v3283, %v3296
        %v3298 = vadd.f32 %v3297, 0.014752088
        %v3299 = vmul.f32 %v3283, %v3298
        %v3300 = vadd.f32 %v3299, 0.112945676
        %v3301 = vmul.f32 %v3283, %v3300
        %v3302 = vadd.f32 %v3301, 0.4994258
        %v3303 = vmul.f32 %v3283, %v3302
        %v3304 = vadd.f32 %v3303, 1.0
        %v3305 = vrcp.pop %v3304
        %v3306 = vmul.f32 %v3304, %v3305
        %v3307 = vsub.f32 1.0, %v3306
        %v3308 = vmul.f32 %v3305, %v3307
        %v3309 = vadd.f32 %v3305, %v3308
        %vm3310 = vweird.f32 %v3304
        %vm3311 = vweird.f32 %v3305
        %vm3312 = vmor %vm3310, %vm3311
        %v3313 = vsel %vm3312, %v3305, %v3309
        %v3314 = vand.u32 2147483647, %v3304
        %vm3315 = vcmp.eq.f32.partialorder %v3314, 8.507059e+37
        %v3316 = vand.u32 %v3304, 2147483648
        %v3317 = vor.u32 1.1754944e-38, %v3316
        %v3318 = vsel %vm3315, %v3317, %v3313
        %v3319 = vmul.f32 %v3294, %v3318
        %v3320 = vmin.f32 %v3319, 1.0
        %v3321 = vmax.f32 %v3320, -1.0
        %v3322 = vmul.f32 %v2478, %v2478
        %v3323 = vmin.f32 16.0, %v3322
        %v3324 = vmul.f32 %v3323, 2.1237322e-06
        %v3325 = vadd.f32 %v3324, 0.00028619796
        %v3326 = vmul.f32 %v3323, %v3325
        %v3327 = vadd.f32 %v3326, 0.0036580483
        %v3328 = vmul.f32 %v3323, %v3327
        %v3329 = vadd.f32 %v3328, 0.05243302
        %v3330 = vmul.f32 %v3323, %v3329
        %v3331 = vadd.f32 %v3330, 0.18741608
        %v3332 = vmul.f32 %v3323, %v3331
        %v3333 = vadd.f32 %v3332, 1.1283791
        %v3334 = vmul.f32 %v2478, %v3333
        %v3335 = vmul.f32 %v3323, 3.8918573e-05
        %v3336 = vadd.f32 %v3335, 0.001143296
        %v3337 = vmul.f32 %v3323, %v3336
        %v3338 = vadd.f32 %v3337, 0.014752088
        %v3339 = vmul.f32 %v3323, %v3338
        %v3340 = vadd.f32 %v3339, 0.112945676
        %v3341 = vmul.f32 %v3323, %v3340
        %v3342 = vadd.f32 %v3341, 0.4994258
        %v3343 = vmul.f32 %v3323, %v3342
        %v3344 = vadd.f32 %v3343, 1.0
        %v3345 = vrcp.pop %v3344
        %v3346 = vmul.f32 %v3344, %v3345
        %v3347 = vsub.f32 1.0, %v3346
        %v3348 = vmul.f32 %v3345, %v3347
        %v3349 = vadd.f32 %v3345, %v3348
        %vm3350 = vweird.f32 %v3344
        %vm3351 = vweird.f32 %v3345
        %vm3352 = vmor %vm3350, %vm3351
        %v3353 = vsel %vm3352, %v3345, %v3349
        %v3354 = vand.u32 2147483647, %v3344
        %vm3355 = vcmp.eq.f32.partialorder %v3354, 8.507059e+37
        %v3356 = vand.u32 %v3344, 2147483648
        %v3357 = vor.u32 1.1754944e-38, %v3356
        %v3358 = vsel %vm3355, %v3357, %v3353
        %v3359 = vmul.f32 %v3334, %v3358
        %v3360 = vmin.f32 %v3359, 1.0
        %v3361 = vmax.f32 %v3360, -1.0
        %v3362 = vmul.f32 %v2479, %v2479
        %v3363 = vmin.f32 16.0, %v3362
        %v3364 = vmul.f32 %v3363, 2.1237322e-06
        %v3365 = vadd.f32 %v3364, 0.00028619796
        %v3366 = vmul.f32 %v3363, %v3365
        %v3367 = vadd.f32 %v3366, 0.0036580483
        %v3368 = vmul.f32 %v3363, %v3367
        %v3369 = vadd.f32 %v3368, 0.05243302
        %v3370 = vmul.f32 %v3363, %v3369
        %v3371 = vadd.f32 %v3370, 0.18741608
        %v3372 = vmul.f32 %v3363, %v3371
        %v3373 = vadd.f32 %v3372, 1.1283791
        %v3374 = vmul.f32 %v2479, %v3373
        %v3375 = vmul.f32 %v3363, 3.8918573e-05
        %v3376 = vadd.f32 %v3375, 0.001143296
        %v3377 = vmul.f32 %v3363, %v3376
        %v3378 = vadd.f32 %v3377, 0.014752088
        %v3379 = vmul.f32 %v3363, %v3378
        %v3380 = vadd.f32 %v3379, 0.112945676
        %v3381 = vmul.f32 %v3363, %v3380
        %v3382 = vadd.f32 %v3381, 0.4994258
        %v3383 = vmul.f32 %v3363, %v3382
        %v3384 = vadd.f32 %v3383, 1.0
        %v3385 = vrcp.pop %v3384
        %v3386 = vmul.f32 %v3384, %v3385
        %v3387 = vsub.f32 1.0, %v3386
        %v3388 = vmul.f32 %v3385, %v3387
        %v3389 = vadd.f32 %v3385, %v3388
        %vm3390 = vweird.f32 %v3384
        %vm3391 = vweird.f32 %v3385
        %vm3392 = vmor %vm3390, %vm3391
        %v3393 = vsel %vm3392, %v3385, %v3389
        %v3394 = vand.u32 2147483647, %v3384
        %vm3395 = vcmp.eq.f32.partialorder %v3394, 8.507059e+37
        %v3396 = vand.u32 %v3384, 2147483648
        %v3397 = vor.u32 1.1754944e-38, %v3396
        %v3398 = vsel %vm3395, %v3397, %v3393
        %v3399 = vmul.f32 %v3374, %v3398
        %v3400 = vmin.f32 %v3399, 1.0
        %v3401 = vmax.f32 %v3400, -1.0
        %v3402 = vmul.f32 %v2480, %v2480
        %v3403 = vmin.f32 16.0, %v3402
        %v3404 = vmul.f32 %v3403, 2.1237322e-06
        %v3405 = vadd.f32 %v3404, 0.00028619796
        %v3406 = vmul.f32 %v3403, %v3405
        %v3407 = vadd.f32 %v3406, 0.0036580483
        %v3408 = vmul.f32 %v3403, %v3407
        %v3409 = vadd.f32 %v3408, 0.05243302
        %v3410 = vmul.f32 %v3403, %v3409
        %v3411 = vadd.f32 %v3410, 0.18741608
        %v3412 = vmul.f32 %v3403, %v3411
        %v3413 = vadd.f32 %v3412, 1.1283791
        %v3414 = vmul.f32 %v2480, %v3413
        %v3415 = vmul.f32 %v3403, 3.8918573e-05
        %v3416 = vadd.f32 %v3415, 0.001143296
        %v3417 = vmul.f32 %v3403, %v3416
        %v3418 = vadd.f32 %v3417, 0.014752088
        %v3419 = vmul.f32 %v3403, %v3418
        %v3420 = vadd.f32 %v3419, 0.112945676
        %v3421 = vmul.f32 %v3403, %v3420
        %v3422 = vadd.f32 %v3421, 0.4994258
        %v3423 = vmul.f32 %v3403, %v3422
        %v3424 = vadd.f32 %v3423, 1.0
        %v3425 = vrcp.pop %v3424
        %v3426 = vmul.f32 %v3424, %v3425
        %v3427 = vsub.f32 1.0, %v3426
        %v3428 = vmul.f32 %v3425, %v3427
        %v3429 = vadd.f32 %v3425, %v3428
        %vm3430 = vweird.f32 %v3424
        %vm3431 = vweird.f32 %v3425
        %vm3432 = vmor %vm3430, %vm3431
        %v3433 = vsel %vm3432, %v3425, %v3429
        %v3434 = vand.u32 2147483647, %v3424
        %vm3435 = vcmp.eq.f32.partialorder %v3434, 8.507059e+37
        %v3436 = vand.u32 %v3424, 2147483648
        %v3437 = vor.u32 1.1754944e-38, %v3436
        %v3438 = vsel %vm3435, %v3437, %v3433
        %v3439 = vmul.f32 %v3414, %v3438
        %v3440 = vmin.f32 %v3439, 1.0
        %v3441 = vmax.f32 %v3440, -1.0
        %v3442 = vmul.f32 %v2481, %v2481
        %v3443 = vmin.f32 16.0, %v3442
        %v3444 = vmul.f32 %v3443, 2.1237322e-06
        %v3445 = vadd.f32 %v3444, 0.00028619796
        %v3446 = vmul.f32 %v3443, %v3445
        %v3447 = vadd.f32 %v3446, 0.0036580483
        %v3448 = vmul.f32 %v3443, %v3447
        %v3449 = vadd.f32 %v3448, 0.05243302
        %v3450 = vmul.f32 %v3443, %v3449
        %v3451 = vadd.f32 %v3450, 0.18741608
        %v3452 = vmul.f32 %v3443, %v3451
        %v3453 = vadd.f32 %v3452, 1.1283791
        %v3454 = vmul.f32 %v2481, %v3453
        %v3455 = vmul.f32 %v3443, 3.8918573e-05
        %v3456 = vadd.f32 %v3455, 0.001143296
        %v3457 = vmul.f32 %v3443, %v3456
        %v3458 = vadd.f32 %v3457, 0.014752088
        %v3459 = vmul.f32 %v3443, %v3458
        %v3460 = vadd.f32 %v3459, 0.112945676
        %v3461 = vmul.f32 %v3443, %v3460
        %v3462 = vadd.f32 %v3461, 0.4994258
        %v3463 = vmul.f32 %v3443, %v3462
        %v3464 = vadd.f32 %v3463, 1.0
        %v3465 = vrcp.pop %v3464
        %v3466 = vmul.f32 %v3464, %v3465
        %v3467 = vsub.f32 1.0, %v3466
        %v3468 = vmul.f32 %v3465, %v3467
        %v3469 = vadd.f32 %v3465, %v3468
        %vm3470 = vweird.f32 %v3464
        %vm3471 = vweird.f32 %v3465
        %vm3472 = vmor %vm3470, %vm3471
        %v3473 = vsel %vm3472, %v3465, %v3469
        %v3474 = vand.u32 2147483647, %v3464
        %vm3475 = vcmp.eq.f32.partialorder %v3474, 8.507059e+37
        %v3476 = vand.u32 %v3464, 2147483648
        %v3477 = vor.u32 1.1754944e-38, %v3476
        %v3478 = vsel %vm3475, %v3477, %v3473
        %v3479 = vmul.f32 %v3454, %v3478
        %v3480 = vmin.f32 %v3479, 1.0
        %v3481 = vmax.f32 %v3480, -1.0
        %v3482 = vmul.f32 %v2482, %v2482
        %v3483 = vmin.f32 16.0, %v3482
        %v3484 = vmul.f32 %v3483, 2.1237322e-06
        %v3485 = vadd.f32 %v3484, 0.00028619796
        %v3486 = vmul.f32 %v3483, %v3485
        %v3487 = vadd.f32 %v3486, 0.0036580483
        %v3488 = vmul.f32 %v3483, %v3487
        %v3489 = vadd.f32 %v3488, 0.05243302
        %v3490 = vmul.f32 %v3483, %v3489
        %v3491 = vadd.f32 %v3490, 0.18741608
        %v3492 = vmul.f32 %v3483, %v3491
        %v3493 = vadd.f32 %v3492, 1.1283791
        %v3494 = vmul.f32 %v2482, %v3493
        %v3495 = vmul.f32 %v3483, 3.8918573e-05
        %v3496 = vadd.f32 %v3495, 0.001143296
        %v3497 = vmul.f32 %v3483, %v3496
        %v3498 = vadd.f32 %v3497, 0.014752088
        %v3499 = vmul.f32 %v3483, %v3498
        %v3500 = vadd.f32 %v3499, 0.112945676
        %v3501 = vmul.f32 %v3483, %v3500
        %v3502 = vadd.f32 %v3501, 0.4994258
        %v3503 = vmul.f32 %v3483, %v3502
        %v3504 = vadd.f32 %v3503, 1.0
        %v3505 = vrcp.pop %v3504
        %v3506 = vmul.f32 %v3504, %v3505
        %v3507 = vsub.f32 1.0, %v3506
        %v3508 = vmul.f32 %v3505, %v3507
        %v3509 = vadd.f32 %v3505, %v3508
        %vm3510 = vweird.f32 %v3504
        %vm3511 = vweird.f32 %v3505
        %vm3512 = vmor %vm3510, %vm3511
        %v3513 = vsel %vm3512, %v3505, %v3509
        %v3514 = vand.u32 2147483647, %v3504
        %vm3515 = vcmp.eq.f32.partialorder %v3514, 8.507059e+37
        %v3516 = vand.u32 %v3504, 2147483648
        %v3517 = vor.u32 1.1754944e-38, %v3516
        %v3518 = vsel %vm3515, %v3517, %v3513
        %v3519 = vmul.f32 %v3494, %v3518
        %v3520 = vmin.f32 %v3519, 1.0
        %v3521 = vmax.f32 %v3520, -1.0
        %v3522 = vmul.f32 %v2483, %v2483
        %v3523 = vmin.f32 16.0, %v3522
        %v3524 = vmul.f32 %v3523, 2.1237322e-06
        %v3525 = vadd.f32 %v3524, 0.00028619796
        %v3526 = vmul.f32 %v3523, %v3525
        %v3527 = vadd.f32 %v3526, 0.0036580483
        %v3528 = vmul.f32 %v3523, %v3527
        %v3529 = vadd.f32 %v3528, 0.05243302
        %v3530 = vmul.f32 %v3523, %v3529
        %v3531 = vadd.f32 %v3530, 0.18741608
        %v3532 = vmul.f32 %v3523, %v3531
        %v3533 = vadd.f32 %v3532, 1.1283791
        %v3534 = vmul.f32 %v2483, %v3533
        %v3535 = vmul.f32 %v3523, 3.8918573e-05
        %v3536 = vadd.f32 %v3535, 0.001143296
        %v3537 = vmul.f32 %v3523, %v3536
        %v3538 = vadd.f32 %v3537, 0.014752088
        %v3539 = vmul.f32 %v3523, %v3538
        %v3540 = vadd.f32 %v3539, 0.112945676
        %v3541 = vmul.f32 %v3523, %v3540
        %v3542 = vadd.f32 %v3541, 0.4994258
        %v3543 = vmul.f32 %v3523, %v3542
        %v3544 = vadd.f32 %v3543, 1.0
        %v3545 = vrcp.pop %v3544
        %v3546 = vmul.f32 %v3544, %v3545
        %v3547 = vsub.f32 1.0, %v3546
        %v3548 = vmul.f32 %v3545, %v3547
        %v3549 = vadd.f32 %v3545, %v3548
        %vm3550 = vweird.f32 %v3544
        %vm3551 = vweird.f32 %v3545
        %vm3552 = vmor %vm3550, %vm3551
        %v3553 = vsel %vm3552, %v3545, %v3549
        %v3554 = vand.u32 2147483647, %v3544
        %vm3555 = vcmp.eq.f32.partialorder %v3554, 8.507059e+37
        %v3556 = vand.u32 %v3544, 2147483648
        %v3557 = vor.u32 1.1754944e-38, %v3556
        %v3558 = vsel %vm3555, %v3557, %v3553
        %v3559 = vmul.f32 %v3534, %v3558
        %v3560 = vmin.f32 %v3559, 1.0
        %v3561 = vmax.f32 %v3560, -1.0
        %v3562 = vmul.f32 %v2484, %v2484
        %v3563 = vmin.f32 16.0, %v3562
        %v3564 = vmul.f32 %v3563, 2.1237322e-06
        %v3565 = vadd.f32 %v3564, 0.00028619796
        %v3566 = vmul.f32 %v3563, %v3565
        %v3567 = vadd.f32 %v3566, 0.0036580483
        %v3568 = vmul.f32 %v3563, %v3567
        %v3569 = vadd.f32 %v3568, 0.05243302
        %v3570 = vmul.f32 %v3563, %v3569
        %v3571 = vadd.f32 %v3570, 0.18741608
        %v3572 = vmul.f32 %v3563, %v3571
        %v3573 = vadd.f32 %v3572, 1.1283791
        %v3574 = vmul.f32 %v2484, %v3573
        %v3575 = vmul.f32 %v3563, 3.8918573e-05
        %v3576 = vadd.f32 %v3575, 0.001143296
        %v3577 = vmul.f32 %v3563, %v3576
        %v3578 = vadd.f32 %v3577, 0.014752088
        %v3579 = vmul.f32 %v3563, %v3578
        %v3580 = vadd.f32 %v3579, 0.112945676
        %v3581 = vmul.f32 %v3563, %v3580
        %v3582 = vadd.f32 %v3581, 0.4994258
        %v3583 = vmul.f32 %v3563, %v3582
        %v3584 = vadd.f32 %v3583, 1.0
        %v3585 = vrcp.pop %v3584
        %v3586 = vmul.f32 %v3584, %v3585
        %v3587 = vsub.f32 1.0, %v3586
        %v3588 = vmul.f32 %v3585, %v3587
        %v3589 = vadd.f32 %v3585, %v3588
        %vm3590 = vweird.f32 %v3584
        %vm3591 = vweird.f32 %v3585
        %vm3592 = vmor %vm3590, %vm3591
        %v3593 = vsel %vm3592, %v3585, %v3589
        %v3594 = vand.u32 2147483647, %v3584
        %vm3595 = vcmp.eq.f32.partialorder %v3594, 8.507059e+37
        %v3596 = vand.u32 %v3584, 2147483648
        %v3597 = vor.u32 1.1754944e-38, %v3596
        %v3598 = vsel %vm3595, %v3597, %v3593
        %v3599 = vmul.f32 %v3574, %v3598
        %v3600 = vmin.f32 %v3599, 1.0
        %v3601 = vmax.f32 %v3600, -1.0
        %v3602 = vmul.f32 %v2485, %v2485
        %v3603 = vmin.f32 16.0, %v3602
        %v3604 = vmul.f32 %v3603, 2.1237322e-06
        %v3605 = vadd.f32 %v3604, 0.00028619796
        %v3606 = vmul.f32 %v3603, %v3605
        %v3607 = vadd.f32 %v3606, 0.0036580483
        %v3608 = vmul.f32 %v3603, %v3607
        %v3609 = vadd.f32 %v3608, 0.05243302
        %v3610 = vmul.f32 %v3603, %v3609
        %v3611 = vadd.f32 %v3610, 0.18741608
        %v3612 = vmul.f32 %v3603, %v3611
        %v3613 = vadd.f32 %v3612, 1.1283791
        %v3614 = vmul.f32 %v2485, %v3613
        %v3615 = vmul.f32 %v3603, 3.8918573e-05
        %v3616 = vadd.f32 %v3615, 0.001143296
        %v3617 = vmul.f32 %v3603, %v3616
        %v3618 = vadd.f32 %v3617, 0.014752088
        %v3619 = vmul.f32 %v3603, %v3618
        %v3620 = vadd.f32 %v3619, 0.112945676
        %v3621 = vmul.f32 %v3603, %v3620
        %v3622 = vadd.f32 %v3621, 0.4994258
        %v3623 = vmul.f32 %v3603, %v3622
        %v3624 = vadd.f32 %v3623, 1.0
        %v3625 = vrcp.pop %v3624
        %v3626 = vmul.f32 %v3624, %v3625
        %v3627 = vsub.f32 1.0, %v3626
        %v3628 = vmul.f32 %v3625, %v3627
        %v3629 = vadd.f32 %v3625, %v3628
        %vm3630 = vweird.f32 %v3624
        %vm3631 = vweird.f32 %v3625
        %vm3632 = vmor %vm3630, %vm3631
        %v3633 = vsel %vm3632, %v3625, %v3629
        %v3634 = vand.u32 2147483647, %v3624
        %vm3635 = vcmp.eq.f32.partialorder %v3634, 8.507059e+37
        %v3636 = vand.u32 %v3624, 2147483648
        %v3637 = vor.u32 1.1754944e-38, %v3636
        %v3638 = vsel %vm3635, %v3637, %v3633
        %v3639 = vmul.f32 %v3614, %v3638
        %v3640 = vmin.f32 %v3639, 1.0
        %v3641 = vmax.f32 %v3640, -1.0
        %v3642 = vmul.f32 %v2486, %v2486
        %v3643 = vmin.f32 16.0, %v3642
        %v3644 = vmul.f32 %v3643, 2.1237322e-06
        %v3645 = vadd.f32 %v3644, 0.00028619796
        %v3646 = vmul.f32 %v3643, %v3645
        %v3647 = vadd.f32 %v3646, 0.0036580483
        %v3648 = vmul.f32 %v3643, %v3647
        %v3649 = vadd.f32 %v3648, 0.05243302
        %v3650 = vmul.f32 %v3643, %v3649
        %v3651 = vadd.f32 %v3650, 0.18741608
        %v3652 = vmul.f32 %v3643, %v3651
        %v3653 = vadd.f32 %v3652, 1.1283791
        %v3654 = vmul.f32 %v2486, %v3653
        %v3655 = vmul.f32 %v3643, 3.8918573e-05
        %v3656 = vadd.f32 %v3655, 0.001143296
        %v3657 = vmul.f32 %v3643, %v3656
        %v3658 = vadd.f32 %v3657, 0.014752088
        %v3659 = vmul.f32 %v3643, %v3658
        %v3660 = vadd.f32 %v3659, 0.112945676
        %v3661 = vmul.f32 %v3643, %v3660
        %v3662 = vadd.f32 %v3661, 0.4994258
        %v3663 = vmul.f32 %v3643, %v3662
        %v3664 = vadd.f32 %v3663, 1.0
        %v3665 = vrcp.pop %v3664
        %v3666 = vmul.f32 %v3664, %v3665
        %v3667 = vsub.f32 1.0, %v3666
        %v3668 = vmul.f32 %v3665, %v3667
        %v3669 = vadd.f32 %v3665, %v3668
        %vm3670 = vweird.f32 %v3664
        %vm3671 = vweird.f32 %v3665
        %vm3672 = vmor %vm3670, %vm3671
        %v3673 = vsel %vm3672, %v3665, %v3669
        %v3674 = vand.u32 2147483647, %v3664
        %vm3675 = vcmp.eq.f32.partialorder %v3674, 8.507059e+37
        %v3676 = vand.u32 %v3664, 2147483648
        %v3677 = vor.u32 1.1754944e-38, %v3676
        %v3678 = vsel %vm3675, %v3677, %v3673
        %v3679 = vmul.f32 %v3654, %v3678
        %v3680 = vmin.f32 %v3679, 1.0
        %v3681 = vmax.f32 %v3680, -1.0
        %v3682 = vmul.f32 %v2487, %v2487
        %v3683 = vmin.f32 16.0, %v3682
        %v3684 = vmul.f32 %v3683, 2.1237322e-06
        %v3685 = vadd.f32 %v3684, 0.00028619796
        %v3686 = vmul.f32 %v3683, %v3685
        %v3687 = vadd.f32 %v3686, 0.0036580483
        %v3688 = vmul.f32 %v3683, %v3687
        %v3689 = vadd.f32 %v3688, 0.05243302
        %v3690 = vmul.f32 %v3683, %v3689
        %v3691 = vadd.f32 %v3690, 0.18741608
        %v3692 = vmul.f32 %v3683, %v3691
        %v3693 = vadd.f32 %v3692, 1.1283791
        %v3694 = vmul.f32 %v2487, %v3693
        %v3695 = vmul.f32 %v3683, 3.8918573e-05
        %v3696 = vadd.f32 %v3695, 0.001143296
        %v3697 = vmul.f32 %v3683, %v3696
        %v3698 = vadd.f32 %v3697, 0.014752088
        %v3699 = vmul.f32 %v3683, %v3698
        %v3700 = vadd.f32 %v3699, 0.112945676
        %v3701 = vmul.f32 %v3683, %v3700
        %v3702 = vadd.f32 %v3701, 0.4994258
        %v3703 = vmul.f32 %v3683, %v3702
        %v3704 = vadd.f32 %v3703, 1.0
        %v3705 = vrcp.pop %v3704
        %v3706 = vmul.f32 %v3704, %v3705
        %v3707 = vsub.f32 1.0, %v3706
        %v3708 = vmul.f32 %v3705, %v3707
        %v3709 = vadd.f32 %v3705, %v3708
        %vm3710 = vweird.f32 %v3704
        %vm3711 = vweird.f32 %v3705
        %vm3712 = vmor %vm3710, %vm3711
        %v3713 = vsel %vm3712, %v3705, %v3709
        %v3714 = vand.u32 2147483647, %v3704
        %vm3715 = vcmp.eq.f32.partialorder %v3714, 8.507059e+37
        %v3716 = vand.u32 %v3704, 2147483648
        %v3717 = vor.u32 1.1754944e-38, %v3716
        %v3718 = vsel %vm3715, %v3717, %v3713
        %v3719 = vmul.f32 %v3694, %v3718
        %v3720 = vmin.f32 %v3719, 1.0
        %v3721 = vmax.f32 %v3720, -1.0
        %v3722 = vmul.f32 %v2488, %v2488
        %v3723 = vmin.f32 16.0, %v3722
        %v3724 = vmul.f32 %v3723, 2.1237322e-06
        %v3725 = vadd.f32 %v3724, 0.00028619796
        %v3726 = vmul.f32 %v3723, %v3725
        %v3727 = vadd.f32 %v3726, 0.0036580483
        %v3728 = vmul.f32 %v3723, %v3727
        %v3729 = vadd.f32 %v3728, 0.05243302
        %v3730 = vmul.f32 %v3723, %v3729
        %v3731 = vadd.f32 %v3730, 0.18741608
        %v3732 = vmul.f32 %v3723, %v3731
        %v3733 = vadd.f32 %v3732, 1.1283791
        %v3734 = vmul.f32 %v2488, %v3733
        %v3735 = vmul.f32 %v3723, 3.8918573e-05
        %v3736 = vadd.f32 %v3735, 0.001143296
        %v3737 = vmul.f32 %v3723, %v3736
        %v3738 = vadd.f32 %v3737, 0.014752088
        %v3739 = vmul.f32 %v3723, %v3738
        %v3740 = vadd.f32 %v3739, 0.112945676
        %v3741 = vmul.f32 %v3723, %v3740
        %v3742 = vadd.f32 %v3741, 0.4994258
        %v3743 = vmul.f32 %v3723, %v3742
        %v3744 = vadd.f32 %v3743, 1.0
        %v3745 = vrcp.pop %v3744
        %v3746 = vmul.f32 %v3744, %v3745
        %v3747 = vsub.f32 1.0, %v3746
        %v3748 = vmul.f32 %v3745, %v3747
        %v3749 = vadd.f32 %v3745, %v3748
        %vm3750 = vweird.f32 %v3744
        %vm3751 = vweird.f32 %v3745
        %vm3752 = vmor %vm3750, %vm3751
        %v3753 = vsel %vm3752, %v3745, %v3749
        %v3754 = vand.u32 2147483647, %v3744
        %vm3755 = vcmp.eq.f32.partialorder %v3754, 8.507059e+37
        %v3756 = vand.u32 %v3744, 2147483648
        %v3757 = vor.u32 1.1754944e-38, %v3756
        %v3758 = vsel %vm3755, %v3757, %v3753
        %v3759 = vmul.f32 %v3734, %v3758
        %v3760 = vmin.f32 %v3759, 1.0
        %v3761 = vmax.f32 %v3760, -1.0
        %v3762 = vmul.f32 %v2489, %v2489
        %v3763 = vmin.f32 16.0, %v3762
        %v3764 = vmul.f32 %v3763, 2.1237322e-06
        %v3765 = vadd.f32 %v3764, 0.00028619796
        %v3766 = vmul.f32 %v3763, %v3765
        %v3767 = vadd.f32 %v3766, 0.0036580483
        %v3768 = vmul.f32 %v3763, %v3767
        %v3769 = vadd.f32 %v3768, 0.05243302
        %v3770 = vmul.f32 %v3763, %v3769
        %v3771 = vadd.f32 %v3770, 0.18741608
        %v3772 = vmul.f32 %v3763, %v3771
        %v3773 = vadd.f32 %v3772, 1.1283791
        %v3774 = vmul.f32 %v2489, %v3773
        %v3775 = vmul.f32 %v3763, 3.8918573e-05
        %v3776 = vadd.f32 %v3775, 0.001143296
        %v3777 = vmul.f32 %v3763, %v3776
        %v3778 = vadd.f32 %v3777, 0.014752088
        %v3779 = vmul.f32 %v3763, %v3778
        %v3780 = vadd.f32 %v3779, 0.112945676
        %v3781 = vmul.f32 %v3763, %v3780
        %v3782 = vadd.f32 %v3781, 0.4994258
        %v3783 = vmul.f32 %v3763, %v3782
        %v3784 = vadd.f32 %v3783, 1.0
        %v3785 = vrcp.pop %v3784
        %v3786 = vmul.f32 %v3784, %v3785
        %v3787 = vsub.f32 1.0, %v3786
        %v3788 = vmul.f32 %v3785, %v3787
        %v3789 = vadd.f32 %v3785, %v3788
        %vm3790 = vweird.f32 %v3784
        %vm3791 = vweird.f32 %v3785
        %vm3792 = vmor %vm3790, %vm3791
        %v3793 = vsel %vm3792, %v3785, %v3789
        %v3794 = vand.u32 2147483647, %v3784
        %vm3795 = vcmp.eq.f32.partialorder %v3794, 8.507059e+37
        %v3796 = vand.u32 %v3784, 2147483648
        %v3797 = vor.u32 1.1754944e-38, %v3796
        %v3798 = vsel %vm3795, %v3797, %v3793
        %v3799 = vmul.f32 %v3774, %v3798
        %v3800 = vmin.f32 %v3799, 1.0
        %v3801 = vmax.f32 %v3800, -1.0
        %v3802 = vmul.f32 %v2490, %v2490
        %v3803 = vmin.f32 16.0, %v3802
        %v3804 = vmul.f32 %v3803, 2.1237322e-06
        %v3805 = vadd.f32 %v3804, 0.00028619796
        %v3806 = vmul.f32 %v3803, %v3805
        %v3807 = vadd.f32 %v3806, 0.0036580483
        %v3808 = vmul.f32 %v3803, %v3807
        %v3809 = vadd.f32 %v3808, 0.05243302
        %v3810 = vmul.f32 %v3803, %v3809
        %v3811 = vadd.f32 %v3810, 0.18741608
        %v3812 = vmul.f32 %v3803, %v3811
        %v3813 = vadd.f32 %v3812, 1.1283791
        %v3814 = vmul.f32 %v2490, %v3813
        %v3815 = vmul.f32 %v3803, 3.8918573e-05
        %v3816 = vadd.f32 %v3815, 0.001143296
        %v3817 = vmul.f32 %v3803, %v3816
        %v3818 = vadd.f32 %v3817, 0.014752088
        %v3819 = vmul.f32 %v3803, %v3818
        %v3820 = vadd.f32 %v3819, 0.112945676
        %v3821 = vmul.f32 %v3803, %v3820
        %v3822 = vadd.f32 %v3821, 0.4994258
        %v3823 = vmul.f32 %v3803, %v3822
        %v3824 = vadd.f32 %v3823, 1.0
        %v3825 = vrcp.pop %v3824
        %v3826 = vmul.f32 %v3824, %v3825
        %v3827 = vsub.f32 1.0, %v3826
        %v3828 = vmul.f32 %v3825, %v3827
        %v3829 = vadd.f32 %v3825, %v3828
        %vm3830 = vweird.f32 %v3824
        %vm3831 = vweird.f32 %v3825
        %vm3832 = vmor %vm3830, %vm3831
        %v3833 = vsel %vm3832, %v3825, %v3829
        %v3834 = vand.u32 2147483647, %v3824
        %vm3835 = vcmp.eq.f32.partialorder %v3834, 8.507059e+37
        %v3836 = vand.u32 %v3824, 2147483648
        %v3837 = vor.u32 1.1754944e-38, %v3836
        %v3838 = vsel %vm3835, %v3837, %v3833
        %v3839 = vmul.f32 %v3814, %v3838
        %v3840 = vmin.f32 %v3839, 1.0
        %v3841 = vmax.f32 %v3840, -1.0
        %v3842 = vmul.f32 %v2491, %v2491
        %v3843 = vmin.f32 16.0, %v3842
        %v3844 = vmul.f32 %v3843, 2.1237322e-06
        %v3845 = vadd.f32 %v3844, 0.00028619796
        %v3846 = vmul.f32 %v3843, %v3845
        %v3847 = vadd.f32 %v3846, 0.0036580483
        %v3848 = vmul.f32 %v3843, %v3847
        %v3849 = vadd.f32 %v3848, 0.05243302
        %v3850 = vmul.f32 %v3843, %v3849
        %v3851 = vadd.f32 %v3850, 0.18741608
        %v3852 = vmul.f32 %v3843, %v3851
        %v3853 = vadd.f32 %v3852, 1.1283791
        %v3854 = vmul.f32 %v2491, %v3853
        %v3855 = vmul.f32 %v3843, 3.8918573e-05
        %v3856 = vadd.f32 %v3855, 0.001143296
        %v3857 = vmul.f32 %v3843, %v3856
        %v3858 = vadd.f32 %v3857, 0.014752088
        %v3859 = vmul.f32 %v3843, %v3858
        %v3860 = vadd.f32 %v3859, 0.112945676
        %v3861 = vmul.f32 %v3843, %v3860
        %v3862 = vadd.f32 %v3861, 0.4994258
        %v3863 = vmul.f32 %v3843, %v3862
        %v3864 = vadd.f32 %v3863, 1.0
        %v3865 = vrcp.pop %v3864
        %v3866 = vmul.f32 %v3864, %v3865
        %v3867 = vsub.f32 1.0, %v3866
        %v3868 = vmul.f32 %v3865, %v3867
        %v3869 = vadd.f32 %v3865, %v3868
        %vm3870 = vweird.f32 %v3864
        %vm3871 = vweird.f32 %v3865
        %vm3872 = vmor %vm3870, %vm3871
        %v3873 = vsel %vm3872, %v3865, %v3869
        %v3874 = vand.u32 2147483647, %v3864
        %vm3875 = vcmp.eq.f32.partialorder %v3874, 8.507059e+37
        %v3876 = vand.u32 %v3864, 2147483648
        %v3877 = vor.u32 1.1754944e-38, %v3876
        %v3878 = vsel %vm3875, %v3877, %v3873
        %v3879 = vmul.f32 %v3854, %v3878
        %v3880 = vmin.f32 %v3879, 1.0
        %v3881 = vmax.f32 %v3880, -1.0
        %v3882 = vmul.f32 %v2492, %v2492
        %v3883 = vmin.f32 16.0, %v3882
        %v3884 = vmul.f32 %v3883, 2.1237322e-06
        %v3885 = vadd.f32 %v3884, 0.00028619796
        %v3886 = vmul.f32 %v3883, %v3885
        %v3887 = vadd.f32 %v3886, 0.0036580483
        %v3888 = vmul.f32 %v3883, %v3887
        %v3889 = vadd.f32 %v3888, 0.05243302
        %v3890 = vmul.f32 %v3883, %v3889
        %v3891 = vadd.f32 %v3890, 0.18741608
        %v3892 = vmul.f32 %v3883, %v3891
        %v3893 = vadd.f32 %v3892, 1.1283791
        %v3894 = vmul.f32 %v2492, %v3893
        %v3895 = vmul.f32 %v3883, 3.8918573e-05
        %v3896 = vadd.f32 %v3895, 0.001143296
        %v3897 = vmul.f32 %v3883, %v3896
        %v3898 = vadd.f32 %v3897, 0.014752088
        %v3899 = vmul.f32 %v3883, %v3898
        %v3900 = vadd.f32 %v3899, 0.112945676
        %v3901 = vmul.f32 %v3883, %v3900
        %v3902 = vadd.f32 %v3901, 0.4994258
        %v3903 = vmul.f32 %v3883, %v3902
        %v3904 = vadd.f32 %v3903, 1.0
        %v3905 = vrcp.pop %v3904
        %v3906 = vmul.f32 %v3904, %v3905
        %v3907 = vsub.f32 1.0, %v3906
        %v3908 = vmul.f32 %v3905, %v3907
        %v3909 = vadd.f32 %v3905, %v3908
        %vm3910 = vweird.f32 %v3904
        %vm3911 = vweird.f32 %v3905
        %vm3912 = vmor %vm3910, %vm3911
        %v3913 = vsel %vm3912, %v3905, %v3909
        %v3914 = vand.u32 2147483647, %v3904
        %vm3915 = vcmp.eq.f32.partialorder %v3914, 8.507059e+37
        %v3916 = vand.u32 %v3904, 2147483648
        %v3917 = vor.u32 1.1754944e-38, %v3916
        %v3918 = vsel %vm3915, %v3917, %v3913
        %v3919 = vmul.f32 %v3894, %v3918
        %v3920 = vmin.f32 %v3919, 1.0
        %v3921 = vmax.f32 %v3920, -1.0
        %v3922 = vmul.f32 %v2493, %v2493
        %v3923 = vmin.f32 16.0, %v3922
        %v3924 = vmul.f32 %v3923, 2.1237322e-06
        %v3925 = vadd.f32 %v3924, 0.00028619796
        %v3926 = vmul.f32 %v3923, %v3925
        %v3927 = vadd.f32 %v3926, 0.0036580483
        %v3928 = vmul.f32 %v3923, %v3927
        %v3929 = vadd.f32 %v3928, 0.05243302
        %v3930 = vmul.f32 %v3923, %v3929
        %v3931 = vadd.f32 %v3930, 0.18741608
        %v3932 = vmul.f32 %v3923, %v3931
        %v3933 = vadd.f32 %v3932, 1.1283791
        %v3934 = vmul.f32 %v2493, %v3933
        %v3935 = vmul.f32 %v3923, 3.8918573e-05
        %v3936 = vadd.f32 %v3935, 0.001143296
        %v3937 = vmul.f32 %v3923, %v3936
        %v3938 = vadd.f32 %v3937, 0.014752088
        %v3939 = vmul.f32 %v3923, %v3938
        %v3940 = vadd.f32 %v3939, 0.112945676
        %v3941 = vmul.f32 %v3923, %v3940
        %v3942 = vadd.f32 %v3941, 0.4994258
        %v3943 = vmul.f32 %v3923, %v3942
        %v3944 = vadd.f32 %v3943, 1.0
        %v3945 = vrcp.pop %v3944
        %v3946 = vmul.f32 %v3944, %v3945
        %v3947 = vsub.f32 1.0, %v3946
        %v3948 = vmul.f32 %v3945, %v3947
        %v3949 = vadd.f32 %v3945, %v3948
        %vm3950 = vweird.f32 %v3944
        %vm3951 = vweird.f32 %v3945
        %vm3952 = vmor %vm3950, %vm3951
        %v3953 = vsel %vm3952, %v3945, %v3949
        %v3954 = vand.u32 2147483647, %v3944
        %vm3955 = vcmp.eq.f32.partialorder %v3954, 8.507059e+37
        %v3956 = vand.u32 %v3944, 2147483648
        %v3957 = vor.u32 1.1754944e-38, %v3956
        %v3958 = vsel %vm3955, %v3957, %v3953
        %v3959 = vmul.f32 %v3934, %v3958
        %v3960 = vmin.f32 %v3959, 1.0
        %v3961 = vmax.f32 %v3960, -1.0
        %v3962 = vmul.f32 %v2494, %v2494
        %v3963 = vmin.f32 16.0, %v3962
        %v3964 = vmul.f32 %v3963, 2.1237322e-06
        %v3965 = vadd.f32 %v3964, 0.00028619796
        %v3966 = vmul.f32 %v3963, %v3965
        %v3967 = vadd.f32 %v3966, 0.0036580483
        %v3968 = vmul.f32 %v3963, %v3967
        %v3969 = vadd.f32 %v3968, 0.05243302
        %v3970 = vmul.f32 %v3963, %v3969
        %v3971 = vadd.f32 %v3970, 0.18741608
        %v3972 = vmul.f32 %v3963, %v3971
        %v3973 = vadd.f32 %v3972, 1.1283791
        %v3974 = vmul.f32 %v2494, %v3973
        %v3975 = vmul.f32 %v3963, 3.8918573e-05
        %v3976 = vadd.f32 %v3975, 0.001143296
        %v3977 = vmul.f32 %v3963, %v3976
        %v3978 = vadd.f32 %v3977, 0.014752088
        %v3979 = vmul.f32 %v3963, %v3978
        %v3980 = vadd.f32 %v3979, 0.112945676
        %v3981 = vmul.f32 %v3963, %v3980
        %v3982 = vadd.f32 %v3981, 0.4994258
        %v3983 = vmul.f32 %v3963, %v3982
        %v3984 = vadd.f32 %v3983, 1.0
        %v3985 = vrcp.pop %v3984
        %v3986 = vmul.f32 %v3984, %v3985
        %v3987 = vsub.f32 1.0, %v3986
        %v3988 = vmul.f32 %v3985, %v3987
        %v3989 = vadd.f32 %v3985, %v3988
        %vm3990 = vweird.f32 %v3984
        %vm3991 = vweird.f32 %v3985
        %vm3992 = vmor %vm3990, %vm3991
        %v3993 = vsel %vm3992, %v3985, %v3989
        %v3994 = vand.u32 2147483647, %v3984
        %vm3995 = vcmp.eq.f32.partialorder %v3994, 8.507059e+37
        %v3996 = vand.u32 %v3984, 2147483648
        %v3997 = vor.u32 1.1754944e-38, %v3996
        %v3998 = vsel %vm3995, %v3997, %v3993
        %v3999 = vmul.f32 %v3974, %v3998
        %v4000 = vmin.f32 %v3999, 1.0
        %v4001 = vmax.f32 %v4000, -1.0
        %v4002 = vmul.f32 %v2495, %v2495
        %v4003 = vmin.f32 16.0, %v4002
        %v4004 = vmul.f32 %v4003, 2.1237322e-06
        %v4005 = vadd.f32 %v4004, 0.00028619796
        %v4006 = vmul.f32 %v4003, %v4005
        %v4007 = vadd.f32 %v4006, 0.0036580483
        %v4008 = vmul.f32 %v4003, %v4007
        %v4009 = vadd.f32 %v4008, 0.05243302
        %v4010 = vmul.f32 %v4003, %v4009
        %v4011 = vadd.f32 %v4010, 0.18741608
        %v4012 = vmul.f32 %v4003, %v4011
        %v4013 = vadd.f32 %v4012, 1.1283791
        %v4014 = vmul.f32 %v2495, %v4013
        %v4015 = vmul.f32 %v4003, 3.8918573e-05
        %v4016 = vadd.f32 %v4015, 0.001143296
        %v4017 = vmul.f32 %v4003, %v4016
        %v4018 = vadd.f32 %v4017, 0.014752088
        %v4019 = vmul.f32 %v4003, %v4018
        %v4020 = vadd.f32 %v4019, 0.112945676
        %v4021 = vmul.f32 %v4003, %v4020
        %v4022 = vadd.f32 %v4021, 0.4994258
        %v4023 = vmul.f32 %v4003, %v4022
        %v4024 = vadd.f32 %v4023, 1.0
        %v4025 = vrcp.pop %v4024
        %v4026 = vmul.f32 %v4024, %v4025
        %v4027 = vsub.f32 1.0, %v4026
        %v4028 = vmul.f32 %v4025, %v4027
        %v4029 = vadd.f32 %v4025, %v4028
        %vm4030 = vweird.f32 %v4024
        %vm4031 = vweird.f32 %v4025
        %vm4032 = vmor %vm4030, %vm4031
        %v4033 = vsel %vm4032, %v4025, %v4029
        %v4034 = vand.u32 2147483647, %v4024
        %vm4035 = vcmp.eq.f32.partialorder %v4034, 8.507059e+37
        %v4036 = vand.u32 %v4024, 2147483648
        %v4037 = vor.u32 1.1754944e-38, %v4036
        %v4038 = vsel %vm4035, %v4037, %v4033
        %v4039 = vmul.f32 %v4014, %v4038
        %v4040 = vmin.f32 %v4039, 1.0
        %v4041 = vmax.f32 %v4040, -1.0
        %v4042 = vmul.f32 %v2496, %v2496
        %v4043 = vmin.f32 16.0, %v4042
        %v4044 = vmul.f32 %v4043, 2.1237322e-06
        %v4045 = vadd.f32 %v4044, 0.00028619796
        %v4046 = vmul.f32 %v4043, %v4045
        %v4047 = vadd.f32 %v4046, 0.0036580483
        %v4048 = vmul.f32 %v4043, %v4047
        %v4049 = vadd.f32 %v4048, 0.05243302
        %v4050 = vmul.f32 %v4043, %v4049
        %v4051 = vadd.f32 %v4050, 0.18741608
        %v4052 = vmul.f32 %v4043, %v4051
        %v4053 = vadd.f32 %v4052, 1.1283791
        %v4054 = vmul.f32 %v2496, %v4053
        %v4055 = vmul.f32 %v4043, 3.8918573e-05
        %v4056 = vadd.f32 %v4055, 0.001143296
        %v4057 = vmul.f32 %v4043, %v4056
        %v4058 = vadd.f32 %v4057, 0.014752088
        %v4059 = vmul.f32 %v4043, %v4058
        %v4060 = vadd.f32 %v4059, 0.112945676
        %v4061 = vmul.f32 %v4043, %v4060
        %v4062 = vadd.f32 %v4061, 0.4994258
        %v4063 = vmul.f32 %v4043, %v4062
        %v4064 = vadd.f32 %v4063, 1.0
        %v4065 = vrcp.pop %v4064
        %v4066 = vmul.f32 %v4064, %v4065
        %v4067 = vsub.f32 1.0, %v4066
        %v4068 = vmul.f32 %v4065, %v4067
        %v4069 = vadd.f32 %v4065, %v4068
        %vm4070 = vweird.f32 %v4064
        %vm4071 = vweird.f32 %v4065
        %vm4072 = vmor %vm4070, %vm4071
        %v4073 = vsel %vm4072, %v4065, %v4069
        %v4074 = vand.u32 2147483647, %v4064
        %vm4075 = vcmp.eq.f32.partialorder %v4074, 8.507059e+37
        %v4076 = vand.u32 %v4064, 2147483648
        %v4077 = vor.u32 1.1754944e-38, %v4076
        %v4078 = vsel %vm4075, %v4077, %v4073
        %v4079 = vmul.f32 %v4054, %v4078
        %v4080 = vmin.f32 %v4079, 1.0
        %v4081 = vmax.f32 %v4080, -1.0
        %v4082 = vmul.f32 %v2497, %v2497
        %v4083 = vmin.f32 16.0, %v4082
        %v4084 = vmul.f32 %v4083, 2.1237322e-06
        %v4085 = vadd.f32 %v4084, 0.00028619796
        %v4086 = vmul.f32 %v4083, %v4085
        %v4087 = vadd.f32 %v4086, 0.0036580483
        %v4088 = vmul.f32 %v4083, %v4087
        %v4089 = vadd.f32 %v4088, 0.05243302
        %v4090 = vmul.f32 %v4083, %v4089
        %v4091 = vadd.f32 %v4090, 0.18741608
        %v4092 = vmul.f32 %v4083, %v4091
        %v4093 = vadd.f32 %v4092, 1.1283791
        %v4094 = vmul.f32 %v2497, %v4093
        %v4095 = vmul.f32 %v4083, 3.8918573e-05
        %v4096 = vadd.f32 %v4095, 0.001143296
        %v4097 = vmul.f32 %v4083, %v4096
        %v4098 = vadd.f32 %v4097, 0.014752088
        %v4099 = vmul.f32 %v4083, %v4098
        %v4100 = vadd.f32 %v4099, 0.112945676
        %v4101 = vmul.f32 %v4083, %v4100
        %v4102 = vadd.f32 %v4101, 0.4994258
        %v4103 = vmul.f32 %v4083, %v4102
        %v4104 = vadd.f32 %v4103, 1.0
        %v4105 = vrcp.pop %v4104
        %v4106 = vmul.f32 %v4104, %v4105
        %v4107 = vsub.f32 1.0, %v4106
        %v4108 = vmul.f32 %v4105, %v4107
        %v4109 = vadd.f32 %v4105, %v4108
        %vm4110 = vweird.f32 %v4104
        %vm4111 = vweird.f32 %v4105
        %vm4112 = vmor %vm4110, %vm4111
        %v4113 = vsel %vm4112, %v4105, %v4109
        %v4114 = vand.u32 2147483647, %v4104
        %vm4115 = vcmp.eq.f32.partialorder %v4114, 8.507059e+37
        %v4116 = vand.u32 %v4104, 2147483648
        %v4117 = vor.u32 1.1754944e-38, %v4116
        %v4118 = vsel %vm4115, %v4117, %v4113
        %v4119 = vmul.f32 %v4094, %v4118
        %v4120 = vmin.f32 %v4119, 1.0
        %v4121 = vmax.f32 %v4120, -1.0
        %v4122 = vmul.f32 %v2498, %v2498
        %v4123 = vmin.f32 16.0, %v4122
        %v4124 = vmul.f32 %v4123, 2.1237322e-06
        %v4125 = vadd.f32 %v4124, 0.00028619796
        %v4126 = vmul.f32 %v4123, %v4125
        %v4127 = vadd.f32 %v4126, 0.0036580483
        %v4128 = vmul.f32 %v4123, %v4127
        %v4129 = vadd.f32 %v4128, 0.05243302
        %v4130 = vmul.f32 %v4123, %v4129
        %v4131 = vadd.f32 %v4130, 0.18741608
        %v4132 = vmul.f32 %v4123, %v4131
        %v4133 = vadd.f32 %v4132, 1.1283791
        %v4134 = vmul.f32 %v2498, %v4133
        %v4135 = vmul.f32 %v4123, 3.8918573e-05
        %v4136 = vadd.f32 %v4135, 0.001143296
        %v4137 = vmul.f32 %v4123, %v4136
        %v4138 = vadd.f32 %v4137, 0.014752088
        %v4139 = vmul.f32 %v4123, %v4138
        %v4140 = vadd.f32 %v4139, 0.112945676
        %v4141 = vmul.f32 %v4123, %v4140
        %v4142 = vadd.f32 %v4141, 0.4994258
        %v4143 = vmul.f32 %v4123, %v4142
        %v4144 = vadd.f32 %v4143, 1.0
        %v4145 = vrcp.pop %v4144
        %v4146 = vmul.f32 %v4144, %v4145
        %v4147 = vsub.f32 1.0, %v4146
        %v4148 = vmul.f32 %v4145, %v4147
        %v4149 = vadd.f32 %v4145, %v4148
        %vm4150 = vweird.f32 %v4144
        %vm4151 = vweird.f32 %v4145
        %vm4152 = vmor %vm4150, %vm4151
        %v4153 = vsel %vm4152, %v4145, %v4149
        %v4154 = vand.u32 2147483647, %v4144
        %vm4155 = vcmp.eq.f32.partialorder %v4154, 8.507059e+37
        %v4156 = vand.u32 %v4144, 2147483648
        %v4157 = vor.u32 1.1754944e-38, %v4156
        %v4158 = vsel %vm4155, %v4157, %v4153
        %v4159 = vmul.f32 %v4134, %v4158
        %v4160 = vmin.f32 %v4159, 1.0
        %v4161 = vmax.f32 %v4160, -1.0
        %v4162 = vmul.f32 %v2499, %v2499
        %v4163 = vmin.f32 16.0, %v4162
        %v4164 = vmul.f32 %v4163, 2.1237322e-06
        %v4165 = vadd.f32 %v4164, 0.00028619796
        %v4166 = vmul.f32 %v4163, %v4165
        %v4167 = vadd.f32 %v4166, 0.0036580483
        %v4168 = vmul.f32 %v4163, %v4167
        %v4169 = vadd.f32 %v4168, 0.05243302
        %v4170 = vmul.f32 %v4163, %v4169
        %v4171 = vadd.f32 %v4170, 0.18741608
        %v4172 = vmul.f32 %v4163, %v4171
        %v4173 = vadd.f32 %v4172, 1.1283791
        %v4174 = vmul.f32 %v2499, %v4173
        %v4175 = vmul.f32 %v4163, 3.8918573e-05
        %v4176 = vadd.f32 %v4175, 0.001143296
        %v4177 = vmul.f32 %v4163, %v4176
        %v4178 = vadd.f32 %v4177, 0.014752088
        %v4179 = vmul.f32 %v4163, %v4178
        %v4180 = vadd.f32 %v4179, 0.112945676
        %v4181 = vmul.f32 %v4163, %v4180
        %v4182 = vadd.f32 %v4181, 0.4994258
        %v4183 = vmul.f32 %v4163, %v4182
        %v4184 = vadd.f32 %v4183, 1.0
        %v4185 = vrcp.pop %v4184
        %v4186 = vmul.f32 %v4184, %v4185
        %v4187 = vsub.f32 1.0, %v4186
        %v4188 = vmul.f32 %v4185, %v4187
        %v4189 = vadd.f32 %v4185, %v4188
        %vm4190 = vweird.f32 %v4184
        %vm4191 = vweird.f32 %v4185
        %vm4192 = vmor %vm4190, %vm4191
        %v4193 = vsel %vm4192, %v4185, %v4189
        %v4194 = vand.u32 2147483647, %v4184
        %vm4195 = vcmp.eq.f32.partialorder %v4194, 8.507059e+37
        %v4196 = vand.u32 %v4184, 2147483648
        %v4197 = vor.u32 1.1754944e-38, %v4196
        %v4198 = vsel %vm4195, %v4197, %v4193
        %v4199 = vmul.f32 %v4174, %v4198
        %v4200 = vmin.f32 %v4199, 1.0
        %v4201 = vmax.f32 %v4200, -1.0
        %v4202 = vmul.f32 %v2500, %v2500
        %v4203 = vmin.f32 16.0, %v4202
        %v4204 = vmul.f32 %v4203, 2.1237322e-06
        %v4205 = vadd.f32 %v4204, 0.00028619796
        %v4206 = vmul.f32 %v4203, %v4205
        %v4207 = vadd.f32 %v4206, 0.0036580483
        %v4208 = vmul.f32 %v4203, %v4207
        %v4209 = vadd.f32 %v4208, 0.05243302
        %v4210 = vmul.f32 %v4203, %v4209
        %v4211 = vadd.f32 %v4210, 0.18741608
        %v4212 = vmul.f32 %v4203, %v4211
        %v4213 = vadd.f32 %v4212, 1.1283791
        %v4214 = vmul.f32 %v2500, %v4213
        %v4215 = vmul.f32 %v4203, 3.8918573e-05
        %v4216 = vadd.f32 %v4215, 0.001143296
        %v4217 = vmul.f32 %v4203, %v4216
        %v4218 = vadd.f32 %v4217, 0.014752088
        %v4219 = vmul.f32 %v4203, %v4218
        %v4220 = vadd.f32 %v4219, 0.112945676
        %v4221 = vmul.f32 %v4203, %v4220
        %v4222 = vadd.f32 %v4221, 0.4994258
        %v4223 = vmul.f32 %v4203, %v4222
        %v4224 = vadd.f32 %v4223, 1.0
        %v4225 = vrcp.pop %v4224
        %v4226 = vmul.f32 %v4224, %v4225
        %v4227 = vsub.f32 1.0, %v4226
        %v4228 = vmul.f32 %v4225, %v4227
        %v4229 = vadd.f32 %v4225, %v4228
        %vm4230 = vweird.f32 %v4224
        %vm4231 = vweird.f32 %v4225
        %vm4232 = vmor %vm4230, %vm4231
        %v4233 = vsel %vm4232, %v4225, %v4229
        %v4234 = vand.u32 2147483647, %v4224
        %vm4235 = vcmp.eq.f32.partialorder %v4234, 8.507059e+37
        %v4236 = vand.u32 %v4224, 2147483648
        %v4237 = vor.u32 1.1754944e-38, %v4236
        %v4238 = vsel %vm4235, %v4237, %v4233
        %v4239 = vmul.f32 %v4214, %v4238
        %v4240 = vmin.f32 %v4239, 1.0
        %v4241 = vmax.f32 %v4240, -1.0
        %v4242 = vmul.f32 %v2501, %v2501
        %v4243 = vmin.f32 16.0, %v4242
        %v4244 = vmul.f32 %v4243, 2.1237322e-06
        %v4245 = vadd.f32 %v4244, 0.00028619796
        %v4246 = vmul.f32 %v4243, %v4245
        %v4247 = vadd.f32 %v4246, 0.0036580483
        %v4248 = vmul.f32 %v4243, %v4247
        %v4249 = vadd.f32 %v4248, 0.05243302
        %v4250 = vmul.f32 %v4243, %v4249
        %v4251 = vadd.f32 %v4250, 0.18741608
        %v4252 = vmul.f32 %v4243, %v4251
        %v4253 = vadd.f32 %v4252, 1.1283791
        %v4254 = vmul.f32 %v2501, %v4253
        %v4255 = vmul.f32 %v4243, 3.8918573e-05
        %v4256 = vadd.f32 %v4255, 0.001143296
        %v4257 = vmul.f32 %v4243, %v4256
        %v4258 = vadd.f32 %v4257, 0.014752088
        %v4259 = vmul.f32 %v4243, %v4258
        %v4260 = vadd.f32 %v4259, 0.112945676
        %v4261 = vmul.f32 %v4243, %v4260
        %v4262 = vadd.f32 %v4261, 0.4994258
        %v4263 = vmul.f32 %v4243, %v4262
        %v4264 = vadd.f32 %v4263, 1.0
        %v4265 = vrcp.pop %v4264
        %v4266 = vmul.f32 %v4264, %v4265
        %v4267 = vsub.f32 1.0, %v4266
        %v4268 = vmul.f32 %v4265, %v4267
        %v4269 = vadd.f32 %v4265, %v4268
        %vm4270 = vweird.f32 %v4264
        %vm4271 = vweird.f32 %v4265
        %vm4272 = vmor %vm4270, %vm4271
        %v4273 = vsel %vm4272, %v4265, %v4269
        %v4274 = vand.u32 2147483647, %v4264
        %vm4275 = vcmp.eq.f32.partialorder %v4274, 8.507059e+37
        %v4276 = vand.u32 %v4264, 2147483648
        %v4277 = vor.u32 1.1754944e-38, %v4276
        %v4278 = vsel %vm4275, %v4277, %v4273
        %v4279 = vmul.f32 %v4254, %v4278
        %v4280 = vmin.f32 %v4279, 1.0
        %v4281 = vmax.f32 %v4280, -1.0
        %v4282 = vmul.f32 %v2502, %v2502
        %v4283 = vmin.f32 16.0, %v4282
        %v4284 = vmul.f32 %v4283, 2.1237322e-06
        %v4285 = vadd.f32 %v4284, 0.00028619796
        %v4286 = vmul.f32 %v4283, %v4285
        %v4287 = vadd.f32 %v4286, 0.0036580483
        %v4288 = vmul.f32 %v4283, %v4287
        %v4289 = vadd.f32 %v4288, 0.05243302
        %v4290 = vmul.f32 %v4283, %v4289
        %v4291 = vadd.f32 %v4290, 0.18741608
        %v4292 = vmul.f32 %v4283, %v4291
        %v4293 = vadd.f32 %v4292, 1.1283791
        %v4294 = vmul.f32 %v2502, %v4293
        %v4295 = vmul.f32 %v4283, 3.8918573e-05
        %v4296 = vadd.f32 %v4295, 0.001143296
        %v4297 = vmul.f32 %v4283, %v4296
        %v4298 = vadd.f32 %v4297, 0.014752088
        %v4299 = vmul.f32 %v4283, %v4298
        %v4300 = vadd.f32 %v4299, 0.112945676
        %v4301 = vmul.f32 %v4283, %v4300
        %v4302 = vadd.f32 %v4301, 0.4994258
        %v4303 = vmul.f32 %v4283, %v4302
        %v4304 = vadd.f32 %v4303, 1.0
        %v4305 = vrcp.pop %v4304
        %v4306 = vmul.f32 %v4304, %v4305
        %v4307 = vsub.f32 1.0, %v4306
        %v4308 = vmul.f32 %v4305, %v4307
        %v4309 = vadd.f32 %v4305, %v4308
        %vm4310 = vweird.f32 %v4304
        %vm4311 = vweird.f32 %v4305
        %vm4312 = vmor %vm4310, %vm4311
        %v4313 = vsel %vm4312, %v4305, %v4309
        %v4314 = vand.u32 2147483647, %v4304
        %vm4315 = vcmp.eq.f32.partialorder %v4314, 8.507059e+37
        %v4316 = vand.u32 %v4304, 2147483648
        %v4317 = vor.u32 1.1754944e-38, %v4316
        %v4318 = vsel %vm4315, %v4317, %v4313
        %v4319 = vmul.f32 %v4294, %v4318
        %v4320 = vmin.f32 %v4319, 1.0
        %v4321 = vmax.f32 %v4320, -1.0
        %v4322 = vmul.f32 %v2503, %v2503
        %v4323 = vmin.f32 16.0, %v4322
        %v4324 = vmul.f32 %v4323, 2.1237322e-06
        %v4325 = vadd.f32 %v4324, 0.00028619796
        %v4326 = vmul.f32 %v4323, %v4325
        %v4327 = vadd.f32 %v4326, 0.0036580483
        %v4328 = vmul.f32 %v4323, %v4327
        %v4329 = vadd.f32 %v4328, 0.05243302
        %v4330 = vmul.f32 %v4323, %v4329
        %v4331 = vadd.f32 %v4330, 0.18741608
        %v4332 = vmul.f32 %v4323, %v4331
        %v4333 = vadd.f32 %v4332, 1.1283791
        %v4334 = vmul.f32 %v2503, %v4333
        %v4335 = vmul.f32 %v4323, 3.8918573e-05
        %v4336 = vadd.f32 %v4335, 0.001143296
        %v4337 = vmul.f32 %v4323, %v4336
        %v4338 = vadd.f32 %v4337, 0.014752088
        %v4339 = vmul.f32 %v4323, %v4338
        %v4340 = vadd.f32 %v4339, 0.112945676
        %v4341 = vmul.f32 %v4323, %v4340
        %v4342 = vadd.f32 %v4341, 0.4994258
        %v4343 = vmul.f32 %v4323, %v4342
        %v4344 = vadd.f32 %v4343, 1.0
        %v4345 = vrcp.pop %v4344
        %v4346 = vmul.f32 %v4344, %v4345
        %v4347 = vsub.f32 1.0, %v4346
        %v4348 = vmul.f32 %v4345, %v4347
        %v4349 = vadd.f32 %v4345, %v4348
        %vm4350 = vweird.f32 %v4344
        %vm4351 = vweird.f32 %v4345
        %vm4352 = vmor %vm4350, %vm4351
        %v4353 = vsel %vm4352, %v4345, %v4349
        %v4354 = vand.u32 2147483647, %v4344
        %vm4355 = vcmp.eq.f32.partialorder %v4354, 8.507059e+37
        %v4356 = vand.u32 %v4344, 2147483648
        %v4357 = vor.u32 1.1754944e-38, %v4356
        %v4358 = vsel %vm4355, %v4357, %v4353
        %v4359 = vmul.f32 %v4334, %v4358
        %v4360 = vmin.f32 %v4359, 1.0
        %v4361 = vmax.f32 %v4360, -1.0
        %v4362 = vmul.f32 %v2504, %v2504
        %v4363 = vmin.f32 16.0, %v4362
        %v4364 = vmul.f32 %v4363, 2.1237322e-06
        %v4365 = vadd.f32 %v4364, 0.00028619796
        %v4366 = vmul.f32 %v4363, %v4365
        %v4367 = vadd.f32 %v4366, 0.0036580483
        %v4368 = vmul.f32 %v4363, %v4367
        %v4369 = vadd.f32 %v4368, 0.05243302
        %v4370 = vmul.f32 %v4363, %v4369
        %v4371 = vadd.f32 %v4370, 0.18741608
        %v4372 = vmul.f32 %v4363, %v4371
        %v4373 = vadd.f32 %v4372, 1.1283791
        %v4374 = vmul.f32 %v2504, %v4373
        %v4375 = vmul.f32 %v4363, 3.8918573e-05
        %v4376 = vadd.f32 %v4375, 0.001143296
        %v4377 = vmul.f32 %v4363, %v4376
        %v4378 = vadd.f32 %v4377, 0.014752088
        %v4379 = vmul.f32 %v4363, %v4378
        %v4380 = vadd.f32 %v4379, 0.112945676
        %v4381 = vmul.f32 %v4363, %v4380
        %v4382 = vadd.f32 %v4381, 0.4994258
        %v4383 = vmul.f32 %v4363, %v4382
        %v4384 = vadd.f32 %v4383, 1.0
        %v4385 = vrcp.pop %v4384
        %v4386 = vmul.f32 %v4384, %v4385
        %v4387 = vsub.f32 1.0, %v4386
        %v4388 = vmul.f32 %v4385, %v4387
        %v4389 = vadd.f32 %v4385, %v4388
        %vm4390 = vweird.f32 %v4384
        %vm4391 = vweird.f32 %v4385
        %vm4392 = vmor %vm4390, %vm4391
        %v4393 = vsel %vm4392, %v4385, %v4389
        %v4394 = vand.u32 2147483647, %v4384
        %vm4395 = vcmp.eq.f32.partialorder %v4394, 8.507059e+37
        %v4396 = vand.u32 %v4384, 2147483648
        %v4397 = vor.u32 1.1754944e-38, %v4396
        %v4398 = vsel %vm4395, %v4397, %v4393
        %v4399 = vmul.f32 %v4374, %v4398
        %v4400 = vmin.f32 %v4399, 1.0
        %v4401 = vmax.f32 %v4400, -1.0
        %v4402 = vmul.f32 %v2505, %v2505
        %v4403 = vmin.f32 16.0, %v4402
        %v4404 = vmul.f32 %v4403, 2.1237322e-06
        %v4405 = vadd.f32 %v4404, 0.00028619796
        %v4406 = vmul.f32 %v4403, %v4405
        %v4407 = vadd.f32 %v4406, 0.0036580483
        %v4408 = vmul.f32 %v4403, %v4407
        %v4409 = vadd.f32 %v4408, 0.05243302
        %v4410 = vmul.f32 %v4403, %v4409
        %v4411 = vadd.f32 %v4410, 0.18741608
        %v4412 = vmul.f32 %v4403, %v4411
        %v4413 = vadd.f32 %v4412, 1.1283791
        %v4414 = vmul.f32 %v2505, %v4413
        %v4415 = vmul.f32 %v4403, 3.8918573e-05
        %v4416 = vadd.f32 %v4415, 0.001143296
        %v4417 = vmul.f32 %v4403, %v4416
        %v4418 = vadd.f32 %v4417, 0.014752088
        %v4419 = vmul.f32 %v4403, %v4418
        %v4420 = vadd.f32 %v4419, 0.112945676
        %v4421 = vmul.f32 %v4403, %v4420
        %v4422 = vadd.f32 %v4421, 0.4994258
        %v4423 = vmul.f32 %v4403, %v4422
        %v4424 = vadd.f32 %v4423, 1.0
        %v4425 = vrcp.pop %v4424
        %v4426 = vmul.f32 %v4424, %v4425
        %v4427 = vsub.f32 1.0, %v4426
        %v4428 = vmul.f32 %v4425, %v4427
        %v4429 = vadd.f32 %v4425, %v4428
        %vm4430 = vweird.f32 %v4424
        %vm4431 = vweird.f32 %v4425
        %vm4432 = vmor %vm4430, %vm4431
        %v4433 = vsel %vm4432, %v4425, %v4429
        %v4434 = vand.u32 2147483647, %v4424
        %vm4435 = vcmp.eq.f32.partialorder %v4434, 8.507059e+37
        %v4436 = vand.u32 %v4424, 2147483648
        %v4437 = vor.u32 1.1754944e-38, %v4436
        %v4438 = vsel %vm4435, %v4437, %v4433
        %v4439 = vmul.f32 %v4414, %v4438
        %v4440 = vmin.f32 %v4439, 1.0
        %v4441 = vmax.f32 %v4440, -1.0
        %v4442 = vmul.f32 %v2506, %v2506
        %v4443 = vmin.f32 16.0, %v4442
        %v4444 = vmul.f32 %v4443, 2.1237322e-06
        %v4445 = vadd.f32 %v4444, 0.00028619796
        %v4446 = vmul.f32 %v4443, %v4445
        %v4447 = vadd.f32 %v4446, 0.0036580483
        %v4448 = vmul.f32 %v4443, %v4447
        %v4449 = vadd.f32 %v4448, 0.05243302
        %v4450 = vmul.f32 %v4443, %v4449
        %v4451 = vadd.f32 %v4450, 0.18741608
        %v4452 = vmul.f32 %v4443, %v4451
        %v4453 = vadd.f32 %v4452, 1.1283791
        %v4454 = vmul.f32 %v2506, %v4453
        %v4455 = vmul.f32 %v4443, 3.8918573e-05
        %v4456 = vadd.f32 %v4455, 0.001143296
        %v4457 = vmul.f32 %v4443, %v4456
        %v4458 = vadd.f32 %v4457, 0.014752088
        %v4459 = vmul.f32 %v4443, %v4458
        %v4460 = vadd.f32 %v4459, 0.112945676
        %v4461 = vmul.f32 %v4443, %v4460
        %v4462 = vadd.f32 %v4461, 0.4994258
        %v4463 = vmul.f32 %v4443, %v4462
        %v4464 = vadd.f32 %v4463, 1.0
        %v4465 = vrcp.pop %v4464
        %v4466 = vmul.f32 %v4464, %v4465
        %v4467 = vsub.f32 1.0, %v4466
        %v4468 = vmul.f32 %v4465, %v4467
        %v4469 = vadd.f32 %v4465, %v4468
        %vm4470 = vweird.f32 %v4464
        %vm4471 = vweird.f32 %v4465
        %vm4472 = vmor %vm4470, %vm4471
        %v4473 = vsel %vm4472, %v4465, %v4469
        %v4474 = vand.u32 2147483647, %v4464
        %vm4475 = vcmp.eq.f32.partialorder %v4474, 8.507059e+37
        %v4476 = vand.u32 %v4464, 2147483648
        %v4477 = vor.u32 1.1754944e-38, %v4476
        %v4478 = vsel %vm4475, %v4477, %v4473
        %v4479 = vmul.f32 %v4454, %v4478
        %v4480 = vmin.f32 %v4479, 1.0
        %v4481 = vmax.f32 %v4480, -1.0
        %v4482 = vmul.f32 %v2507, %v2507
        %v4483 = vmin.f32 16.0, %v4482
        %v4484 = vmul.f32 %v4483, 2.1237322e-06
        %v4485 = vadd.f32 %v4484, 0.00028619796
        %v4486 = vmul.f32 %v4483, %v4485
        %v4487 = vadd.f32 %v4486, 0.0036580483
        %v4488 = vmul.f32 %v4483, %v4487
        %v4489 = vadd.f32 %v4488, 0.05243302
        %v4490 = vmul.f32 %v4483, %v4489
        %v4491 = vadd.f32 %v4490, 0.18741608
        %v4492 = vmul.f32 %v4483, %v4491
        %v4493 = vadd.f32 %v4492, 1.1283791
        %v4494 = vmul.f32 %v2507, %v4493
        %v4495 = vmul.f32 %v4483, 3.8918573e-05
        %v4496 = vadd.f32 %v4495, 0.001143296
        %v4497 = vmul.f32 %v4483, %v4496
        %v4498 = vadd.f32 %v4497, 0.014752088
        %v4499 = vmul.f32 %v4483, %v4498
        %v4500 = vadd.f32 %v4499, 0.112945676
        %v4501 = vmul.f32 %v4483, %v4500
        %v4502 = vadd.f32 %v4501, 0.4994258
        %v4503 = vmul.f32 %v4483, %v4502
        %v4504 = vadd.f32 %v4503, 1.0
        %v4505 = vrcp.pop %v4504
        %v4506 = vmul.f32 %v4504, %v4505
        %v4507 = vsub.f32 1.0, %v4506
        %v4508 = vmul.f32 %v4505, %v4507
        %v4509 = vadd.f32 %v4505, %v4508
        %vm4510 = vweird.f32 %v4504
        %vm4511 = vweird.f32 %v4505
        %vm4512 = vmor %vm4510, %vm4511
        %v4513 = vsel %vm4512, %v4505, %v4509
        %v4514 = vand.u32 2147483647, %v4504
        %vm4515 = vcmp.eq.f32.partialorder %v4514, 8.507059e+37
        %v4516 = vand.u32 %v4504, 2147483648
        %v4517 = vor.u32 1.1754944e-38, %v4516
        %v4518 = vsel %vm4515, %v4517, %v4513
        %v4519 = vmul.f32 %v4494, %v4518
        %v4520 = vmin.f32 %v4519, 1.0
        %v4521 = vmax.f32 %v4520, -1.0
        %v4522 = vmul.f32 %v2508, %v2508
        %v4523 = vmin.f32 16.0, %v4522
        %v4524 = vmul.f32 %v4523, 2.1237322e-06
        %v4525 = vadd.f32 %v4524, 0.00028619796
        %v4526 = vmul.f32 %v4523, %v4525
        %v4527 = vadd.f32 %v4526, 0.0036580483
        %v4528 = vmul.f32 %v4523, %v4527
        %v4529 = vadd.f32 %v4528, 0.05243302
        %v4530 = vmul.f32 %v4523, %v4529
        %v4531 = vadd.f32 %v4530, 0.18741608
        %v4532 = vmul.f32 %v4523, %v4531
        %v4533 = vadd.f32 %v4532, 1.1283791
        %v4534 = vmul.f32 %v2508, %v4533
        %v4535 = vmul.f32 %v4523, 3.8918573e-05
        %v4536 = vadd.f32 %v4535, 0.001143296
        %v4537 = vmul.f32 %v4523, %v4536
        %v4538 = vadd.f32 %v4537, 0.014752088
        %v4539 = vmul.f32 %v4523, %v4538
        %v4540 = vadd.f32 %v4539, 0.112945676
        %v4541 = vmul.f32 %v4523, %v4540
        %v4542 = vadd.f32 %v4541, 0.4994258
        %v4543 = vmul.f32 %v4523, %v4542
        %v4544 = vadd.f32 %v4543, 1.0
        %v4545 = vrcp.pop %v4544
        %v4546 = vmul.f32 %v4544, %v4545
        %v4547 = vsub.f32 1.0, %v4546
        %v4548 = vmul.f32 %v4545, %v4547
        %v4549 = vadd.f32 %v4545, %v4548
        %vm4550 = vweird.f32 %v4544
        %vm4551 = vweird.f32 %v4545
        %vm4552 = vmor %vm4550, %vm4551
        %v4553 = vsel %vm4552, %v4545, %v4549
        %v4554 = vand.u32 2147483647, %v4544
        %vm4555 = vcmp.eq.f32.partialorder %v4554, 8.507059e+37
        %v4556 = vand.u32 %v4544, 2147483648
        %v4557 = vor.u32 1.1754944e-38, %v4556
        %v4558 = vsel %vm4555, %v4557, %v4553
        %v4559 = vmul.f32 %v4534, %v4558
        %v4560 = vmin.f32 %v4559, 1.0
        %v4561 = vmax.f32 %v4560, -1.0
        %v4562 = vmul.f32 %v2509, %v2509
        %v4563 = vmin.f32 16.0, %v4562
        %v4564 = vmul.f32 %v4563, 2.1237322e-06
        %v4565 = vadd.f32 %v4564, 0.00028619796
        %v4566 = vmul.f32 %v4563, %v4565
        %v4567 = vadd.f32 %v4566, 0.0036580483
        %v4568 = vmul.f32 %v4563, %v4567
        %v4569 = vadd.f32 %v4568, 0.05243302
        %v4570 = vmul.f32 %v4563, %v4569
        %v4571 = vadd.f32 %v4570, 0.18741608
        %v4572 = vmul.f32 %v4563, %v4571
        %v4573 = vadd.f32 %v4572, 1.1283791
        %v4574 = vmul.f32 %v2509, %v4573
        %v4575 = vmul.f32 %v4563, 3.8918573e-05
        %v4576 = vadd.f32 %v4575, 0.001143296
        %v4577 = vmul.f32 %v4563, %v4576
        %v4578 = vadd.f32 %v4577, 0.014752088
        %v4579 = vmul.f32 %v4563, %v4578
        %v4580 = vadd.f32 %v4579, 0.112945676
        %v4581 = vmul.f32 %v4563, %v4580
        %v4582 = vadd.f32 %v4581, 0.4994258
        %v4583 = vmul.f32 %v4563, %v4582
        %v4584 = vadd.f32 %v4583, 1.0
        %v4585 = vrcp.pop %v4584
        %v4586 = vmul.f32 %v4584, %v4585
        %v4587 = vsub.f32 1.0, %v4586
        %v4588 = vmul.f32 %v4585, %v4587
        %v4589 = vadd.f32 %v4585, %v4588
        %vm4590 = vweird.f32 %v4584
        %vm4591 = vweird.f32 %v4585
        %vm4592 = vmor %vm4590, %vm4591
        %v4593 = vsel %vm4592, %v4585, %v4589
        %v4594 = vand.u32 2147483647, %v4584
        %vm4595 = vcmp.eq.f32.partialorder %v4594, 8.507059e+37
        %v4596 = vand.u32 %v4584, 2147483648
        %v4597 = vor.u32 1.1754944e-38, %v4596
        %v4598 = vsel %vm4595, %v4597, %v4593
        %v4599 = vmul.f32 %v4574, %v4598
        %v4600 = vmin.f32 %v4599, 1.0
        %v4601 = vmax.f32 %v4600, -1.0
        %v4602 = vmul.f32 %v2510, %v2510
        %v4603 = vmin.f32 16.0, %v4602
        %v4604 = vmul.f32 %v4603, 2.1237322e-06
        %v4605 = vadd.f32 %v4604, 0.00028619796
        %v4606 = vmul.f32 %v4603, %v4605
        %v4607 = vadd.f32 %v4606, 0.0036580483
        %v4608 = vmul.f32 %v4603, %v4607
        %v4609 = vadd.f32 %v4608, 0.05243302
        %v4610 = vmul.f32 %v4603, %v4609
        %v4611 = vadd.f32 %v4610, 0.18741608
        %v4612 = vmul.f32 %v4603, %v4611
        %v4613 = vadd.f32 %v4612, 1.1283791
        %v4614 = vmul.f32 %v2510, %v4613
        %v4615 = vmul.f32 %v4603, 3.8918573e-05
        %v4616 = vadd.f32 %v4615, 0.001143296
        %v4617 = vmul.f32 %v4603, %v4616
        %v4618 = vadd.f32 %v4617, 0.014752088
        %v4619 = vmul.f32 %v4603, %v4618
        %v4620 = vadd.f32 %v4619, 0.112945676
        %v4621 = vmul.f32 %v4603, %v4620
        %v4622 = vadd.f32 %v4621, 0.4994258
        %v4623 = vmul.f32 %v4603, %v4622
        %v4624 = vadd.f32 %v4623, 1.0
        %v4625 = vrcp.pop %v4624
        %v4626 = vmul.f32 %v4624, %v4625
        %v4627 = vsub.f32 1.0, %v4626
        %v4628 = vmul.f32 %v4625, %v4627
        %v4629 = vadd.f32 %v4625, %v4628
        %vm4630 = vweird.f32 %v4624
        %vm4631 = vweird.f32 %v4625
        %vm4632 = vmor %vm4630, %vm4631
        %v4633 = vsel %vm4632, %v4625, %v4629
        %v4634 = vand.u32 2147483647, %v4624
        %vm4635 = vcmp.eq.f32.partialorder %v4634, 8.507059e+37
        %v4636 = vand.u32 %v4624, 2147483648
        %v4637 = vor.u32 1.1754944e-38, %v4636
        %v4638 = vsel %vm4635, %v4637, %v4633
        %v4639 = vmul.f32 %v4614, %v4638
        %v4640 = vmin.f32 %v4639, 1.0
        %v4641 = vmax.f32 %v4640, -1.0
        %v4642 = vmul.f32 %v2511, %v2511
        %v4643 = vmin.f32 16.0, %v4642
        %v4644 = vmul.f32 %v4643, 2.1237322e-06
        %v4645 = vadd.f32 %v4644, 0.00028619796
        %v4646 = vmul.f32 %v4643, %v4645
        %v4647 = vadd.f32 %v4646, 0.0036580483
        %v4648 = vmul.f32 %v4643, %v4647
        %v4649 = vadd.f32 %v4648, 0.05243302
        %v4650 = vmul.f32 %v4643, %v4649
        %v4651 = vadd.f32 %v4650, 0.18741608
        %v4652 = vmul.f32 %v4643, %v4651
        %v4653 = vadd.f32 %v4652, 1.1283791
        %v4654 = vmul.f32 %v2511, %v4653
        %v4655 = vmul.f32 %v4643, 3.8918573e-05
        %v4656 = vadd.f32 %v4655, 0.001143296
        %v4657 = vmul.f32 %v4643, %v4656
        %v4658 = vadd.f32 %v4657, 0.014752088
        %v4659 = vmul.f32 %v4643, %v4658
        %v4660 = vadd.f32 %v4659, 0.112945676
        %v4661 = vmul.f32 %v4643, %v4660
        %v4662 = vadd.f32 %v4661, 0.4994258
        %v4663 = vmul.f32 %v4643, %v4662
        %v4664 = vadd.f32 %v4663, 1.0
        %v4665 = vrcp.pop %v4664
        %v4666 = vmul.f32 %v4664, %v4665
        %v4667 = vsub.f32 1.0, %v4666
        %v4668 = vmul.f32 %v4665, %v4667
        %v4669 = vadd.f32 %v4665, %v4668
        %vm4670 = vweird.f32 %v4664
        %vm4671 = vweird.f32 %v4665
        %vm4672 = vmor %vm4670, %vm4671
        %v4673 = vsel %vm4672, %v4665, %v4669
        %v4674 = vand.u32 2147483647, %v4664
        %vm4675 = vcmp.eq.f32.partialorder %v4674, 8.507059e+37
        %v4676 = vand.u32 %v4664, 2147483648
        %v4677 = vor.u32 1.1754944e-38, %v4676
        %v4678 = vsel %vm4675, %v4677, %v4673
        %v4679 = vmul.f32 %v4654, %v4678
        %v4680 = vmin.f32 %v4679, 1.0
        %v4681 = vmax.f32 %v4680, -1.0
        %v4682 = vmul.f32 %v2512, %v2512
        %v4683 = vmin.f32 16.0, %v4682
        %v4684 = vmul.f32 %v4683, 2.1237322e-06
        %v4685 = vadd.f32 %v4684, 0.00028619796
        %v4686 = vmul.f32 %v4683, %v4685
        %v4687 = vadd.f32 %v4686, 0.0036580483
        %v4688 = vmul.f32 %v4683, %v4687
        %v4689 = vadd.f32 %v4688, 0.05243302
        %v4690 = vmul.f32 %v4683, %v4689
        %v4691 = vadd.f32 %v4690, 0.18741608
        %v4692 = vmul.f32 %v4683, %v4691
        %v4693 = vadd.f32 %v4692, 1.1283791
        %v4694 = vmul.f32 %v2512, %v4693
        %v4695 = vmul.f32 %v4683, 3.8918573e-05
        %v4696 = vadd.f32 %v4695, 0.001143296
        %v4697 = vmul.f32 %v4683, %v4696
        %v4698 = vadd.f32 %v4697, 0.014752088
        %v4699 = vmul.f32 %v4683, %v4698
        %v4700 = vadd.f32 %v4699, 0.112945676
        %v4701 = vmul.f32 %v4683, %v4700
        %v4702 = vadd.f32 %v4701, 0.4994258
        %v4703 = vmul.f32 %v4683, %v4702
        %v4704 = vadd.f32 %v4703, 1.0
        %v4705 = vrcp.pop %v4704
        %v4706 = vmul.f32 %v4704, %v4705
        %v4707 = vsub.f32 1.0, %v4706
        %v4708 = vmul.f32 %v4705, %v4707
        %v4709 = vadd.f32 %v4705, %v4708
        %vm4710 = vweird.f32 %v4704
        %vm4711 = vweird.f32 %v4705
        %vm4712 = vmor %vm4710, %vm4711
        %v4713 = vsel %vm4712, %v4705, %v4709
        %v4714 = vand.u32 2147483647, %v4704
        %vm4715 = vcmp.eq.f32.partialorder %v4714, 8.507059e+37
        %v4716 = vand.u32 %v4704, 2147483648
        %v4717 = vor.u32 1.1754944e-38, %v4716
        %v4718 = vsel %vm4715, %v4717, %v4713
        %v4719 = vmul.f32 %v4694, %v4718
        %v4720 = vmin.f32 %v4719, 1.0
        %v4721 = vmax.f32 %v4720, -1.0
        %v4722 = vmul.f32 %v2513, %v2513
        %v4723 = vmin.f32 16.0, %v4722
        %v4724 = vmul.f32 %v4723, 2.1237322e-06
        %v4725 = vadd.f32 %v4724, 0.00028619796
        %v4726 = vmul.f32 %v4723, %v4725
        %v4727 = vadd.f32 %v4726, 0.0036580483
        %v4728 = vmul.f32 %v4723, %v4727
        %v4729 = vadd.f32 %v4728, 0.05243302
        %v4730 = vmul.f32 %v4723, %v4729
        %v4731 = vadd.f32 %v4730, 0.18741608
        %v4732 = vmul.f32 %v4723, %v4731
        %v4733 = vadd.f32 %v4732, 1.1283791
        %v4734 = vmul.f32 %v2513, %v4733
        %v4735 = vmul.f32 %v4723, 3.8918573e-05
        %v4736 = vadd.f32 %v4735, 0.001143296
        %v4737 = vmul.f32 %v4723, %v4736
        %v4738 = vadd.f32 %v4737, 0.014752088
        %v4739 = vmul.f32 %v4723, %v4738
        %v4740 = vadd.f32 %v4739, 0.112945676
        %v4741 = vmul.f32 %v4723, %v4740
        %v4742 = vadd.f32 %v4741, 0.4994258
        %v4743 = vmul.f32 %v4723, %v4742
        %v4744 = vadd.f32 %v4743, 1.0
        %v4745 = vrcp.pop %v4744
        %v4746 = vmul.f32 %v4744, %v4745
        %v4747 = vsub.f32 1.0, %v4746
        %v4748 = vmul.f32 %v4745, %v4747
        %v4749 = vadd.f32 %v4745, %v4748
        %vm4750 = vweird.f32 %v4744
        %vm4751 = vweird.f32 %v4745
        %vm4752 = vmor %vm4750, %vm4751
        %v4753 = vsel %vm4752, %v4745, %v4749
        %v4754 = vand.u32 2147483647, %v4744
        %vm4755 = vcmp.eq.f32.partialorder %v4754, 8.507059e+37
        %v4756 = vand.u32 %v4744, 2147483648
        %v4757 = vor.u32 1.1754944e-38, %v4756
        %v4758 = vsel %vm4755, %v4757, %v4753
        %v4759 = vmul.f32 %v4734, %v4758
        %v4760 = vmin.f32 %v4759, 1.0
        %v4761 = vmax.f32 %v4760, -1.0
        %v4762 = vmul.f32 %v2514, %v2514
        %v4763 = vmin.f32 16.0, %v4762
        %v4764 = vmul.f32 %v4763, 2.1237322e-06
        %v4765 = vadd.f32 %v4764, 0.00028619796
        %v4766 = vmul.f32 %v4763, %v4765
        %v4767 = vadd.f32 %v4766, 0.0036580483
        %v4768 = vmul.f32 %v4763, %v4767
        %v4769 = vadd.f32 %v4768, 0.05243302
        %v4770 = vmul.f32 %v4763, %v4769
        %v4771 = vadd.f32 %v4770, 0.18741608
        %v4772 = vmul.f32 %v4763, %v4771
        %v4773 = vadd.f32 %v4772, 1.1283791
        %v4774 = vmul.f32 %v2514, %v4773
        %v4775 = vmul.f32 %v4763, 3.8918573e-05
        %v4776 = vadd.f32 %v4775, 0.001143296
        %v4777 = vmul.f32 %v4763, %v4776
        %v4778 = vadd.f32 %v4777, 0.014752088
        %v4779 = vmul.f32 %v4763, %v4778
        %v4780 = vadd.f32 %v4779, 0.112945676
        %v4781 = vmul.f32 %v4763, %v4780
        %v4782 = vadd.f32 %v4781, 0.4994258
        %v4783 = vmul.f32 %v4763, %v4782
        %v4784 = vadd.f32 %v4783, 1.0
        %v4785 = vrcp.pop %v4784
        %v4786 = vmul.f32 %v4784, %v4785
        %v4787 = vsub.f32 1.0, %v4786
        %v4788 = vmul.f32 %v4785, %v4787
        %v4789 = vadd.f32 %v4785, %v4788
        %vm4790 = vweird.f32 %v4784
        %vm4791 = vweird.f32 %v4785
        %vm4792 = vmor %vm4790, %vm4791
        %v4793 = vsel %vm4792, %v4785, %v4789
        %v4794 = vand.u32 2147483647, %v4784
        %vm4795 = vcmp.eq.f32.partialorder %v4794, 8.507059e+37
        %v4796 = vand.u32 %v4784, 2147483648
        %v4797 = vor.u32 1.1754944e-38, %v4796
        %v4798 = vsel %vm4795, %v4797, %v4793
        %v4799 = vmul.f32 %v4774, %v4798
        %v4800 = vmin.f32 %v4799, 1.0
        %v4801 = vmax.f32 %v4800, -1.0
        %v4802 = vmul.f32 %v2515, %v2515
        %v4803 = vmin.f32 16.0, %v4802
        %v4804 = vmul.f32 %v4803, 2.1237322e-06
        %v4805 = vadd.f32 %v4804, 0.00028619796
        %v4806 = vmul.f32 %v4803, %v4805
        %v4807 = vadd.f32 %v4806, 0.0036580483
        %v4808 = vmul.f32 %v4803, %v4807
        %v4809 = vadd.f32 %v4808, 0.05243302
        %v4810 = vmul.f32 %v4803, %v4809
        %v4811 = vadd.f32 %v4810, 0.18741608
        %v4812 = vmul.f32 %v4803, %v4811
        %v4813 = vadd.f32 %v4812, 1.1283791
        %v4814 = vmul.f32 %v2515, %v4813
        %v4815 = vmul.f32 %v4803, 3.8918573e-05
        %v4816 = vadd.f32 %v4815, 0.001143296
        %v4817 = vmul.f32 %v4803, %v4816
        %v4818 = vadd.f32 %v4817, 0.014752088
        %v4819 = vmul.f32 %v4803, %v4818
        %v4820 = vadd.f32 %v4819, 0.112945676
        %v4821 = vmul.f32 %v4803, %v4820
        %v4822 = vadd.f32 %v4821, 0.4994258
        %v4823 = vmul.f32 %v4803, %v4822
        %v4824 = vadd.f32 %v4823, 1.0
        %v4825 = vrcp.pop %v4824
        %v4826 = vmul.f32 %v4824, %v4825
        %v4827 = vsub.f32 1.0, %v4826
        %v4828 = vmul.f32 %v4825, %v4827
        %v4829 = vadd.f32 %v4825, %v4828
        %vm4830 = vweird.f32 %v4824
        %vm4831 = vweird.f32 %v4825
        %vm4832 = vmor %vm4830, %vm4831
        %v4833 = vsel %vm4832, %v4825, %v4829
        %v4834 = vand.u32 2147483647, %v4824
        %vm4835 = vcmp.eq.f32.partialorder %v4834, 8.507059e+37
        %v4836 = vand.u32 %v4824, 2147483648
        %v4837 = vor.u32 1.1754944e-38, %v4836
        %v4838 = vsel %vm4835, %v4837, %v4833
        %v4839 = vmul.f32 %v4814, %v4838
        %v4840 = vmin.f32 %v4839, 1.0
        %v4841 = vmax.f32 %v4840, -1.0
        %v4842 = vmul.f32 %v2516, %v2516
        %v4843 = vmin.f32 16.0, %v4842
        %v4844 = vmul.f32 %v4843, 2.1237322e-06
        %v4845 = vadd.f32 %v4844, 0.00028619796
        %v4846 = vmul.f32 %v4843, %v4845
        %v4847 = vadd.f32 %v4846, 0.0036580483
        %v4848 = vmul.f32 %v4843, %v4847
        %v4849 = vadd.f32 %v4848, 0.05243302
        %v4850 = vmul.f32 %v4843, %v4849
        %v4851 = vadd.f32 %v4850, 0.18741608
        %v4852 = vmul.f32 %v4843, %v4851
        %v4853 = vadd.f32 %v4852, 1.1283791
        %v4854 = vmul.f32 %v2516, %v4853
        %v4855 = vmul.f32 %v4843, 3.8918573e-05
        %v4856 = vadd.f32 %v4855, 0.001143296
        %v4857 = vmul.f32 %v4843, %v4856
        %v4858 = vadd.f32 %v4857, 0.014752088
        %v4859 = vmul.f32 %v4843, %v4858
        %v4860 = vadd.f32 %v4859, 0.112945676
        %v4861 = vmul.f32 %v4843, %v4860
        %v4862 = vadd.f32 %v4861, 0.4994258
        %v4863 = vmul.f32 %v4843, %v4862
        %v4864 = vadd.f32 %v4863, 1.0
        %v4865 = vrcp.pop %v4864
        %v4866 = vmul.f32 %v4864, %v4865
        %v4867 = vsub.f32 1.0, %v4866
        %v4868 = vmul.f32 %v4865, %v4867
        %v4869 = vadd.f32 %v4865, %v4868
        %vm4870 = vweird.f32 %v4864
        %vm4871 = vweird.f32 %v4865
        %vm4872 = vmor %vm4870, %vm4871
        %v4873 = vsel %vm4872, %v4865, %v4869
        %v4874 = vand.u32 2147483647, %v4864
        %vm4875 = vcmp.eq.f32.partialorder %v4874, 8.507059e+37
        %v4876 = vand.u32 %v4864, 2147483648
        %v4877 = vor.u32 1.1754944e-38, %v4876
        %v4878 = vsel %vm4875, %v4877, %v4873
        %v4879 = vmul.f32 %v4854, %v4878
        %v4880 = vmin.f32 %v4879, 1.0
        %v4881 = vmax.f32 %v4880, -1.0
        %v4882 = vmul.f32 %v2517, %v2517
        %v4883 = vmin.f32 16.0, %v4882
        %v4884 = vmul.f32 %v4883, 2.1237322e-06
        %v4885 = vadd.f32 %v4884, 0.00028619796
        %v4886 = vmul.f32 %v4883, %v4885
        %v4887 = vadd.f32 %v4886, 0.0036580483
        %v4888 = vmul.f32 %v4883, %v4887
        %v4889 = vadd.f32 %v4888, 0.05243302
        %v4890 = vmul.f32 %v4883, %v4889
        %v4891 = vadd.f32 %v4890, 0.18741608
        %v4892 = vmul.f32 %v4883, %v4891
        %v4893 = vadd.f32 %v4892, 1.1283791
        %v4894 = vmul.f32 %v2517, %v4893
        %v4895 = vmul.f32 %v4883, 3.8918573e-05
        %v4896 = vadd.f32 %v4895, 0.001143296
        %v4897 = vmul.f32 %v4883, %v4896
        %v4898 = vadd.f32 %v4897, 0.014752088
        %v4899 = vmul.f32 %v4883, %v4898
        %v4900 = vadd.f32 %v4899, 0.112945676
        %v4901 = vmul.f32 %v4883, %v4900
        %v4902 = vadd.f32 %v4901, 0.4994258
        %v4903 = vmul.f32 %v4883, %v4902
        %v4904 = vadd.f32 %v4903, 1.0
        %v4905 = vrcp.pop %v4904
        %v4906 = vmul.f32 %v4904, %v4905
        %v4907 = vsub.f32 1.0, %v4906
        %v4908 = vmul.f32 %v4905, %v4907
        %v4909 = vadd.f32 %v4905, %v4908
        %vm4910 = vweird.f32 %v4904
        %vm4911 = vweird.f32 %v4905
        %vm4912 = vmor %vm4910, %vm4911
        %v4913 = vsel %vm4912, %v4905, %v4909
        %v4914 = vand.u32 2147483647, %v4904
        %vm4915 = vcmp.eq.f32.partialorder %v4914, 8.507059e+37
        %v4916 = vand.u32 %v4904, 2147483648
        %v4917 = vor.u32 1.1754944e-38, %v4916
        %v4918 = vsel %vm4915, %v4917, %v4913
        %v4919 = vmul.f32 %v4894, %v4918
        %v4920 = vmin.f32 %v4919, 1.0
        %v4921 = vmax.f32 %v4920, -1.0
        %v4922 = vmul.f32 %v2518, %v2518
        %v4923 = vmin.f32 16.0, %v4922
        %v4924 = vmul.f32 %v4923, 2.1237322e-06
        %v4925 = vadd.f32 %v4924, 0.00028619796
        %v4926 = vmul.f32 %v4923, %v4925
        %v4927 = vadd.f32 %v4926, 0.0036580483
        %v4928 = vmul.f32 %v4923, %v4927
        %v4929 = vadd.f32 %v4928, 0.05243302
        %v4930 = vmul.f32 %v4923, %v4929
        %v4931 = vadd.f32 %v4930, 0.18741608
        %v4932 = vmul.f32 %v4923, %v4931
        %v4933 = vadd.f32 %v4932, 1.1283791
        %v4934 = vmul.f32 %v2518, %v4933
        %v4935 = vmul.f32 %v4923, 3.8918573e-05
        %v4936 = vadd.f32 %v4935, 0.001143296
        %v4937 = vmul.f32 %v4923, %v4936
        %v4938 = vadd.f32 %v4937, 0.014752088
        %v4939 = vmul.f32 %v4923, %v4938
        %v4940 = vadd.f32 %v4939, 0.112945676
        %v4941 = vmul.f32 %v4923, %v4940
        %v4942 = vadd.f32 %v4941, 0.4994258
        %v4943 = vmul.f32 %v4923, %v4942
        %v4944 = vadd.f32 %v4943, 1.0
        %v4945 = vrcp.pop %v4944
        %v4946 = vmul.f32 %v4944, %v4945
        %v4947 = vsub.f32 1.0, %v4946
        %v4948 = vmul.f32 %v4945, %v4947
        %v4949 = vadd.f32 %v4945, %v4948
        %vm4950 = vweird.f32 %v4944
        %vm4951 = vweird.f32 %v4945
        %vm4952 = vmor %vm4950, %vm4951
        %v4953 = vsel %vm4952, %v4945, %v4949
        %v4954 = vand.u32 2147483647, %v4944
        %vm4955 = vcmp.eq.f32.partialorder %v4954, 8.507059e+37
        %v4956 = vand.u32 %v4944, 2147483648
        %v4957 = vor.u32 1.1754944e-38, %v4956
        %v4958 = vsel %vm4955, %v4957, %v4953
        %v4959 = vmul.f32 %v4934, %v4958
        %v4960 = vmin.f32 %v4959, 1.0
        %v4961 = vmax.f32 %v4960, -1.0
        %v4962 = vmul.f32 %v2519, %v2519
        %v4963 = vmin.f32 16.0, %v4962
        %v4964 = vmul.f32 %v4963, 2.1237322e-06
        %v4965 = vadd.f32 %v4964, 0.00028619796
        %v4966 = vmul.f32 %v4963, %v4965
        %v4967 = vadd.f32 %v4966, 0.0036580483
        %v4968 = vmul.f32 %v4963, %v4967
        %v4969 = vadd.f32 %v4968, 0.05243302
        %v4970 = vmul.f32 %v4963, %v4969
        %v4971 = vadd.f32 %v4970, 0.18741608
        %v4972 = vmul.f32 %v4963, %v4971
        %v4973 = vadd.f32 %v4972, 1.1283791
        %v4974 = vmul.f32 %v2519, %v4973
        %v4975 = vmul.f32 %v4963, 3.8918573e-05
        %v4976 = vadd.f32 %v4975, 0.001143296
        %v4977 = vmul.f32 %v4963, %v4976
        %v4978 = vadd.f32 %v4977, 0.014752088
        %v4979 = vmul.f32 %v4963, %v4978
        %v4980 = vadd.f32 %v4979, 0.112945676
        %v4981 = vmul.f32 %v4963, %v4980
        %v4982 = vadd.f32 %v4981, 0.4994258
        %v4983 = vmul.f32 %v4963, %v4982
        %v4984 = vadd.f32 %v4983, 1.0
        %v4985 = vrcp.pop %v4984
        %v4986 = vmul.f32 %v4984, %v4985
        %v4987 = vsub.f32 1.0, %v4986
        %v4988 = vmul.f32 %v4985, %v4987
        %v4989 = vadd.f32 %v4985, %v4988
        %vm4990 = vweird.f32 %v4984
        %vm4991 = vweird.f32 %v4985
        %vm4992 = vmor %vm4990, %vm4991
        %v4993 = vsel %vm4992, %v4985, %v4989
        %v4994 = vand.u32 2147483647, %v4984
        %vm4995 = vcmp.eq.f32.partialorder %v4994, 8.507059e+37
        %v4996 = vand.u32 %v4984, 2147483648
        %v4997 = vor.u32 1.1754944e-38, %v4996
        %v4998 = vsel %vm4995, %v4997, %v4993
        %v4999 = vmul.f32 %v4974, %v4998
        %v5000 = vmin.f32 %v4999, 1.0
        %v5001 = vmax.f32 %v5000, -1.0
        %v5002 = vmul.f32 %v2520, %v2520
        %v5003 = vmin.f32 16.0, %v5002
        %v5004 = vmul.f32 %v5003, 2.1237322e-06
        %v5005 = vadd.f32 %v5004, 0.00028619796
        %v5006 = vmul.f32 %v5003, %v5005
        %v5007 = vadd.f32 %v5006, 0.0036580483
        %v5008 = vmul.f32 %v5003, %v5007
        %v5009 = vadd.f32 %v5008, 0.05243302
        %v5010 = vmul.f32 %v5003, %v5009
        %v5011 = vadd.f32 %v5010, 0.18741608
        %v5012 = vmul.f32 %v5003, %v5011
        %v5013 = vadd.f32 %v5012, 1.1283791
        %v5014 = vmul.f32 %v2520, %v5013
        %v5015 = vmul.f32 %v5003, 3.8918573e-05
        %v5016 = vadd.f32 %v5015, 0.001143296
        %v5017 = vmul.f32 %v5003, %v5016
        %v5018 = vadd.f32 %v5017, 0.014752088
        %v5019 = vmul.f32 %v5003, %v5018
        %v5020 = vadd.f32 %v5019, 0.112945676
        %v5021 = vmul.f32 %v5003, %v5020
        %v5022 = vadd.f32 %v5021, 0.4994258
        %v5023 = vmul.f32 %v5003, %v5022
        %v5024 = vadd.f32 %v5023, 1.0
        %v5025 = vrcp.pop %v5024
        %v5026 = vmul.f32 %v5024, %v5025
        %v5027 = vsub.f32 1.0, %v5026
        %v5028 = vmul.f32 %v5025, %v5027
        %v5029 = vadd.f32 %v5025, %v5028
        %vm5030 = vweird.f32 %v5024
        %vm5031 = vweird.f32 %v5025
        %vm5032 = vmor %vm5030, %vm5031
        %v5033 = vsel %vm5032, %v5025, %v5029
        %v5034 = vand.u32 2147483647, %v5024
        %vm5035 = vcmp.eq.f32.partialorder %v5034, 8.507059e+37
        %v5036 = vand.u32 %v5024, 2147483648
        %v5037 = vor.u32 1.1754944e-38, %v5036
        %v5038 = vsel %vm5035, %v5037, %v5033
        %v5039 = vmul.f32 %v5014, %v5038
        %v5040 = vmin.f32 %v5039, 1.0
        %v5041 = vmax.f32 %v5040, -1.0
        %v5042 = vmul.f32 %v2521, %v2521
        %v5043 = vmin.f32 16.0, %v5042
        %v5044 = vmul.f32 %v5043, 2.1237322e-06
        %v5045 = vadd.f32 %v5044, 0.00028619796
        %v5046 = vmul.f32 %v5043, %v5045
        %v5047 = vadd.f32 %v5046, 0.0036580483
        %v5048 = vmul.f32 %v5043, %v5047
        %v5049 = vadd.f32 %v5048, 0.05243302
        %v5050 = vmul.f32 %v5043, %v5049
        %v5051 = vadd.f32 %v5050, 0.18741608
        %v5052 = vmul.f32 %v5043, %v5051
        %v5053 = vadd.f32 %v5052, 1.1283791
        %v5054 = vmul.f32 %v2521, %v5053
        %v5055 = vmul.f32 %v5043, 3.8918573e-05
        %v5056 = vadd.f32 %v5055, 0.001143296
        %v5057 = vmul.f32 %v5043, %v5056
        %v5058 = vadd.f32 %v5057, 0.014752088
        %v5059 = vmul.f32 %v5043, %v5058
        %v5060 = vadd.f32 %v5059, 0.112945676
        %v5061 = vmul.f32 %v5043, %v5060
        %v5062 = vadd.f32 %v5061, 0.4994258
        %v5063 = vmul.f32 %v5043, %v5062
        %v5064 = vadd.f32 %v5063, 1.0
        %v5065 = vrcp.pop %v5064
        %v5066 = vmul.f32 %v5064, %v5065
        %v5067 = vsub.f32 1.0, %v5066
        %v5068 = vmul.f32 %v5065, %v5067
        %v5069 = vadd.f32 %v5065, %v5068
        %vm5070 = vweird.f32 %v5064
        %vm5071 = vweird.f32 %v5065
        %vm5072 = vmor %vm5070, %vm5071
        %v5073 = vsel %vm5072, %v5065, %v5069
        %v5074 = vand.u32 2147483647, %v5064
        %vm5075 = vcmp.eq.f32.partialorder %v5074, 8.507059e+37
        %v5076 = vand.u32 %v5064, 2147483648
        %v5077 = vor.u32 1.1754944e-38, %v5076
        %v5078 = vsel %vm5075, %v5077, %v5073
        %v5079 = vmul.f32 %v5054, %v5078
        %v5080 = vmin.f32 %v5079, 1.0
        %v5081 = vmax.f32 %v5080, -1.0
        %v5082 = vadd.f32 %v2561, 1.0
        %v5083 = vadd.f32 %v2601, 1.0
        %v5084 = vadd.f32 %v2641, 1.0
        %v5085 = vadd.f32 %v2681, 1.0
        %v5086 = vadd.f32 %v2721, 1.0
        %v5087 = vadd.f32 %v2761, 1.0
        %v5088 = vadd.f32 %v2801, 1.0
        %v5089 = vadd.f32 %v2841, 1.0
        %v5090 = vadd.f32 %v2881, 1.0
        %v5091 = vadd.f32 %v2921, 1.0
        %v5092 = vadd.f32 %v2961, 1.0
        %v5093 = vadd.f32 %v3001, 1.0
        %v5094 = vadd.f32 %v3041, 1.0
        %v5095 = vadd.f32 %v3081, 1.0
        %v5096 = vadd.f32 %v3121, 1.0
        %v5097 = vadd.f32 %v3161, 1.0
        %v5098 = vadd.f32 %v3201, 1.0
        %v5099 = vadd.f32 %v3241, 1.0
        %v5100 = vadd.f32 %v3281, 1.0
        %v5101 = vadd.f32 %v3321, 1.0
        %v5102 = vadd.f32 %v3361, 1.0
        %v5103 = vadd.f32 %v3401, 1.0
        %v5104 = vadd.f32 %v3441, 1.0
        %v5105 = vadd.f32 %v3481, 1.0
        %v5106 = vadd.f32 %v3521, 1.0
        %v5107 = vadd.f32 %v3561, 1.0
        %v5108 = vadd.f32 %v3601, 1.0
        %v5109 = vadd.f32 %v3641, 1.0
        %v5110 = vadd.f32 %v3681, 1.0
        %v5111 = vadd.f32 %v3721, 1.0
        %v5112 = vadd.f32 %v3761, 1.0
        %v5113 = vadd.f32 %v3801, 1.0
        %v5114 = vadd.f32 %v3841, 1.0
        %v5115 = vadd.f32 %v3881, 1.0
        %v5116 = vadd.f32 %v3921, 1.0
        %v5117 = vadd.f32 %v3961, 1.0
        %v5118 = vadd.f32 %v4001, 1.0
        %v5119 = vadd.f32 %v4041, 1.0
        %v5120 = vadd.f32 %v4081, 1.0
        %v5121 = vadd.f32 %v4121, 1.0
        %v5122 = vadd.f32 %v4161, 1.0
        %v5123 = vadd.f32 %v4201, 1.0
        %v5124 = vadd.f32 %v4241, 1.0
        %v5125 = vadd.f32 %v4281, 1.0
        %v5126 = vadd.f32 %v4321, 1.0
        %v5127 = vadd.f32 %v4361, 1.0
        %v5128 = vadd.f32 %v4401, 1.0
        %v5129 = vadd.f32 %v4441, 1.0
        %v5130 = vadd.f32 %v4481, 1.0
        %v5131 = vadd.f32 %v4521, 1.0
        %v5132 = vadd.f32 %v4561, 1.0
        %v5133 = vadd.f32 %v4601, 1.0
        %v5134 = vadd.f32 %v4641, 1.0
        %v5135 = vadd.f32 %v4681, 1.0
        %v5136 = vadd.f32 %v4721, 1.0
        %v5137 = vadd.f32 %v4761, 1.0
        %v5138 = vadd.f32 %v4801, 1.0
        %v5139 = vadd.f32 %v4841, 1.0
        %v5140 = vadd.f32 %v4881, 1.0
        %v5141 = vadd.f32 %v4921, 1.0
        %v5142 = vadd.f32 %v4961, 1.0
        %v5143 = vadd.f32 %v5001, 1.0
        %v5144 = vadd.f32 %v5041, 1.0
        %v5145 = vadd.f32 %v5081, 1.0
        %v5146 = vmul.f32 %v2394, %v5082
        %v5147 = vmul.f32 %v2395, %v5083
        %v5148 = vmul.f32 %v2396, %v5084
        %v5149 = vmul.f32 %v2397, %v5085
        %v5150 = vmul.f32 %v2398, %v5086
        %v5151 = vmul.f32 %v2399, %v5087
        %v5152 = vmul.f32 %v2400, %v5088
        %v5153 = vmul.f32 %v2401, %v5089
        %v5154 = vmul.f32 %v2402, %v5090
        %v5155 = vmul.f32 %v2403, %v5091
        %v5156 = vmul.f32 %v2404, %v5092
        %v5157 = vmul.f32 %v2405, %v5093
        %v5158 = vmul.f32 %v2406, %v5094
        %v5159 = vmul.f32 %v2407, %v5095
        %v5160 = vmul.f32 %v2408, %v5096
        %v5161 = vmul.f32 %v2409, %v5097
        %v5162 = vmul.f32 %v2410, %v5098
        %v5163 = vmul.f32 %v2411, %v5099
        %v5164 = vmul.f32 %v2412, %v5100
        %v5165 = vmul.f32 %v2413, %v5101
        %v5166 = vmul.f32 %v2414, %v5102
        %v5167 = vmul.f32 %v2415, %v5103
        %v5168 = vmul.f32 %v2416, %v5104
        %v5169 = vmul.f32 %v2417, %v5105
        %v5170 = vmul.f32 %v2418, %v5106
        %v5171 = vmul.f32 %v2419, %v5107
        %v5172 = vmul.f32 %v2420, %v5108
        %v5173 = vmul.f32 %v2421, %v5109
        %v5174 = vmul.f32 %v2422, %v5110
        %v5175 = vmul.f32 %v2423, %v5111
        %v5176 = vmul.f32 %v2424, %v5112
        %v5177 = vmul.f32 %v2425, %v5113
        %v5178 = vmul.f32 %v2426, %v5114
        %v5179 = vmul.f32 %v2427, %v5115
        %v5180 = vmul.f32 %v2428, %v5116
        %v5181 = vmul.f32 %v2429, %v5117
        %v5182 = vmul.f32 %v2430, %v5118
        %v5183 = vmul.f32 %v2431, %v5119
        %v5184 = vmul.f32 %v2432, %v5120
        %v5185 = vmul.f32 %v2433, %v5121
        %v5186 = vmul.f32 %v2434, %v5122
        %v5187 = vmul.f32 %v2435, %v5123
        %v5188 = vmul.f32 %v2436, %v5124
        %v5189 = vmul.f32 %v2437, %v5125
        %v5190 = vmul.f32 %v2438, %v5126
        %v5191 = vmul.f32 %v2439, %v5127
        %v5192 = vmul.f32 %v2440, %v5128
        %v5193 = vmul.f32 %v2441, %v5129
        %v5194 = vmul.f32 %v2442, %v5130
        %v5195 = vmul.f32 %v2443, %v5131
        %v5196 = vmul.f32 %v2444, %v5132
        %v5197 = vmul.f32 %v2445, %v5133
        %v5198 = vmul.f32 %v2446, %v5134
        %v5199 = vmul.f32 %v2447, %v5135
        %v5200 = vmul.f32 %v2448, %v5136
        %v5201 = vmul.f32 %v2449, %v5137
        %v5202 = vmul.f32 %v2450, %v5138
        %v5203 = vmul.f32 %v2451, %v5139
        %v5204 = vmul.f32 %v2452, %v5140
        %v5205 = vmul.f32 %v2453, %v5141
        %v5206 = vmul.f32 %v2454, %v5142
        %v5207 = vmul.f32 %v2455, %v5143
        %v5208 = vmul.f32 %v2456, %v5144
        %v5209 = vmul.f32 %v2457, %v5145
        %v5210 = vpack.c.bf16 %v5148, %v5146
        %v5211 = vpack.c.bf16 %v5149, %v5147
        %v5212 = vpack.c.bf16 %v5152, %v5150
        %v5213 = vpack.c.bf16 %v5153, %v5151
        %v5214 = vpack.c.bf16 %v5156, %v5154
        %v5215 = vpack.c.bf16 %v5157, %v5155
        %v5216 = vpack.c.bf16 %v5160, %v5158
        %v5217 = vpack.c.bf16 %v5161, %v5159
        %v5218 = vpack.c.bf16 %v5164, %v5162
        %v5219 = vpack.c.bf16 %v5165, %v5163
        %v5220 = vpack.c.bf16 %v5168, %v5166
        %v5221 = vpack.c.bf16 %v5169, %v5167
        %v5222 = vpack.c.bf16 %v5172, %v5170
        %v5223 = vpack.c.bf16 %v5173, %v5171
        %v5224 = vpack.c.bf16 %v5176, %v5174
        %v5225 = vpack.c.bf16 %v5177, %v5175
        %v5226 = vpack.c.bf16 %v5180, %v5178
        %v5227 = vpack.c.bf16 %v5181, %v5179
        %v5228 = vpack.c.bf16 %v5184, %v5182
        %v5229 = vpack.c.bf16 %v5185, %v5183
        %v5230 = vpack.c.bf16 %v5188, %v5186
        %v5231 = vpack.c.bf16 %v5189, %v5187
        %v5232 = vpack.c.bf16 %v5192, %v5190
        %v5233 = vpack.c.bf16 %v5193, %v5191
        %v5234 = vpack.c.bf16 %v5196, %v5194
        %v5235 = vpack.c.bf16 %v5197, %v5195
        %v5236 = vpack.c.bf16 %v5200, %v5198
        %v5237 = vpack.c.bf16 %v5201, %v5199
        %v5238 = vpack.c.bf16 %v5204, %v5202
        %v5239 = vpack.c.bf16 %v5205, %v5203
        %v5240 = vpack.c.bf16 %v5208, %v5206
        %v5241 = vpack.c.bf16 %v5209, %v5207
        %v5242 = vld [vmem:[#allocation12] sm:$0xf]
        %v5243 = vld [vmem:[#allocation12 + $0x4] sm:$0xf]
        %v5244 = vld [vmem:[#allocation12 + $0x8] sm:$0xf]
        %v5245 = vld [vmem:[#allocation12 + $0xc] sm:$0xf]
        %v5246 = vld [vmem:[#allocation12 + $0x10] sm:$0xf]
        %v5247 = vld [vmem:[#allocation12 + $0x14] sm:$0xf]
        %v5248 = vld [vmem:[#allocation12 + $0x18] sm:$0xf]
        %v5249 = vld [vmem:[#allocation12 + $0x1c] sm:$0xf]
        %v5250 = vld [vmem:[#allocation12 + $0x20] sm:$0xf]
        %v5251 = vld [vmem:[#allocation12 + $0x24] sm:$0xf]
        %v5252 = vld [vmem:[#allocation12 + $0x28] sm:$0xf]
        %v5253 = vld [vmem:[#allocation12 + $0x2c] sm:$0xf]
        %v5254 = vld [vmem:[#allocation12 + $0x30] sm:$0xf]
        %v5255 = vld [vmem:[#allocation12 + $0x34] sm:$0xf]
        %v5256 = vld [vmem:[#allocation12 + $0x38] sm:$0xf]
        %v5257 = vld [vmem:[#allocation12 + $0x3c] sm:$0xf]
        %v5258 = vld [vmem:[#allocation12 + $0x40] sm:$0xf]
        %v5259 = vld [vmem:[#allocation12 + $0x44] sm:$0xf]
        %v5260 = vld [vmem:[#allocation12 + $0x48] sm:$0xf]
        %v5261 = vld [vmem:[#allocation12 + $0x4c] sm:$0xf]
        %v5262 = vld [vmem:[#allocation12 + $0x50] sm:$0xf]
        %v5263 = vld [vmem:[#allocation12 + $0x54] sm:$0xf]
        %v5264 = vld [vmem:[#allocation12 + $0x58] sm:$0xf]
        %v5265 = vld [vmem:[#allocation12 + $0x5c] sm:$0xf]
        %v5266 = vld [vmem:[#allocation12 + $0x60] sm:$0xf]
        %v5267 = vld [vmem:[#allocation12 + $0x64] sm:$0xf]
        %v5268 = vld [vmem:[#allocation12 + $0x68] sm:$0xf]
        %v5269 = vld [vmem:[#allocation12 + $0x6c] sm:$0xf]
        %v5270 = vld [vmem:[#allocation12 + $0x70] sm:$0xf]
        %v5271 = vld [vmem:[#allocation12 + $0x74] sm:$0xf]
        %v5272 = vld [vmem:[#allocation12 + $0x78] sm:$0xf]
        %v5273 = vld [vmem:[#allocation12 + $0x7c] sm:$0xf]
        %v5274 = vld [vmem:[%s10] sm:$0x1]
        %v5276 = vperm.slane %v5274, 0
        %v5310 = vunpack.c.l.b16 %v5242
        %v5311 = vunpack.c.l.b16 %v5243
        %v5312 = vunpack.c.l.b16 %v5244
        %v5313 = vunpack.c.l.b16 %v5245
        %v5314 = vunpack.c.l.b16 %v5246
        %v5315 = vunpack.c.l.b16 %v5247
        %v5316 = vunpack.c.l.b16 %v5248
        %v5317 = vunpack.c.l.b16 %v5249
        %v5318 = vunpack.c.l.b16 %v5250
        %v5319 = vunpack.c.l.b16 %v5251
        %v5320 = vunpack.c.l.b16 %v5252
        %v5321 = vunpack.c.l.b16 %v5253
        %v5322 = vunpack.c.l.b16 %v5254
        %v5323 = vunpack.c.l.b16 %v5255
        %v5324 = vunpack.c.l.b16 %v5256
        %v5325 = vunpack.c.l.b16 %v5257
        %v5326 = vunpack.c.l.b16 %v5258
        %v5327 = vunpack.c.l.b16 %v5259
        %v5328 = vunpack.c.l.b16 %v5260
        %v5329 = vunpack.c.l.b16 %v5261
        %v5330 = vunpack.c.l.b16 %v5262
        %v5331 = vunpack.c.l.b16 %v5263
        %v5332 = vunpack.c.l.b16 %v5264
        %v5333 = vunpack.c.l.b16 %v5265
        %v5334 = vunpack.c.l.b16 %v5266
        %v5335 = vunpack.c.l.b16 %v5267
        %v5336 = vunpack.c.l.b16 %v5268
        %v5337 = vunpack.c.l.b16 %v5269
        %v5338 = vunpack.c.l.b16 %v5270
        %v5339 = vunpack.c.l.b16 %v5271
        %v5340 = vunpack.c.l.b16 %v5272
        %v5341 = vunpack.c.l.b16 %v5273
        %v5342 = vpack.c.b16 %v5311, %v5310
        %v5343 = vpack.c.b16 %v5313, %v5312
        %v5344 = vpack.c.b16 %v5315, %v5314
        %v5345 = vpack.c.b16 %v5317, %v5316
        %v5346 = vpack.c.b16 %v5319, %v5318
        %v5347 = vpack.c.b16 %v5321, %v5320
        %v5348 = vpack.c.b16 %v5323, %v5322
        %v5349 = vpack.c.b16 %v5325, %v5324
        %v5350 = vpack.c.b16 %v5327, %v5326
        %v5351 = vpack.c.b16 %v5329, %v5328
        %v5352 = vpack.c.b16 %v5331, %v5330
        %v5353 = vpack.c.b16 %v5333, %v5332
        %v5354 = vpack.c.b16 %v5335, %v5334
        %v5355 = vpack.c.b16 %v5337, %v5336
        %v5356 = vpack.c.b16 %v5339, %v5338
        %v5357 = vpack.c.b16 %v5341, %v5340
        %5374 = vmatpush.bf16.msra.mxu0 %v5349
        %5375 = vmatpush.bf16.msra.mxu0 %v5348
        %5376 = vmatpush.bf16.msra.mxu0 %v5347
        %5377 = vmatpush.bf16.msra.mxu0 %v5346
        %5378 = vmatpush.bf16.msra.mxu0 %v5345
        %5379 = vmatpush.bf16.msra.mxu0 %v5344
        %5380 = vmatpush.bf16.msra.mxu0 %v5343
        %5381 = vmatpush.bf16.msra.mxu0 %v5342
        %5382 = vmatmul.bf16.gmra.mxu0 %v5210
        %v5383 = vpop.f32.mrf.mxu0
        %v5384 = vadd.f32 %v5276, %v5383
        %v5385 = vpop.f32.mrf.mxu0
        %v5386 = vadd.f32 %v5276, %v5385
        %5387 = vmatmul.bf16.gmra.mxu0 %v5212
        %v5388 = vpop.f32.mrf.mxu0
        %v5389 = vadd.f32 %v5276, %v5388
        %v5390 = vpop.f32.mrf.mxu0
        %v5391 = vadd.f32 %v5276, %v5390
        %5392 = vmatmul.bf16.gmra.mxu0 %v5214
        %v5393 = vpop.f32.mrf.mxu0
        %v5394 = vadd.f32 %v5276, %v5393
        %v5395 = vpop.f32.mrf.mxu0
        %v5396 = vadd.f32 %v5276, %v5395
        %5397 = vmatmul.bf16.gmra.mxu0 %v5216
        %v5398 = vpop.f32.mrf.mxu0
        %v5399 = vadd.f32 %v5276, %v5398
        %v5400 = vpop.f32.mrf.mxu0
        %v5401 = vadd.f32 %v5276, %v5400
        %5402 = vmatmul.bf16.gmra.mxu0 %v5218
        %v5403 = vpop.f32.mrf.mxu0
        %v5404 = vadd.f32 %v5276, %v5403
        %v5405 = vpop.f32.mrf.mxu0
        %v5406 = vadd.f32 %v5276, %v5405
        %5407 = vmatmul.bf16.gmra.mxu0 %v5220
        %v5408 = vpop.f32.mrf.mxu0
        %v5409 = vadd.f32 %v5276, %v5408
        %v5410 = vpop.f32.mrf.mxu0
        %v5411 = vadd.f32 %v5276, %v5410
        %5412 = vmatmul.bf16.gmra.mxu0 %v5222
        %v5413 = vpop.f32.mrf.mxu0
        %v5414 = vadd.f32 %v5276, %v5413
        %v5415 = vpop.f32.mrf.mxu0
        %v5416 = vadd.f32 %v5276, %v5415
        %5417 = vmatmul.bf16.gmra.mxu0 %v5224
        %v5418 = vpop.f32.mrf.mxu0
        %v5419 = vadd.f32 %v5276, %v5418
        %v5420 = vpop.f32.mrf.mxu0
        %v5421 = vadd.f32 %v5276, %v5420
        %5422 = vmatmul.bf16.gmra.mxu0 %v5226
        %v5423 = vpop.f32.mrf.mxu0
        %v5424 = vadd.f32 %v5276, %v5423
        %v5425 = vpop.f32.mrf.mxu0
        %v5426 = vadd.f32 %v5276, %v5425
        %5427 = vmatmul.bf16.gmra.mxu0 %v5228
        %v5428 = vpop.f32.mrf.mxu0
        %v5429 = vadd.f32 %v5276, %v5428
        %v5430 = vpop.f32.mrf.mxu0
        %v5431 = vadd.f32 %v5276, %v5430
        %5432 = vmatmul.bf16.gmra.mxu0 %v5230
        %v5433 = vpop.f32.mrf.mxu0
        %v5434 = vadd.f32 %v5276, %v5433
        %v5435 = vpop.f32.mrf.mxu0
        %v5436 = vadd.f32 %v5276, %v5435
        %5437 = vmatmul.bf16.gmra.mxu0 %v5232
        %v5438 = vpop.f32.mrf.mxu0
        %v5439 = vadd.f32 %v5276, %v5438
        %v5440 = vpop.f32.mrf.mxu0
        %v5441 = vadd.f32 %v5276, %v5440
        %5442 = vmatmul.bf16.gmra.mxu0 %v5234
        %v5443 = vpop.f32.mrf.mxu0
        %v5444 = vadd.f32 %v5276, %v5443
        %v5445 = vpop.f32.mrf.mxu0
        %v5446 = vadd.f32 %v5276, %v5445
        %5447 = vmatmul.bf16.gmra.mxu0 %v5236
        %v5448 = vpop.f32.mrf.mxu0
        %v5449 = vadd.f32 %v5276, %v5448
        %v5450 = vpop.f32.mrf.mxu0
        %v5451 = vadd.f32 %v5276, %v5450
        %5452 = vmatmul.bf16.gmra.mxu0 %v5238
        %v5453 = vpop.f32.mrf.mxu0
        %v5454 = vadd.f32 %v5276, %v5453
        %v5455 = vpop.f32.mrf.mxu0
        %v5456 = vadd.f32 %v5276, %v5455
        %5457 = vmatmul.bf16.gmra.mxu0 %v5240
        %v5458 = vpop.f32.mrf.mxu0
        %v5459 = vadd.f32 %v5276, %v5458
        %v5460 = vpop.f32.mrf.mxu0
        %v5461 = vadd.f32 %v5276, %v5460
        %5462 = vdwg.mxu0
        %5463 = vmatpush.bf16.msra.mxu0 %v5357
        %5464 = vmatpush.bf16.msra.mxu0 %v5356
        %5465 = vmatpush.bf16.msra.mxu0 %v5355
        %5466 = vmatpush.bf16.msra.mxu0 %v5354
        %5467 = vmatpush.bf16.msra.mxu0 %v5353
        %5468 = vmatpush.bf16.msra.mxu0 %v5352
        %5469 = vmatpush.bf16.msra.mxu0 %v5351
        %5470 = vmatpush.bf16.msra.mxu0 %v5350
        %5471 = vmatmul.bf16.gmra.mxu0 %v5211
        %v5472 = vpop.f32.mrf.mxu0
        %v5473 = vadd.f32 %v5384, %v5472
        %v5474 = vpop.f32.mrf.mxu0
        %v5475 = vadd.f32 %v5386, %v5474
        %5476 = vmatmul.bf16.gmra.mxu0 %v5213
        %v5477 = vpop.f32.mrf.mxu0
        %v5478 = vadd.f32 %v5389, %v5477
        %v5479 = vpop.f32.mrf.mxu0
        %v5480 = vadd.f32 %v5391, %v5479
        %5481 = vmatmul.bf16.gmra.mxu0 %v5215
        %v5482 = vpop.f32.mrf.mxu0
        %v5483 = vadd.f32 %v5394, %v5482
        %v5484 = vpop.f32.mrf.mxu0
        %v5485 = vadd.f32 %v5396, %v5484
        %5486 = vmatmul.bf16.gmra.mxu0 %v5217
        %v5487 = vpop.f32.mrf.mxu0
        %v5488 = vadd.f32 %v5399, %v5487
        %v5489 = vpop.f32.mrf.mxu0
        %v5490 = vadd.f32 %v5401, %v5489
        %5491 = vmatmul.bf16.gmra.mxu0 %v5219
        %v5492 = vpop.f32.mrf.mxu0
        %v5493 = vadd.f32 %v5404, %v5492
        %v5494 = vpop.f32.mrf.mxu0
        %v5495 = vadd.f32 %v5406, %v5494
        %5496 = vmatmul.bf16.gmra.mxu0 %v5221
        %v5497 = vpop.f32.mrf.mxu0
        %v5498 = vadd.f32 %v5409, %v5497
        %v5499 = vpop.f32.mrf.mxu0
        %v5500 = vadd.f32 %v5411, %v5499
        %5501 = vmatmul.bf16.gmra.mxu0 %v5223
        %v5502 = vpop.f32.mrf.mxu0
        %v5503 = vadd.f32 %v5414, %v5502
        %v5504 = vpop.f32.mrf.mxu0
        %v5505 = vadd.f32 %v5416, %v5504
        %5506 = vmatmul.bf16.gmra.mxu0 %v5225
        %v5507 = vpop.f32.mrf.mxu0
        %v5508 = vadd.f32 %v5419, %v5507
        %v5509 = vpop.f32.mrf.mxu0
        %v5510 = vadd.f32 %v5421, %v5509
        %5511 = vmatmul.bf16.gmra.mxu0 %v5227
        %v5512 = vpop.f32.mrf.mxu0
        %v5513 = vadd.f32 %v5424, %v5512
        %v5514 = vpop.f32.mrf.mxu0
        %v5515 = vadd.f32 %v5426, %v5514
        %5516 = vmatmul.bf16.gmra.mxu0 %v5229
        %v5517 = vpop.f32.mrf.mxu0
        %v5518 = vadd.f32 %v5429, %v5517
        %v5519 = vpop.f32.mrf.mxu0
        %v5520 = vadd.f32 %v5431, %v5519
        %5521 = vmatmul.bf16.gmra.mxu0 %v5231
        %v5522 = vpop.f32.mrf.mxu0
        %v5523 = vadd.f32 %v5434, %v5522
        %v5524 = vpop.f32.mrf.mxu0
        %v5525 = vadd.f32 %v5436, %v5524
        %5526 = vmatmul.bf16.gmra.mxu0 %v5233
        %v5527 = vpop.f32.mrf.mxu0
        %v5528 = vadd.f32 %v5439, %v5527
        %v5529 = vpop.f32.mrf.mxu0
        %v5530 = vadd.f32 %v5441, %v5529
        %5531 = vmatmul.bf16.gmra.mxu0 %v5235
        %v5532 = vpop.f32.mrf.mxu0
        %v5533 = vadd.f32 %v5444, %v5532
        %v5534 = vpop.f32.mrf.mxu0
        %v5535 = vadd.f32 %v5446, %v5534
        %5536 = vmatmul.bf16.gmra.mxu0 %v5237
        %v5537 = vpop.f32.mrf.mxu0
        %v5538 = vadd.f32 %v5449, %v5537
        %v5539 = vpop.f32.mrf.mxu0
        %v5540 = vadd.f32 %v5451, %v5539
        %5541 = vmatmul.bf16.gmra.mxu0 %v5239
        %v5542 = vpop.f32.mrf.mxu0
        %v5543 = vadd.f32 %v5454, %v5542
        %v5544 = vpop.f32.mrf.mxu0
        %v5545 = vadd.f32 %v5456, %v5544
        %5546 = vmatmul.bf16.gmra.mxu0 %v5241
        %v5547 = vpop.f32.mrf.mxu0
        %v5548 = vadd.f32 %v5459, %v5547
        %v5549 = vpop.f32.mrf.mxu0
        %v5550 = vadd.f32 %v5461, %v5549
        %5551 = vdwg.mxu0
        %v5552 = vld [vmem:[%s11] sm:$0x1]
        %v5554 = vperm.slane %v5552, 0
        %v5556 = vmul.f32 %v5473, %v5554
        %v5557 = vmul.f32 %v5475, %v5554
        %v5558 = vmul.f32 %v5478, %v5554
        %v5559 = vmul.f32 %v5480, %v5554
        %v5560 = vmul.f32 %v5483, %v5554
        %v5561 = vmul.f32 %v5485, %v5554
        %v5562 = vmul.f32 %v5488, %v5554
        %v5563 = vmul.f32 %v5490, %v5554
        %v5564 = vmul.f32 %v5493, %v5554
        %v5565 = vmul.f32 %v5495, %v5554
        %v5566 = vmul.f32 %v5498, %v5554
        %v5567 = vmul.f32 %v5500, %v5554
        %v5568 = vmul.f32 %v5503, %v5554
        %v5569 = vmul.f32 %v5505, %v5554
        %v5570 = vmul.f32 %v5508, %v5554
        %v5571 = vmul.f32 %v5510, %v5554
        %v5572 = vmul.f32 %v5513, %v5554
        %v5573 = vmul.f32 %v5515, %v5554
        %v5574 = vmul.f32 %v5518, %v5554
        %v5575 = vmul.f32 %v5520, %v5554
        %v5576 = vmul.f32 %v5523, %v5554
        %v5577 = vmul.f32 %v5525, %v5554
        %v5578 = vmul.f32 %v5528, %v5554
        %v5579 = vmul.f32 %v5530, %v5554
        %v5580 = vmul.f32 %v5533, %v5554
        %v5581 = vmul.f32 %v5535, %v5554
        %v5582 = vmul.f32 %v5538, %v5554
        %v5583 = vmul.f32 %v5540, %v5554
        %v5584 = vmul.f32 %v5543, %v5554
        %v5585 = vmul.f32 %v5545, %v5554
        %v5586 = vmul.f32 %v5548, %v5554
        %v5587 = vmul.f32 %v5550, %v5554
        %v5588 = vld [vmem:[%s520] sm:$0xff]
        %v5589 = vld [vmem:[%s520 + $0x8] sm:$0xff]
        %v5590 = vld [vmem:[%s520 + $0x10] sm:$0xff]
        %v5591 = vld [vmem:[%s520 + $0x18] sm:$0xff]
        %v5592 = vld [vmem:[%s520 + $0x20] sm:$0xff]
        %v5593 = vld [vmem:[%s520 + $0x28] sm:$0xff]
        %v5594 = vld [vmem:[%s520 + $0x30] sm:$0xff]
        %v5595 = vld [vmem:[%s520 + $0x38] sm:$0xff]
        %v5596 = vld [vmem:[%s520 + $0x40] sm:$0xff]
        %v5597 = vld [vmem:[%s520 + $0x48] sm:$0xff]
        %v5598 = vld [vmem:[%s520 + $0x50] sm:$0xff]
        %v5599 = vld [vmem:[%s520 + $0x58] sm:$0xff]
        %v5600 = vld [vmem:[%s520 + $0x60] sm:$0xff]
        %v5601 = vld [vmem:[%s520 + $0x68] sm:$0xff]
        %v5602 = vld [vmem:[%s520 + $0x70] sm:$0xff]
        %v5603 = vld [vmem:[%s520 + $0x78] sm:$0xff]
        %v5604 = vld [vmem:[%s520 + $0x80] sm:$0xff]
        %v5605 = vld [vmem:[%s520 + $0x88] sm:$0xff]
        %v5606 = vld [vmem:[%s520 + $0x90] sm:$0xff]
        %v5607 = vld [vmem:[%s520 + $0x98] sm:$0xff]
        %v5608 = vld [vmem:[%s520 + $0xa0] sm:$0xff]
        %v5609 = vld [vmem:[%s520 + $0xa8] sm:$0xff]
        %v5610 = vld [vmem:[%s520 + $0xb0] sm:$0xff]
        %v5611 = vld [vmem:[%s520 + $0xb8] sm:$0xff]
        %v5612 = vld [vmem:[%s520 + $0xc0] sm:$0xff]
        %v5613 = vld [vmem:[%s520 + $0xc8] sm:$0xff]
        %v5614 = vld [vmem:[%s520 + $0xd0] sm:$0xff]
        %v5615 = vld [vmem:[%s520 + $0xd8] sm:$0xff]
        %v5616 = vld [vmem:[%s520 + $0xe0] sm:$0xff]
        %v5617 = vld [vmem:[%s520 + $0xe8] sm:$0xff]
        %v5618 = vld [vmem:[%s520 + $0xf0] sm:$0xff]
        %v5619 = vld [vmem:[%s520 + $0xf8] sm:$0xff]
        %v5620 = vadd.f32 %v5556, %v5588
        %v5621 = vadd.f32 %v5557, %v5589
        %v5622 = vadd.f32 %v5558, %v5590
        %v5623 = vadd.f32 %v5559, %v5591
        %v5624 = vadd.f32 %v5560, %v5592
        %v5625 = vadd.f32 %v5561, %v5593
        %v5626 = vadd.f32 %v5562, %v5594
        %v5627 = vadd.f32 %v5563, %v5595
        %v5628 = vadd.f32 %v5564, %v5596
        %v5629 = vadd.f32 %v5565, %v5597
        %v5630 = vadd.f32 %v5566, %v5598
        %v5631 = vadd.f32 %v5567, %v5599
        %v5632 = vadd.f32 %v5568, %v5600
        %v5633 = vadd.f32 %v5569, %v5601
        %v5634 = vadd.f32 %v5570, %v5602
        %v5635 = vadd.f32 %v5571, %v5603
        %v5636 = vadd.f32 %v5572, %v5604
        %v5637 = vadd.f32 %v5573, %v5605
        %v5638 = vadd.f32 %v5574, %v5606
        %v5639 = vadd.f32 %v5575, %v5607
        %v5640 = vadd.f32 %v5576, %v5608
        %v5641 = vadd.f32 %v5577, %v5609
        %v5642 = vadd.f32 %v5578, %v5610
        %v5643 = vadd.f32 %v5579, %v5611
        %v5644 = vadd.f32 %v5580, %v5612
        %v5645 = vadd.f32 %v5581, %v5613
        %v5646 = vadd.f32 %v5582, %v5614
        %v5647 = vadd.f32 %v5583, %v5615
        %v5648 = vadd.f32 %v5584, %v5616
        %v5649 = vadd.f32 %v5585, %v5617
        %v5650 = vadd.f32 %v5586, %v5618
        %v5651 = vadd.f32 %v5587, %v5619
        %5652 = vst [vmem:[%s606] sm:$0xff] %v5620
        %5653 = vst [vmem:[%s606 + $0x8] sm:$0xff] %v5621
        %5654 = vst [vmem:[%s606 + $0x10] sm:$0xff] %v5622
        %5655 = vst [vmem:[%s606 + $0x18] sm:$0xff] %v5623
        %5656 = vst [vmem:[%s606 + $0x20] sm:$0xff] %v5624
        %5657 = vst [vmem:[%s606 + $0x28] sm:$0xff] %v5625
        %5658 = vst [vmem:[%s606 + $0x30] sm:$0xff] %v5626
        %5659 = vst [vmem:[%s606 + $0x38] sm:$0xff] %v5627
        %5660 = vst [vmem:[%s606 + $0x40] sm:$0xff] %v5628
        %5661 = vst [vmem:[%s606 + $0x48] sm:$0xff] %v5629
        %5662 = vst [vmem:[%s606 + $0x50] sm:$0xff] %v5630
        %5663 = vst [vmem:[%s606 + $0x58] sm:$0xff] %v5631
        %5664 = vst [vmem:[%s606 + $0x60] sm:$0xff] %v5632
        %5665 = vst [vmem:[%s606 + $0x68] sm:$0xff] %v5633
        %5666 = vst [vmem:[%s606 + $0x70] sm:$0xff] %v5634
        %5667 = vst [vmem:[%s606 + $0x78] sm:$0xff] %v5635
        %5668 = vst [vmem:[%s606 + $0x80] sm:$0xff] %v5636
        %5669 = vst [vmem:[%s606 + $0x88] sm:$0xff] %v5637
        %5670 = vst [vmem:[%s606 + $0x90] sm:$0xff] %v5638
        %5671 = vst [vmem:[%s606 + $0x98] sm:$0xff] %v5639
        %5672 = vst [vmem:[%s606 + $0xa0] sm:$0xff] %v5640
        %5673 = vst [vmem:[%s606 + $0xa8] sm:$0xff] %v5641
        %5674 = vst [vmem:[%s606 + $0xb0] sm:$0xff] %v5642
        %5675 = vst [vmem:[%s606 + $0xb8] sm:$0xff] %v5643
        %5676 = vst [vmem:[%s606 + $0xc0] sm:$0xff] %v5644
        %5677 = vst [vmem:[%s606 + $0xc8] sm:$0xff] %v5645
        %5678 = vst [vmem:[%s606 + $0xd0] sm:$0xff] %v5646
        %5679 = vst [vmem:[%s606 + $0xd8] sm:$0xff] %v5647
        %5680 = vst [vmem:[%s606 + $0xe0] sm:$0xff] %v5648
        %5681 = vst [vmem:[%s606 + $0xe8] sm:$0xff] %v5649
        %5682 = vst [vmem:[%s606 + $0xf0] sm:$0xff] %v5650
        %5683 = vst [vmem:[%s606 + $0xf8] sm:$0xff] %v5651
        %s5684 = sand.u32 %s345, 1
        %s5685 = scalar_lea.sflag [#allocation5], %s5684
        %s5686 = sand.u32 %s345, 1
        %s5687 = smul.addr %s5686, 256
        %s5688 = scalar_lea.vmem [#allocation14], %s5687
        // Predicated region
        $region101: #{tpu_custom_call.1} parent=67 // pred_check
          %p5689 = pneg %p355
        $region102: #{tpu_custom_call.1} parent=67 // pred_check_branch
          %5691 = sbr.rel (%p5689) target = $region104
        $region103: #{tpu_custom_call.1} parent=67 // pred_region
          %s5692 = smul.u32 32, %s39
          %5694 = vsyncadd %s5685, 0
          %s5695 = smul.addr %s38, 64
          %s5696 = sadd.s32 %s5692, %s5695
          %s5697 = smul.addr %s5696, 8
          %s5698 = scalar_lea.hbm %s12, %s5697
          %s5699 = sshll.u32 %s5688, 4
          %s5700 = int_to_ptr.vmem [resolvable:$true] %s5699
          %s5701 = sshll.u32 %s5698, 4
          %s5702 = int_to_ptr.hbm [resolvable:$true] %s5701
          %5707 = dma.vmem_to_hbm [thread:$0]  %s5700, 4096, %s5702, %s5685, 128, 128, 8
        $region104: #{tpu_custom_call.1} parent=67 // pred_fallthru
          _
      $region68: #{tpu_custom_call.1} parent=5 // pred_fallthru
        _
      %p5708 = scmp.le.s32.totalorder 2, %s29
      // Predicated region
      $region105: #{tpu_custom_call.1} parent=5 // pred_check
        %p5709 = pneg %p5708
      $region106: #{tpu_custom_call.1} parent=5 // pred_check_branch
        %5711 = sbr.rel (%p5709) target = $region108
      $region107: #{tpu_custom_call.1} parent=5 // pred_region
        %s5712 = ssub.s32 %s29, 2
        // Predicated region
        $region109: #{tpu_custom_call.1} parent=107 // pred_check
          %p5713 = pneg %p361
        $region110: #{tpu_custom_call.1} parent=107 // pred_check_branch
          %5715 = sbr.rel (%p5713) target = $region112
        $region111: #{tpu_custom_call.1} parent=107 // pred_region
          %s5716 = sand.u32 %s346, 1
          %s5717 = scalar_lea.sflag [#allocation5], %s5716
          %s5718 = sand.u32 %s346, 1
          %s5719 = smul.addr %s5718, 256
          %s5720 = scalar_lea.vmem [#allocation14], %s5719
          %5722 = dma.done %s5717, 4096
        $region112: #{tpu_custom_call.1} parent=107 // pred_fallthru
          _
      $region108: #{tpu_custom_call.1} parent=5 // pred_fallthru
        _
    $region6: #{tpu_custom_call.1} parent=1 // loop_footer
      %s33 = sadd.s32 1, %s29
    $region7: #{tpu_custom_call.1} parent=1 // loop_footer_branch
      %28 = sbr.rel target = $region3
    $region8: #{tpu_custom_call.1} parent=1 // loop_exit
      _
    %5723 = vsyncpa [#allocation4], 1
    %s5724 = scalar_lea.sflag [#allocation4], 1
    %5725 = vsyncpa %s5724, 1
    %5726 = vsyncpa [#allocation7], 1
    %s5727 = scalar_lea.sflag [#allocation7], 1
    %5728 = vsyncpa %s5727, 1
    %5729 = vsyncpa [#allocation10], 1
    %5730 = vsyncpa [#allocation13], 1
    %5731 = vsyncpa [#allocation5], 1
    %s5732 = scalar_lea.sflag [#allocation5], 1
    %5733 = vsyncpa %s5732, 1

</llo_original>
